<compile_context>
chip_gen: v7x
topology: tpu7x:2x2x1
jax: 0.10.0
libtpu: 0.0.40
codegen_flags: <defaults>
</compile_context>

<pallas_src>
import jax
import jax.numpy as jnp
from jax import lax
from jax.experimental import pallas as pl
from jax.experimental.pallas import tpu as pltpu

N_INPUT = 122880 * 4     # 491520, as in the PyTorch module
N_OUT = 2
LANES = 128              # vreg lane width
NCORES = 2               # leading "parallel" grid axis (megacore split on v7x)
CHUNK = 64               # sublane rows per inner reduction chunk (multiple of 8)
TK = 122880              # K elements per grid step (-> tc = 960 sublane rows)


def _linear_kernel(x_ref, w_ref, o_ref, acc_ref):
    """One (core, k) step of the K reduction.

    x_ref:   (B, TC, 128)      f32 input tile (lane/sublane dense)
    w_ref:   (N_OUT, TC, 128)  f32 weight tile (native (N_OUT, K) layout)
    o_ref:   (N_OUT, B)        per-core partial output (resident across k)
    acc_ref: (N_OUT, B, 128)   lane-resident f32 accumulator scratch
    """
    k = pl.program_id(1)

    @pl.when(k == 0)
    def _():
        acc_ref[...] = jnp.zeros_like(acc_ref)

    tc = x_ref.shape[1]            # static
    n_chunks = tc // CHUNK         # static

    def body(c, carry):
        off = pl.multiple_of(c * CHUNK, CHUNK)
        xc = x_ref[:, pl.ds(off, CHUNK), :]        # (B, CHUNK, 128)
        wc = w_ref[:, pl.ds(off, CHUNK), :]        # (N_OUT, CHUNK, 128)
        for n in range(N_OUT):                     # static unroll, N_OUT == 2
            # VPU multiply + sublane-sum into the lane-resident accumulator.
            acc_ref[n] += (xc * wc[n][None, :, :]).sum(axis=1)   # (B, 128)
        return carry

    lax.fori_loop(0, n_chunks, body, 0)

    @pl.when(k == pl.num_programs(1) - 1)
    def _():
        # Single cross-lane reduction, only in the epilogue.
        o_ref[...] = acc_ref[...].sum(axis=-1).astype(o_ref.dtype)   # (N_OUT, B)


@jax.jit
def backend_forward(x, weight, bias):
    """Equivalent of PyTorch nn.Linear(491520, 2): x @ weight.T + bias.

    x:      (B, K)      f32
    weight: (N_OUT, K)  f32  (native PyTorch layout; NOT transposed)
    bias:   (N_OUT,)    f32
    """
    B, K = x.shape
    n_out = weight.shape[0]
    assert K % LANES == 0
    rows = K // LANES
    tc = TK // LANES
    assert TK % LANES == 0 and tc % CHUNK == 0
    # Fixed-size module (K = 491520); a remainder tile would be needed for other K.
    assert rows % (NCORES * tc) == 0, "K must divide evenly into core/k tiles"
    ksteps = rows // (NCORES * tc)

    # Free, layout-preserving row-major reshapes (no transpose, no copies).
    x3 = x.reshape(B, rows, LANES)
    w3 = weight.reshape(n_out, rows, LANES)

    partials = pl.pallas_call(
        _linear_kernel,
        out_shape=jax.ShapeDtypeStruct((NCORES, n_out, B), jnp.float32),
        grid_spec=pltpu.PrefetchScalarGridSpec(
            num_scalar_prefetch=0,
            grid=(NCORES, ksteps),
            in_specs=[
                pl.BlockSpec((B, tc, LANES),
                             lambda p, k: (0, p * ksteps + k, 0)),
                pl.BlockSpec((n_out, tc, LANES),
                             lambda p, k: (0, p * ksteps + k, 0)),
            ],
            out_specs=pl.BlockSpec((None, n_out, B), lambda p, k: (p, 0, 0)),
            scratch_shapes=[pltpu.VMEM((n_out, B, LANES), jnp.float32)],
        ),
        compiler_params=pltpu.CompilerParams(
            dimension_semantics=("parallel", "arbitrary"),
        ),
    )(x3, w3)

    # Tiny epilogue (2*2*2 floats): combine per-core partials, add bias.
    return partials.sum(axis=0).T + bias[None, :]


if __name__ == "__main__":
    key = jax.random.PRNGKey(0)
    kx, kw, kb = jax.random.split(key, 3)

    B = 2
    # Deterministic "parameter init" mimicking nn.Linear's uniform(-1/sqrt(in), 1/sqrt(in))
    bound = 1.0 / (N_INPUT ** 0.5)
    weight = jax.random.uniform(
        kw, (N_OUT, N_INPUT), dtype=jnp.float32, minval=-bound, maxval=bound
    )
    bias = jax.random.uniform(
        kb, (N_OUT,), dtype=jnp.float32, minval=-bound, maxval=bound
    )
    x = jax.random.normal(kx, (B, N_INPUT), dtype=jnp.float32)

    out = backend_forward(x, weight, bias)
    out = jax.block_until_ready(out)

    # Reference check (full f32 precision, same math as PyTorch F.linear)
    ref = jnp.matmul(x, weight.T, precision=jax.lax.Precision.HIGHEST) + bias
    assert out.shape == (B, N_OUT)
    assert jnp.allclose(out, ref, atol=1e-3, rtol=1e-3), "mismatch vs reference"

    print("KERNEL_OK")
</pallas_src>

<mosaic_0001>
module attributes {stable_mosaic.version = 11 : i64} {
  func.func @_linear_kernel(%arg0: i32, %arg1: i32, %arg2: memref<2x960x128xf32, #tpu.memory_space<vmem>>, %arg3: memref<2x960x128xf32, #tpu.memory_space<vmem>>, %arg4: memref<1x2x2xf32, #tpu.memory_space<vmem>>, %arg5: memref<2x2x128xf32, #tpu.memory_space<vmem>>) attributes {dimension_semantics = [#tpu.dimension_semantics<parallel>, #tpu.dimension_semantics<arbitrary>], iteration_bounds = array<i64: 2, 2>, scalar_prefetch = 0 : i64, scratch_operands = 1 : i64, tpu.core_type = #tpu.core_type<tc>, window_params = [{transform_indices = @transform_0, window_bounds = array<i64: 2, 960, 128>}, {transform_indices = @transform_1, window_bounds = array<i64: 2, 960, 128>}, {transform_indices = @transform_2, window_bounds = array<i64: 1, 2, 2>}]} {
    %c0_i32 = arith.constant 0 : i32
    %0 = arith.cmpi eq, %arg1, %c0_i32 : i32
    %1 = arith.extui %0 : i1 to i32
    %c0_i32_0 = arith.constant 0 : i32
    %2 = arith.cmpi ne, %1, %c0_i32_0 : i32
    scf.if %2 {
      %cst = arith.constant 0.000000e+00 : f32
      %7 = vector.broadcast %cst : f32 to vector<2x2x128xf32>
      %c0 = arith.constant 0 : index
      %c0_5 = arith.constant 0 : index
      %c0_6 = arith.constant 0 : index
      %8 = vector.load %arg5[%c0, %c0_5, %c0_6] : memref<2x2x128xf32, #tpu.memory_space<vmem>>, vector<2x2x128xf32>
      tpu.vector_store %arg5[%c0, %c0_5, %c0_6], %7 {strides = array<i32>} : memref<2x2x128xf32, #tpu.memory_space<vmem>>, vector<2x2x128xf32>,
    } else {
    }
    %c0_i32_1 = arith.constant 0 : i32
    %c15_i32 = arith.constant 15 : i32
    %3 = arith.addi %c0_i32_1, %c15_i32 : i32
    %c1_i32 = arith.constant 1 : i32
    scf.for %arg6 = %c0_i32_1 to %3 step %c1_i32  : i32 {
      %c64_i32 = arith.constant 64 : i32
      %7 = arith.muli %arg6, %c64_i32 : i32
      %8 = tpu.assume_multiple %7, 64 : i32
      %c0 = arith.constant 0 : index
      %9 = arith.index_cast %8 : i32 to index
      %c0_5 = arith.constant 0 : index
      %10 = vector.load %arg2[%c0, %9, %c0_5] : memref<2x960x128xf32, #tpu.memory_space<vmem>>, vector<2x64x128xf32>
      %c0_6 = arith.constant 0 : index
      %11 = arith.index_cast %8 : i32 to index
      %c0_7 = arith.constant 0 : index
      %12 = vector.load %arg3[%c0_6, %11, %c0_7] : memref<2x960x128xf32, #tpu.memory_space<vmem>>, vector<2x64x128xf32>
      %c0_8 = arith.constant 0 : index
      %c0_9 = arith.constant 0 : index
      %c0_10 = arith.constant 0 : index
      %13 = vector.load %arg5[%c0_8, %c0_9, %c0_10] : memref<2x2x128xf32, #tpu.memory_space<vmem>>, vector<1x2x128xf32>
      %14 = vector.shape_cast %13 : vector<1x2x128xf32> to vector<2x128xf32>
      %15 = vector.extract_strided_slice %12 {offsets = [0, 0, 0], sizes = [1, 64, 128], strides = [1, 1, 1]} : vector<2x64x128xf32> to vector<1x64x128xf32>
      %16 = vector.shape_cast %15 : vector<1x64x128xf32> to vector<64x128xf32>
      %17 = vector.shape_cast %16 : vector<64x128xf32> to vector<1x64x128xf32>
      %18 = vector.broadcast %17 : vector<1x64x128xf32> to vector<2x64x128xf32>
      %19 = arith.mulf %10, %18 : vector<2x64x128xf32>
      %cst = arith.constant dense<0.000000e+00> : vector<2x128xf32>
      %20 = vector.multi_reduction <add>, %19, %cst [1] : vector<2x64x128xf32> to vector<2x128xf32>
      %21 = arith.addf %14, %20 : vector<2x128xf32>
      %c0_11 = arith.constant 0 : index
      %c0_12 = arith.constant 0 : index
      %c0_13 = arith.constant 0 : index
      %22 = vector.load %arg5[%c0_11, %c0_12, %c0_13] : memref<2x2x128xf32, #tpu.memory_space<vmem>>, vector<1x2x128xf32>
      %23 = vector.shape_cast %22 : vector<1x2x128xf32> to vector<2x128xf32>
      %24 = vector.shape_cast %21 : vector<2x128xf32> to vector<1x2x128xf32>
      tpu.vector_store %arg5[%c0_11, %c0_12, %c0_13], %24 {strides = array<i32>} : memref<2x2x128xf32, #tpu.memory_space<vmem>>, vector<1x2x128xf32>,
      %c1 = arith.constant 1 : index
      %c0_14 = arith.constant 0 : index
      %c0_15 = arith.constant 0 : index
      %25 = vector.load %arg5[%c1, %c0_14, %c0_15] : memref<2x2x128xf32, #tpu.memory_space<vmem>>, vector<1x2x128xf32>
      %26 = vector.shape_cast %25 : vector<1x2x128xf32> to vector<2x128xf32>
      %27 = vector.extract_strided_slice %12 {offsets = [1, 0, 0], sizes = [1, 64, 128], strides = [1, 1, 1]} : vector<2x64x128xf32> to vector<1x64x128xf32>
      %28 = vector.shape_cast %27 : vector<1x64x128xf32> to vector<64x128xf32>
      %29 = vector.shape_cast %28 : vector<64x128xf32> to vector<1x64x128xf32>
      %30 = vector.broadcast %29 : vector<1x64x128xf32> to vector<2x64x128xf32>
      %31 = arith.mulf %10, %30 : vector<2x64x128xf32>
      %cst_16 = arith.constant dense<0.000000e+00> : vector<2x128xf32>
      %32 = vector.multi_reduction <add>, %31, %cst_16 [1] : vector<2x64x128xf32> to vector<2x128xf32>
      %33 = arith.addf %26, %32 : vector<2x128xf32>
      %c1_17 = arith.constant 1 : index
      %c0_18 = arith.constant 0 : index
      %c0_19 = arith.constant 0 : index
      %34 = vector.load %arg5[%c1_17, %c0_18, %c0_19] : memref<2x2x128xf32, #tpu.memory_space<vmem>>, vector<1x2x128xf32>
      %35 = vector.shape_cast %34 : vector<1x2x128xf32> to vector<2x128xf32>
      %36 = vector.shape_cast %33 : vector<2x128xf32> to vector<1x2x128xf32>
      tpu.vector_store %arg5[%c1_17, %c0_18, %c0_19], %36 {strides = array<i32>} : memref<2x2x128xf32, #tpu.memory_space<vmem>>, vector<1x2x128xf32>,
    }
    %c15_i32_2 = arith.constant 15 : i32
    %c1_i32_3 = arith.constant 1 : i32
    %4 = arith.cmpi eq, %arg1, %c1_i32_3 : i32
    %5 = arith.extui %4 : i1 to i32
    %c0_i32_4 = arith.constant 0 : i32
    %6 = arith.cmpi ne, %5, %c0_i32_4 : i32
    scf.if %6 {
      %c0 = arith.constant 0 : index
      %c0_5 = arith.constant 0 : index
      %c0_6 = arith.constant 0 : index
      %7 = vector.load %arg5[%c0, %c0_5, %c0_6] : memref<2x2x128xf32, #tpu.memory_space<vmem>>, vector<2x2x128xf32>
      %cst = arith.constant dense<0.000000e+00> : vector<2x2xf32>
      %8 = vector.multi_reduction <add>, %7, %cst [2] : vector<2x2x128xf32> to vector<2x2xf32>
      %c0_7 = arith.constant 0 : index
      %c0_8 = arith.constant 0 : index
      %c0_9 = arith.constant 0 : index
      %9 = vector.load %arg4[%c0_7, %c0_8, %c0_9] : memref<1x2x2xf32, #tpu.memory_space<vmem>>, vector<1x2x2xf32>
      %10 = vector.shape_cast %9 : vector<1x2x2xf32> to vector<2x2xf32>
      %11 = vector.shape_cast %8 : vector<2x2xf32> to vector<1x2x2xf32>
      tpu.vector_store %arg4[%c0_7, %c0_8, %c0_9], %11 {strides = array<i32>} : memref<1x2x2xf32, #tpu.memory_space<vmem>>, vector<1x2x2xf32>,
    } else {
    }
    return
  }
  func.func @transform_0(%arg0: i32, %arg1: i32) -> (i32, i32, i32) {
    %c2_i32 = arith.constant 2 : i32
    %0 = arith.muli %arg0, %c2_i32 : i32
    %1 = arith.addi %0, %arg1 : i32
    %c0_i32 = arith.constant 0 : i32
    %c0_i32_0 = arith.constant 0 : i32
    %c0_i32_1 = arith.constant 0 : i32
    return %c0_i32, %1, %c0_i32_0 : i32, i32, i32
  }
  func.func @transform_1(%arg0: i32, %arg1: i32) -> (i32, i32, i32) {
    %c2_i32 = arith.constant 2 : i32
    %0 = arith.muli %arg0, %c2_i32 : i32
    %1 = arith.addi %0, %arg1 : i32
    %c0_i32 = arith.constant 0 : i32
    %c0_i32_0 = arith.constant 0 : i32
    %c0_i32_1 = arith.constant 0 : i32
    return %c0_i32, %1, %c0_i32_0 : i32, i32, i32
  }
  func.func @transform_2(%arg0: i32, %arg1: i32) -> (i32, i32, i32) {
    %c0_i32 = arith.constant 0 : i32
    %c0_i32_0 = arith.constant 0 : i32
    %c0_i32_1 = arith.constant 0 : i32
    return %arg0, %c0_i32, %c0_i32_0 : i32, i32, i32
  }
}

</mosaic_0001>

<llo_original>
// kernel: backend_forward.1
$region0: #{backend_forward.1}
  #allocation0 [shape = 'u32[]', space=smem, size = 0x4, offset = 0x4, fixed_abs, tag = 'smem constant byte address 0x4 - core index']
  #allocation1 [shape = 'u32[144,128]{1,0:T(1,128)}', space=vmem, size = 0x12000, scoped, tag = 'internal scratch']
  #allocation2 [shape = 'f32[2,2,128]{2,1,0:T(2,128)}', space=vmem, size = 0x800, scoped, tag = 'scratch operand']
  %s0 = inlined_call_operand.vmem [shape: f32[2,3840,128], index: 0, kind: input, shape index: {}]
  %s1 = inlined_call_operand.vmem [shape: f32[2,3840,128], index: 1, kind: input, shape index: {}]
  %s2 = inlined_call_operand.vmem [shape: f32[2,2,2], index: 2, kind: output, shape index: {}]
  %s3 = sld [smem:[#allocation0]]
  $region132: #{backend_forward.1} parent=0
    _
  %s5 = ssub.s32 1, %s3
  %s6 = scalar_select 0, %s5, %s3
  $region1: #{backend_forward.1} parent=0
    #allocation3 [shape = 'u8[1966080]{0}', space=vmem, size = 0x1e0000, scoped, tag = 'input window, operand 0']
    #allocation4 [shape = 'u8[1966080]{0}', space=vmem, size = 0x1e0000, scoped, tag = 'input window, operand 1']
    loop: start=0, step=1, limit=6
    $region2: #{backend_forward.1} parent=1 // loop_pre_header
      _
    $region3: #{backend_forward.1} parent=1 // loop_header
      %s8 = sphi 0, %s12
      %p9 = scmp.ge.s32.totalorder %s8, 6
      %s15 = sphi 0, %s27
      %s16 = sphi 0, %s23
      %s17 = sphi 0, %s15
      %s18 = sphi 0, %s16
      %s19 = sphi 0, %s17
      %s20 = sphi 0, %s18
      %s34 = sphi 0, %s36
      %s37 = sphi 0, %s34
      %s38 = sphi 0, %s37
      %s54 = sphi 0, %s38
      %s64 = sphi 0, %s66
      %s67 = sphi 0, %s64
      %s68 = sphi 0, %s67
      %s84 = sphi 0, %s68
      %s90 = sphi 0, %s92
      %s93 = sphi 0, %s90
      %s94 = sphi 0, %s93
      %s110 = sphi 0, %s94
    $region4: #{backend_forward.1} parent=1 // loop_header_branch
      %11 = sbr.rel (%p9) target = $region8
    $region5: #{backend_forward.1} parent=1 // loop_body
      %s13 = ssub.s32 %s8, 1
      %s14 = ssub.s32 %s8, 2
      %s21 = sadd.s32 1, %s16
      %p22 = scmp.ge.s32.totalorder %s21, 2
      %s23 = scalar_select %p22, 0, %s21
      %s24 = sadd.s32 1, %s15
      %s25 = scalar_select %p22, %s24, %s15
      %p26 = scmp.ge.s32.totalorder %s25, 2
      %s27 = scalar_select %p26, 0, %s25
      %s28 = smul.u32 %s15, 2
      %s29 = sadd.s32 %s28, %s16
      %s30 = smul.u32 %s27, 2
      %s31 = sadd.s32 %s30, %s23
      %s32 = ssub.s32 %s29, %s31
      %p33 = scmp.eq.s32.totalorder %s32, 0
      %s35 = sadd.s32 %s34, 1
      %s36 = scalar_select %p33, %s34, %s35
      %p39 = pneg %p33
      %p40 = scmp.eq.s32.totalorder %s8, 3
      %p41 = por %p39, %p40
      %p42 = scmp.ne.s32.totalorder %s34, %s37
      %p43 = scmp.eq.s32.totalorder %s8, 0
      %p44 = por %p42, %p43
      %p45 = scmp.ne.s32.totalorder %s34, %s37
      %p46 = scmp.eq.s32.totalorder %s13, 3
      %p47 = por %p45, %p46
      %p48 = scmp.ne.s32.totalorder %s37, %s38
      %p49 = scmp.eq.s32.totalorder %s13, 0
      %p50 = por %p48, %p49
      %p51 = scmp.ne.s32.totalorder %s37, %s38
      %p52 = scmp.eq.s32.totalorder %s14, 3
      %p53 = por %p51, %p52
      %p55 = scmp.ne.s32.totalorder %s38, %s54
      %p56 = scmp.eq.s32.totalorder %s14, 0
      %p57 = por %p55, %p56
      %s58 = smul.u32 %s15, 2
      %s59 = sadd.s32 %s58, %s16
      %s60 = smul.u32 %s27, 2
      %s61 = sadd.s32 %s60, %s23
      %s62 = ssub.s32 %s59, %s61
      %p63 = scmp.eq.s32.totalorder %s62, 0
      %s65 = sadd.s32 %s64, 1
      %s66 = scalar_select %p63, %s64, %s65
      %p69 = pneg %p63
      %p70 = scmp.eq.s32.totalorder %s8, 3
      %p71 = por %p69, %p70
      %p72 = scmp.ne.s32.totalorder %s64, %s67
      %p73 = scmp.eq.s32.totalorder %s8, 0
      %p74 = por %p72, %p73
      %p75 = scmp.ne.s32.totalorder %s64, %s67
      %p76 = scmp.eq.s32.totalorder %s13, 3
      %p77 = por %p75, %p76
      %p78 = scmp.ne.s32.totalorder %s67, %s68
      %p79 = scmp.eq.s32.totalorder %s13, 0
      %p80 = por %p78, %p79
      %p81 = scmp.ne.s32.totalorder %s67, %s68
      %p82 = scmp.eq.s32.totalorder %s14, 3
      %p83 = por %p81, %p82
      %p85 = scmp.ne.s32.totalorder %s68, %s84
      %p86 = scmp.eq.s32.totalorder %s14, 0
      %p87 = por %p85, %p86
      %s88 = ssub.s32 %s15, %s27
      %p89 = scmp.eq.s32.totalorder %s88, 0
      %s91 = sadd.s32 %s90, 1
      %s92 = scalar_select %p89, %s90, %s91
      %p95 = pneg %p89
      %p96 = scmp.eq.s32.totalorder %s8, 3
      %p97 = por %p95, %p96
      %p98 = scmp.ne.s32.totalorder %s90, %s93
      %p99 = scmp.eq.s32.totalorder %s8, 0
      %p100 = por %p98, %p99
      %p101 = scmp.ne.s32.totalorder %s90, %s93
      %p102 = scmp.eq.s32.totalorder %s13, 3
      %p103 = por %p101, %p102
      %p104 = scmp.ne.s32.totalorder %s93, %s94
      %p105 = scmp.eq.s32.totalorder %s13, 0
      %p106 = por %p104, %p105
      %p107 = scmp.ne.s32.totalorder %s93, %s94
      %p108 = scmp.eq.s32.totalorder %s14, 3
      %p109 = por %p107, %p108
      %p111 = scmp.ne.s32.totalorder %s94, %s110
      %p112 = scmp.eq.s32.totalorder %s14, 0
      %p113 = por %p111, %p112
      %p114 = scmp.le.s32.totalorder 1, %s8
      %p115 = scmp.lt.s32.totalorder %s8, 5
      %p116 = pnand %p114, %p115
      %p117 = pneg %p116
      // Predicated region
      $region9: #{backend_forward.1} parent=5 // pred_check
        _
      $region10: #{backend_forward.1} parent=5 // pred_check_branch
        %119 = sbr.rel (%p116) target = $region12
      $region11: #{backend_forward.1} parent=5 // pred_region
        %s120 = ssub.s32 %s8, 1
      $region12: #{backend_forward.1} parent=5 // pred_fallthru
        _
      %p121 = scmp.lt.s32.totalorder %s8, 4
      // Predicated region
      $region13: #{backend_forward.1} parent=5 // pred_check
        %p122 = pneg %p121
      $region14: #{backend_forward.1} parent=5 // pred_check_branch
        %124 = sbr.rel (%p122) target = $region16
      $region15: #{backend_forward.1} parent=5 // pred_region
        // Predicated region
        $region17: #{backend_forward.1} parent=15 // pred_check
          %p125 = pneg %p44
        $region18: #{backend_forward.1} parent=15 // pred_check_branch
          %127 = sbr.rel (%p125) target = $region20
        $region19: #{backend_forward.1} parent=15 // pred_region
          %s128 = sand.u32 %s34, 1
          %s129 = sand.u32 %s34, 1
          %s130 = smul.addr %s129, 1920
          %s131 = scalar_lea.vmem [#allocation3], %s130
          %s132 = smul.u32 %s15, 2
          %s133 = sadd.s32 %s132, %s16
          %s134 = smul.u32 120, %s133
          %s135 = smul.addr %s134, 8
          %s136 = scalar_lea.vmem %s0, %s135
          // Predicated region
          $region21: #{backend_forward.1} parent=19 // pred_check
            _
          $region22: #{backend_forward.1} parent=19 // pred_check_branch
            %138 = sbr.rel (0) target = $region24
          $region23: #{backend_forward.1} parent=19 // pred_region
            // Predicated region
            $region25: #{backend_forward.1} parent=23 // pred_check
              _
            $region26: #{backend_forward.1} parent=23 // pred_check_branch
              %140 = sbr.rel (0) target = $region28
            $region27: #{backend_forward.1} parent=23 // pred_region
              // Predicated region
              $region40: #{backend_forward.1} parent=27 // pred_check
                _
              $region41: #{backend_forward.1} parent=27 // pred_check_branch
                %633 = sbr.rel (0) target = $region43
              $region42: #{backend_forward.1} parent=27 // pred_region
                loop: start=0, step=1, limit=1
                $region44: #{backend_forward.1} parent=42 // loop_pre_header
                  _
                $region45: #{backend_forward.1} parent=42 // loop_header
                  %s635 = sphi 0, %s639
                  %p636 = scmp.ge.s32.totalorder %s635, 1
                  %s640 = sphi %s136, %s136
                  %s641 = sphi %s131, %s131
                $region46: #{backend_forward.1} parent=42 // loop_header_branch
                  %638 = sbr.rel (%p636) target = $region50
                $region47: #{backend_forward.1} parent=42 // loop_body
                  %v642 = vld [vmem:[%s640] sm:$0xff]
                  %643 = vst [vmem:[%s641] sm:$0xff] %v642
                  %v644 = vld [vmem:[%s640 + $0x8] sm:$0xff]
                  %645 = vst [vmem:[%s641 + $0x8] sm:$0xff] %v644
                  %v646 = vld [vmem:[%s640 + $0x10] sm:$0xff]
                  %647 = vst [vmem:[%s641 + $0x10] sm:$0xff] %v646
                  %v648 = vld [vmem:[%s640 + $0x18] sm:$0xff]
                  %649 = vst [vmem:[%s641 + $0x18] sm:$0xff] %v648
                  %v650 = vld [vmem:[%s640 + $0x20] sm:$0xff]
                  %651 = vst [vmem:[%s641 + $0x20] sm:$0xff] %v650
                  %v652 = vld [vmem:[%s640 + $0x28] sm:$0xff]
                  %653 = vst [vmem:[%s641 + $0x28] sm:$0xff] %v652
                  %v654 = vld [vmem:[%s640 + $0x30] sm:$0xff]
                  %655 = vst [vmem:[%s641 + $0x30] sm:$0xff] %v654
                  %v656 = vld [vmem:[%s640 + $0x38] sm:$0xff]
                  %657 = vst [vmem:[%s641 + $0x38] sm:$0xff] %v656
                  %v658 = vld [vmem:[%s640 + $0x40] sm:$0xff]
                  %659 = vst [vmem:[%s641 + $0x40] sm:$0xff] %v658
                  %v660 = vld [vmem:[%s640 + $0x48] sm:$0xff]
                  %661 = vst [vmem:[%s641 + $0x48] sm:$0xff] %v660
                  %v662 = vld [vmem:[%s640 + $0x50] sm:$0xff]
                  %663 = vst [vmem:[%s641 + $0x50] sm:$0xff] %v662
                  %v664 = vld [vmem:[%s640 + $0x58] sm:$0xff]
                  %665 = vst [vmem:[%s641 + $0x58] sm:$0xff] %v664
                  %v666 = vld [vmem:[%s640 + $0x60] sm:$0xff]
                  %667 = vst [vmem:[%s641 + $0x60] sm:$0xff] %v666
                  %v668 = vld [vmem:[%s640 + $0x68] sm:$0xff]
                  %669 = vst [vmem:[%s641 + $0x68] sm:$0xff] %v668
                  %v670 = vld [vmem:[%s640 + $0x70] sm:$0xff]
                  %671 = vst [vmem:[%s641 + $0x70] sm:$0xff] %v670
                  %v672 = vld [vmem:[%s640 + $0x78] sm:$0xff]
                  %673 = vst [vmem:[%s641 + $0x78] sm:$0xff] %v672
                  %v674 = vld [vmem:[%s640 + $0x80] sm:$0xff]
                  %675 = vst [vmem:[%s641 + $0x80] sm:$0xff] %v674
                  %v676 = vld [vmem:[%s640 + $0x88] sm:$0xff]
                  %677 = vst [vmem:[%s641 + $0x88] sm:$0xff] %v676
                  %v678 = vld [vmem:[%s640 + $0x90] sm:$0xff]
                  %679 = vst [vmem:[%s641 + $0x90] sm:$0xff] %v678
                  %v680 = vld [vmem:[%s640 + $0x98] sm:$0xff]
                  %681 = vst [vmem:[%s641 + $0x98] sm:$0xff] %v680
                  %v682 = vld [vmem:[%s640 + $0xa0] sm:$0xff]
                  %683 = vst [vmem:[%s641 + $0xa0] sm:$0xff] %v682
                  %v684 = vld [vmem:[%s640 + $0xa8] sm:$0xff]
                  %685 = vst [vmem:[%s641 + $0xa8] sm:$0xff] %v684
                  %v686 = vld [vmem:[%s640 + $0xb0] sm:$0xff]
                  %687 = vst [vmem:[%s641 + $0xb0] sm:$0xff] %v686
                  %v688 = vld [vmem:[%s640 + $0xb8] sm:$0xff]
                  %689 = vst [vmem:[%s641 + $0xb8] sm:$0xff] %v688
                  %v690 = vld [vmem:[%s640 + $0xc0] sm:$0xff]
                  %691 = vst [vmem:[%s641 + $0xc0] sm:$0xff] %v690
                  %v692 = vld [vmem:[%s640 + $0xc8] sm:$0xff]
                  %693 = vst [vmem:[%s641 + $0xc8] sm:$0xff] %v692
                  %v694 = vld [vmem:[%s640 + $0xd0] sm:$0xff]
                  %695 = vst [vmem:[%s641 + $0xd0] sm:$0xff] %v694
                  %v696 = vld [vmem:[%s640 + $0xd8] sm:$0xff]
                  %697 = vst [vmem:[%s641 + $0xd8] sm:$0xff] %v696
                  %v698 = vld [vmem:[%s640 + $0xe0] sm:$0xff]
                  %699 = vst [vmem:[%s641 + $0xe0] sm:$0xff] %v698
                  %v700 = vld [vmem:[%s640 + $0xe8] sm:$0xff]
                  %701 = vst [vmem:[%s641 + $0xe8] sm:$0xff] %v700
                  %v702 = vld [vmem:[%s640 + $0xf0] sm:$0xff]
                  %703 = vst [vmem:[%s641 + $0xf0] sm:$0xff] %v702
                  %v704 = vld [vmem:[%s640 + $0xf8] sm:$0xff]
                  %705 = vst [vmem:[%s641 + $0xf8] sm:$0xff] %v704
                  %v706 = vld [vmem:[%s640 + $0x100] sm:$0xff]
                  %707 = vst [vmem:[%s641 + $0x100] sm:$0xff] %v706
                  %v708 = vld [vmem:[%s640 + $0x108] sm:$0xff]
                  %709 = vst [vmem:[%s641 + $0x108] sm:$0xff] %v708
                  %v710 = vld [vmem:[%s640 + $0x110] sm:$0xff]
                  %711 = vst [vmem:[%s641 + $0x110] sm:$0xff] %v710
                  %v712 = vld [vmem:[%s640 + $0x118] sm:$0xff]
                  %713 = vst [vmem:[%s641 + $0x118] sm:$0xff] %v712
                  %v714 = vld [vmem:[%s640 + $0x120] sm:$0xff]
                  %715 = vst [vmem:[%s641 + $0x120] sm:$0xff] %v714
                  %v716 = vld [vmem:[%s640 + $0x128] sm:$0xff]
                  %717 = vst [vmem:[%s641 + $0x128] sm:$0xff] %v716
                  %v718 = vld [vmem:[%s640 + $0x130] sm:$0xff]
                  %719 = vst [vmem:[%s641 + $0x130] sm:$0xff] %v718
                  %v720 = vld [vmem:[%s640 + $0x138] sm:$0xff]
                  %721 = vst [vmem:[%s641 + $0x138] sm:$0xff] %v720
                  %v722 = vld [vmem:[%s640 + $0x140] sm:$0xff]
                  %723 = vst [vmem:[%s641 + $0x140] sm:$0xff] %v722
                  %v724 = vld [vmem:[%s640 + $0x148] sm:$0xff]
                  %725 = vst [vmem:[%s641 + $0x148] sm:$0xff] %v724
                  %v726 = vld [vmem:[%s640 + $0x150] sm:$0xff]
                  %727 = vst [vmem:[%s641 + $0x150] sm:$0xff] %v726
                  %v728 = vld [vmem:[%s640 + $0x158] sm:$0xff]
                  %729 = vst [vmem:[%s641 + $0x158] sm:$0xff] %v728
                  %v730 = vld [vmem:[%s640 + $0x160] sm:$0xff]
                  %731 = vst [vmem:[%s641 + $0x160] sm:$0xff] %v730
                  %v732 = vld [vmem:[%s640 + $0x168] sm:$0xff]
                  %733 = vst [vmem:[%s641 + $0x168] sm:$0xff] %v732
                  %v734 = vld [vmem:[%s640 + $0x170] sm:$0xff]
                  %735 = vst [vmem:[%s641 + $0x170] sm:$0xff] %v734
                  %v736 = vld [vmem:[%s640 + $0x178] sm:$0xff]
                  %737 = vst [vmem:[%s641 + $0x178] sm:$0xff] %v736
                  %v738 = vld [vmem:[%s640 + $0x180] sm:$0xff]
                  %739 = vst [vmem:[%s641 + $0x180] sm:$0xff] %v738
                  %v740 = vld [vmem:[%s640 + $0x188] sm:$0xff]
                  %741 = vst [vmem:[%s641 + $0x188] sm:$0xff] %v740
                  %v742 = vld [vmem:[%s640 + $0x190] sm:$0xff]
                  %743 = vst [vmem:[%s641 + $0x190] sm:$0xff] %v742
                  %v744 = vld [vmem:[%s640 + $0x198] sm:$0xff]
                  %745 = vst [vmem:[%s641 + $0x198] sm:$0xff] %v744
                  %v746 = vld [vmem:[%s640 + $0x1a0] sm:$0xff]
                  %747 = vst [vmem:[%s641 + $0x1a0] sm:$0xff] %v746
                  %v748 = vld [vmem:[%s640 + $0x1a8] sm:$0xff]
                  %749 = vst [vmem:[%s641 + $0x1a8] sm:$0xff] %v748
                  %v750 = vld [vmem:[%s640 + $0x1b0] sm:$0xff]
                  %751 = vst [vmem:[%s641 + $0x1b0] sm:$0xff] %v750
                  %v752 = vld [vmem:[%s640 + $0x1b8] sm:$0xff]
                  %753 = vst [vmem:[%s641 + $0x1b8] sm:$0xff] %v752
                  %v754 = vld [vmem:[%s640 + $0x1c0] sm:$0xff]
                  %755 = vst [vmem:[%s641 + $0x1c0] sm:$0xff] %v754
                  %v756 = vld [vmem:[%s640 + $0x1c8] sm:$0xff]
                  %757 = vst [vmem:[%s641 + $0x1c8] sm:$0xff] %v756
                  %v758 = vld [vmem:[%s640 + $0x1d0] sm:$0xff]
                  %759 = vst [vmem:[%s641 + $0x1d0] sm:$0xff] %v758
                  %v760 = vld [vmem:[%s640 + $0x1d8] sm:$0xff]
                  %761 = vst [vmem:[%s641 + $0x1d8] sm:$0xff] %v760
                  %v762 = vld [vmem:[%s640 + $0x1e0] sm:$0xff]
                  %763 = vst [vmem:[%s641 + $0x1e0] sm:$0xff] %v762
                  %v764 = vld [vmem:[%s640 + $0x1e8] sm:$0xff]
                  %765 = vst [vmem:[%s641 + $0x1e8] sm:$0xff] %v764
                  %v766 = vld [vmem:[%s640 + $0x1f0] sm:$0xff]
                  %767 = vst [vmem:[%s641 + $0x1f0] sm:$0xff] %v766
                  %v768 = vld [vmem:[%s640 + $0x1f8] sm:$0xff]
                  %769 = vst [vmem:[%s641 + $0x1f8] sm:$0xff] %v768
                  %v770 = vld [vmem:[%s640 + $0x200] sm:$0xff]
                  %771 = vst [vmem:[%s641 + $0x200] sm:$0xff] %v770
                  %v772 = vld [vmem:[%s640 + $0x208] sm:$0xff]
                  %773 = vst [vmem:[%s641 + $0x208] sm:$0xff] %v772
                  %v774 = vld [vmem:[%s640 + $0x210] sm:$0xff]
                  %775 = vst [vmem:[%s641 + $0x210] sm:$0xff] %v774
                  %v776 = vld [vmem:[%s640 + $0x218] sm:$0xff]
                  %777 = vst [vmem:[%s641 + $0x218] sm:$0xff] %v776
                  %v778 = vld [vmem:[%s640 + $0x220] sm:$0xff]
                  %779 = vst [vmem:[%s641 + $0x220] sm:$0xff] %v778
                  %v780 = vld [vmem:[%s640 + $0x228] sm:$0xff]
                  %781 = vst [vmem:[%s641 + $0x228] sm:$0xff] %v780
                  %v782 = vld [vmem:[%s640 + $0x230] sm:$0xff]
                  %783 = vst [vmem:[%s641 + $0x230] sm:$0xff] %v782
                  %v784 = vld [vmem:[%s640 + $0x238] sm:$0xff]
                  %785 = vst [vmem:[%s641 + $0x238] sm:$0xff] %v784
                  %v786 = vld [vmem:[%s640 + $0x240] sm:$0xff]
                  %787 = vst [vmem:[%s641 + $0x240] sm:$0xff] %v786
                  %v788 = vld [vmem:[%s640 + $0x248] sm:$0xff]
                  %789 = vst [vmem:[%s641 + $0x248] sm:$0xff] %v788
                  %v790 = vld [vmem:[%s640 + $0x250] sm:$0xff]
                  %791 = vst [vmem:[%s641 + $0x250] sm:$0xff] %v790
                  %v792 = vld [vmem:[%s640 + $0x258] sm:$0xff]
                  %793 = vst [vmem:[%s641 + $0x258] sm:$0xff] %v792
                  %v794 = vld [vmem:[%s640 + $0x260] sm:$0xff]
                  %795 = vst [vmem:[%s641 + $0x260] sm:$0xff] %v794
                  %v796 = vld [vmem:[%s640 + $0x268] sm:$0xff]
                  %797 = vst [vmem:[%s641 + $0x268] sm:$0xff] %v796
                  %v798 = vld [vmem:[%s640 + $0x270] sm:$0xff]
                  %799 = vst [vmem:[%s641 + $0x270] sm:$0xff] %v798
                  %v800 = vld [vmem:[%s640 + $0x278] sm:$0xff]
                  %801 = vst [vmem:[%s641 + $0x278] sm:$0xff] %v800
                  %v802 = vld [vmem:[%s640 + $0x280] sm:$0xff]
                  %803 = vst [vmem:[%s641 + $0x280] sm:$0xff] %v802
                  %v804 = vld [vmem:[%s640 + $0x288] sm:$0xff]
                  %805 = vst [vmem:[%s641 + $0x288] sm:$0xff] %v804
                  %v806 = vld [vmem:[%s640 + $0x290] sm:$0xff]
                  %807 = vst [vmem:[%s641 + $0x290] sm:$0xff] %v806
                  %v808 = vld [vmem:[%s640 + $0x298] sm:$0xff]
                  %809 = vst [vmem:[%s641 + $0x298] sm:$0xff] %v808
                  %v810 = vld [vmem:[%s640 + $0x2a0] sm:$0xff]
                  %811 = vst [vmem:[%s641 + $0x2a0] sm:$0xff] %v810
                  %v812 = vld [vmem:[%s640 + $0x2a8] sm:$0xff]
                  %813 = vst [vmem:[%s641 + $0x2a8] sm:$0xff] %v812
                  %v814 = vld [vmem:[%s640 + $0x2b0] sm:$0xff]
                  %815 = vst [vmem:[%s641 + $0x2b0] sm:$0xff] %v814
                  %v816 = vld [vmem:[%s640 + $0x2b8] sm:$0xff]
                  %817 = vst [vmem:[%s641 + $0x2b8] sm:$0xff] %v816
                  %v818 = vld [vmem:[%s640 + $0x2c0] sm:$0xff]
                  %819 = vst [vmem:[%s641 + $0x2c0] sm:$0xff] %v818
                  %v820 = vld [vmem:[%s640 + $0x2c8] sm:$0xff]
                  %821 = vst [vmem:[%s641 + $0x2c8] sm:$0xff] %v820
                  %v822 = vld [vmem:[%s640 + $0x2d0] sm:$0xff]
                  %823 = vst [vmem:[%s641 + $0x2d0] sm:$0xff] %v822
                  %v824 = vld [vmem:[%s640 + $0x2d8] sm:$0xff]
                  %825 = vst [vmem:[%s641 + $0x2d8] sm:$0xff] %v824
                  %v826 = vld [vmem:[%s640 + $0x2e0] sm:$0xff]
                  %827 = vst [vmem:[%s641 + $0x2e0] sm:$0xff] %v826
                  %v828 = vld [vmem:[%s640 + $0x2e8] sm:$0xff]
                  %829 = vst [vmem:[%s641 + $0x2e8] sm:$0xff] %v828
                  %v830 = vld [vmem:[%s640 + $0x2f0] sm:$0xff]
                  %831 = vst [vmem:[%s641 + $0x2f0] sm:$0xff] %v830
                  %v832 = vld [vmem:[%s640 + $0x2f8] sm:$0xff]
                  %833 = vst [vmem:[%s641 + $0x2f8] sm:$0xff] %v832
                  %v834 = vld [vmem:[%s640 + $0x300] sm:$0xff]
                  %835 = vst [vmem:[%s641 + $0x300] sm:$0xff] %v834
                  %v836 = vld [vmem:[%s640 + $0x308] sm:$0xff]
                  %837 = vst [vmem:[%s641 + $0x308] sm:$0xff] %v836
                  %v838 = vld [vmem:[%s640 + $0x310] sm:$0xff]
                  %839 = vst [vmem:[%s641 + $0x310] sm:$0xff] %v838
                  %v840 = vld [vmem:[%s640 + $0x318] sm:$0xff]
                  %841 = vst [vmem:[%s641 + $0x318] sm:$0xff] %v840
                  %v842 = vld [vmem:[%s640 + $0x320] sm:$0xff]
                  %843 = vst [vmem:[%s641 + $0x320] sm:$0xff] %v842
                  %v844 = vld [vmem:[%s640 + $0x328] sm:$0xff]
                  %845 = vst [vmem:[%s641 + $0x328] sm:$0xff] %v844
                  %v846 = vld [vmem:[%s640 + $0x330] sm:$0xff]
                  %847 = vst [vmem:[%s641 + $0x330] sm:$0xff] %v846
                  %v848 = vld [vmem:[%s640 + $0x338] sm:$0xff]
                  %849 = vst [vmem:[%s641 + $0x338] sm:$0xff] %v848
                  %v850 = vld [vmem:[%s640 + $0x340] sm:$0xff]
                  %851 = vst [vmem:[%s641 + $0x340] sm:$0xff] %v850
                  %v852 = vld [vmem:[%s640 + $0x348] sm:$0xff]
                  %853 = vst [vmem:[%s641 + $0x348] sm:$0xff] %v852
                  %v854 = vld [vmem:[%s640 + $0x350] sm:$0xff]
                  %855 = vst [vmem:[%s641 + $0x350] sm:$0xff] %v854
                  %v856 = vld [vmem:[%s640 + $0x358] sm:$0xff]
                  %857 = vst [vmem:[%s641 + $0x358] sm:$0xff] %v856
                  %v858 = vld [vmem:[%s640 + $0x360] sm:$0xff]
                  %859 = vst [vmem:[%s641 + $0x360] sm:$0xff] %v858
                  %v860 = vld [vmem:[%s640 + $0x368] sm:$0xff]
                  %861 = vst [vmem:[%s641 + $0x368] sm:$0xff] %v860
                  %v862 = vld [vmem:[%s640 + $0x370] sm:$0xff]
                  %863 = vst [vmem:[%s641 + $0x370] sm:$0xff] %v862
                  %v864 = vld [vmem:[%s640 + $0x378] sm:$0xff]
                  %865 = vst [vmem:[%s641 + $0x378] sm:$0xff] %v864
                  %v866 = vld [vmem:[%s640 + $0x380] sm:$0xff]
                  %867 = vst [vmem:[%s641 + $0x380] sm:$0xff] %v866
                  %v868 = vld [vmem:[%s640 + $0x388] sm:$0xff]
                  %869 = vst [vmem:[%s641 + $0x388] sm:$0xff] %v868
                  %v870 = vld [vmem:[%s640 + $0x390] sm:$0xff]
                  %871 = vst [vmem:[%s641 + $0x390] sm:$0xff] %v870
                  %v872 = vld [vmem:[%s640 + $0x398] sm:$0xff]
                  %873 = vst [vmem:[%s641 + $0x398] sm:$0xff] %v872
                  %v874 = vld [vmem:[%s640 + $0x3a0] sm:$0xff]
                  %875 = vst [vmem:[%s641 + $0x3a0] sm:$0xff] %v874
                  %v876 = vld [vmem:[%s640 + $0x3a8] sm:$0xff]
                  %877 = vst [vmem:[%s641 + $0x3a8] sm:$0xff] %v876
                  %v878 = vld [vmem:[%s640 + $0x3b0] sm:$0xff]
                  %879 = vst [vmem:[%s641 + $0x3b0] sm:$0xff] %v878
                  %v880 = vld [vmem:[%s640 + $0x3b8] sm:$0xff]
                  %881 = vst [vmem:[%s641 + $0x3b8] sm:$0xff] %v880
                  %v882 = vld [vmem:[%s640 + $0xf00] sm:$0xff]
                  %883 = vst [vmem:[%s641 + $0x3c0] sm:$0xff] %v882
                  %v884 = vld [vmem:[%s640 + $0xf08] sm:$0xff]
                  %885 = vst [vmem:[%s641 + $0x3c8] sm:$0xff] %v884
                  %v886 = vld [vmem:[%s640 + $0xf10] sm:$0xff]
                  %887 = vst [vmem:[%s641 + $0x3d0] sm:$0xff] %v886
                  %v888 = vld [vmem:[%s640 + $0xf18] sm:$0xff]
                  %889 = vst [vmem:[%s641 + $0x3d8] sm:$0xff] %v888
                  %v890 = vld [vmem:[%s640 + $0xf20] sm:$0xff]
                  %891 = vst [vmem:[%s641 + $0x3e0] sm:$0xff] %v890
                  %v892 = vld [vmem:[%s640 + $0xf28] sm:$0xff]
                  %893 = vst [vmem:[%s641 + $0x3e8] sm:$0xff] %v892
                  %v894 = vld [vmem:[%s640 + $0xf30] sm:$0xff]
                  %895 = vst [vmem:[%s641 + $0x3f0] sm:$0xff] %v894
                  %v896 = vld [vmem:[%s640 + $0xf38] sm:$0xff]
                  %897 = vst [vmem:[%s641 + $0x3f8] sm:$0xff] %v896
                  %v898 = vld [vmem:[%s640 + $0xf40] sm:$0xff]
                  %899 = vst [vmem:[%s641 + $0x400] sm:$0xff] %v898
                  %v900 = vld [vmem:[%s640 + $0xf48] sm:$0xff]
                  %901 = vst [vmem:[%s641 + $0x408] sm:$0xff] %v900
                  %v902 = vld [vmem:[%s640 + $0xf50] sm:$0xff]
                  %903 = vst [vmem:[%s641 + $0x410] sm:$0xff] %v902
                  %v904 = vld [vmem:[%s640 + $0xf58] sm:$0xff]
                  %905 = vst [vmem:[%s641 + $0x418] sm:$0xff] %v904
                  %v906 = vld [vmem:[%s640 + $0xf60] sm:$0xff]
                  %907 = vst [vmem:[%s641 + $0x420] sm:$0xff] %v906
                  %v908 = vld [vmem:[%s640 + $0xf68] sm:$0xff]
                  %909 = vst [vmem:[%s641 + $0x428] sm:$0xff] %v908
                  %v910 = vld [vmem:[%s640 + $0xf70] sm:$0xff]
                  %911 = vst [vmem:[%s641 + $0x430] sm:$0xff] %v910
                  %v912 = vld [vmem:[%s640 + $0xf78] sm:$0xff]
                  %913 = vst [vmem:[%s641 + $0x438] sm:$0xff] %v912
                  %v914 = vld [vmem:[%s640 + $0xf80] sm:$0xff]
                  %915 = vst [vmem:[%s641 + $0x440] sm:$0xff] %v914
                  %v916 = vld [vmem:[%s640 + $0xf88] sm:$0xff]
                  %917 = vst [vmem:[%s641 + $0x448] sm:$0xff] %v916
                  %v918 = vld [vmem:[%s640 + $0xf90] sm:$0xff]
                  %919 = vst [vmem:[%s641 + $0x450] sm:$0xff] %v918
                  %v920 = vld [vmem:[%s640 + $0xf98] sm:$0xff]
                  %921 = vst [vmem:[%s641 + $0x458] sm:$0xff] %v920
                  %v922 = vld [vmem:[%s640 + $0xfa0] sm:$0xff]
                  %923 = vst [vmem:[%s641 + $0x460] sm:$0xff] %v922
                  %v924 = vld [vmem:[%s640 + $0xfa8] sm:$0xff]
                  %925 = vst [vmem:[%s641 + $0x468] sm:$0xff] %v924
                  %v926 = vld [vmem:[%s640 + $0xfb0] sm:$0xff]
                  %927 = vst [vmem:[%s641 + $0x470] sm:$0xff] %v926
                  %v928 = vld [vmem:[%s640 + $0xfb8] sm:$0xff]
                  %929 = vst [vmem:[%s641 + $0x478] sm:$0xff] %v928
                  %v930 = vld [vmem:[%s640 + $0xfc0] sm:$0xff]
                  %931 = vst [vmem:[%s641 + $0x480] sm:$0xff] %v930
                  %v932 = vld [vmem:[%s640 + $0xfc8] sm:$0xff]
                  %933 = vst [vmem:[%s641 + $0x488] sm:$0xff] %v932
                  %v934 = vld [vmem:[%s640 + $0xfd0] sm:$0xff]
                  %935 = vst [vmem:[%s641 + $0x490] sm:$0xff] %v934
                  %v936 = vld [vmem:[%s640 + $0xfd8] sm:$0xff]
                  %937 = vst [vmem:[%s641 + $0x498] sm:$0xff] %v936
                  %v938 = vld [vmem:[%s640 + $0xfe0] sm:$0xff]
                  %939 = vst [vmem:[%s641 + $0x4a0] sm:$0xff] %v938
                  %v940 = vld [vmem:[%s640 + $0xfe8] sm:$0xff]
                  %941 = vst [vmem:[%s641 + $0x4a8] sm:$0xff] %v940
                  %v942 = vld [vmem:[%s640 + $0xff0] sm:$0xff]
                  %943 = vst [vmem:[%s641 + $0x4b0] sm:$0xff] %v942
                  %v944 = vld [vmem:[%s640 + $0xff8] sm:$0xff]
                  %945 = vst [vmem:[%s641 + $0x4b8] sm:$0xff] %v944
                  %v946 = vld [vmem:[%s640 + $0x1000] sm:$0xff]
                  %947 = vst [vmem:[%s641 + $0x4c0] sm:$0xff] %v946
                  %v948 = vld [vmem:[%s640 + $0x1008] sm:$0xff]
                  %949 = vst [vmem:[%s641 + $0x4c8] sm:$0xff] %v948
                  %v950 = vld [vmem:[%s640 + $0x1010] sm:$0xff]
                  %951 = vst [vmem:[%s641 + $0x4d0] sm:$0xff] %v950
                  %v952 = vld [vmem:[%s640 + $0x1018] sm:$0xff]
                  %953 = vst [vmem:[%s641 + $0x4d8] sm:$0xff] %v952
                  %v954 = vld [vmem:[%s640 + $0x1020] sm:$0xff]
                  %955 = vst [vmem:[%s641 + $0x4e0] sm:$0xff] %v954
                  %v956 = vld [vmem:[%s640 + $0x1028] sm:$0xff]
                  %957 = vst [vmem:[%s641 + $0x4e8] sm:$0xff] %v956
                  %v958 = vld [vmem:[%s640 + $0x1030] sm:$0xff]
                  %959 = vst [vmem:[%s641 + $0x4f0] sm:$0xff] %v958
                  %v960 = vld [vmem:[%s640 + $0x1038] sm:$0xff]
                  %961 = vst [vmem:[%s641 + $0x4f8] sm:$0xff] %v960
                  %v962 = vld [vmem:[%s640 + $0x1040] sm:$0xff]
                  %963 = vst [vmem:[%s641 + $0x500] sm:$0xff] %v962
                  %v964 = vld [vmem:[%s640 + $0x1048] sm:$0xff]
                  %965 = vst [vmem:[%s641 + $0x508] sm:$0xff] %v964
                  %v966 = vld [vmem:[%s640 + $0x1050] sm:$0xff]
                  %967 = vst [vmem:[%s641 + $0x510] sm:$0xff] %v966
                  %v968 = vld [vmem:[%s640 + $0x1058] sm:$0xff]
                  %969 = vst [vmem:[%s641 + $0x518] sm:$0xff] %v968
                  %v970 = vld [vmem:[%s640 + $0x1060] sm:$0xff]
                  %971 = vst [vmem:[%s641 + $0x520] sm:$0xff] %v970
                  %v972 = vld [vmem:[%s640 + $0x1068] sm:$0xff]
                  %973 = vst [vmem:[%s641 + $0x528] sm:$0xff] %v972
                  %v974 = vld [vmem:[%s640 + $0x1070] sm:$0xff]
                  %975 = vst [vmem:[%s641 + $0x530] sm:$0xff] %v974
                  %v976 = vld [vmem:[%s640 + $0x1078] sm:$0xff]
                  %977 = vst [vmem:[%s641 + $0x538] sm:$0xff] %v976
                  %v978 = vld [vmem:[%s640 + $0x1080] sm:$0xff]
                  %979 = vst [vmem:[%s641 + $0x540] sm:$0xff] %v978
                  %v980 = vld [vmem:[%s640 + $0x1088] sm:$0xff]
                  %981 = vst [vmem:[%s641 + $0x548] sm:$0xff] %v980
                  %v982 = vld [vmem:[%s640 + $0x1090] sm:$0xff]
                  %983 = vst [vmem:[%s641 + $0x550] sm:$0xff] %v982
                  %v984 = vld [vmem:[%s640 + $0x1098] sm:$0xff]
                  %985 = vst [vmem:[%s641 + $0x558] sm:$0xff] %v984
                  %v986 = vld [vmem:[%s640 + $0x10a0] sm:$0xff]
                  %987 = vst [vmem:[%s641 + $0x560] sm:$0xff] %v986
                  %v988 = vld [vmem:[%s640 + $0x10a8] sm:$0xff]
                  %989 = vst [vmem:[%s641 + $0x568] sm:$0xff] %v988
                  %v990 = vld [vmem:[%s640 + $0x10b0] sm:$0xff]
                  %991 = vst [vmem:[%s641 + $0x570] sm:$0xff] %v990
                  %v992 = vld [vmem:[%s640 + $0x10b8] sm:$0xff]
                  %993 = vst [vmem:[%s641 + $0x578] sm:$0xff] %v992
                  %v994 = vld [vmem:[%s640 + $0x10c0] sm:$0xff]
                  %995 = vst [vmem:[%s641 + $0x580] sm:$0xff] %v994
                  %v996 = vld [vmem:[%s640 + $0x10c8] sm:$0xff]
                  %997 = vst [vmem:[%s641 + $0x588] sm:$0xff] %v996
                  %v998 = vld [vmem:[%s640 + $0x10d0] sm:$0xff]
                  %999 = vst [vmem:[%s641 + $0x590] sm:$0xff] %v998
                  %v1000 = vld [vmem:[%s640 + $0x10d8] sm:$0xff]
                  %1001 = vst [vmem:[%s641 + $0x598] sm:$0xff] %v1000
                  %v1002 = vld [vmem:[%s640 + $0x10e0] sm:$0xff]
                  %1003 = vst [vmem:[%s641 + $0x5a0] sm:$0xff] %v1002
                  %v1004 = vld [vmem:[%s640 + $0x10e8] sm:$0xff]
                  %1005 = vst [vmem:[%s641 + $0x5a8] sm:$0xff] %v1004
                  %v1006 = vld [vmem:[%s640 + $0x10f0] sm:$0xff]
                  %1007 = vst [vmem:[%s641 + $0x5b0] sm:$0xff] %v1006
                  %v1008 = vld [vmem:[%s640 + $0x10f8] sm:$0xff]
                  %1009 = vst [vmem:[%s641 + $0x5b8] sm:$0xff] %v1008
                  %v1010 = vld [vmem:[%s640 + $0x1100] sm:$0xff]
                  %1011 = vst [vmem:[%s641 + $0x5c0] sm:$0xff] %v1010
                  %v1012 = vld [vmem:[%s640 + $0x1108] sm:$0xff]
                  %1013 = vst [vmem:[%s641 + $0x5c8] sm:$0xff] %v1012
                  %v1014 = vld [vmem:[%s640 + $0x1110] sm:$0xff]
                  %1015 = vst [vmem:[%s641 + $0x5d0] sm:$0xff] %v1014
                  %v1016 = vld [vmem:[%s640 + $0x1118] sm:$0xff]
                  %1017 = vst [vmem:[%s641 + $0x5d8] sm:$0xff] %v1016
                  %v1018 = vld [vmem:[%s640 + $0x1120] sm:$0xff]
                  %1019 = vst [vmem:[%s641 + $0x5e0] sm:$0xff] %v1018
                  %v1020 = vld [vmem:[%s640 + $0x1128] sm:$0xff]
                  %1021 = vst [vmem:[%s641 + $0x5e8] sm:$0xff] %v1020
                  %v1022 = vld [vmem:[%s640 + $0x1130] sm:$0xff]
                  %1023 = vst [vmem:[%s641 + $0x5f0] sm:$0xff] %v1022
                  %v1024 = vld [vmem:[%s640 + $0x1138] sm:$0xff]
                  %1025 = vst [vmem:[%s641 + $0x5f8] sm:$0xff] %v1024
                  %v1026 = vld [vmem:[%s640 + $0x1140] sm:$0xff]
                  %1027 = vst [vmem:[%s641 + $0x600] sm:$0xff] %v1026
                  %v1028 = vld [vmem:[%s640 + $0x1148] sm:$0xff]
                  %1029 = vst [vmem:[%s641 + $0x608] sm:$0xff] %v1028
                  %v1030 = vld [vmem:[%s640 + $0x1150] sm:$0xff]
                  %1031 = vst [vmem:[%s641 + $0x610] sm:$0xff] %v1030
                  %v1032 = vld [vmem:[%s640 + $0x1158] sm:$0xff]
                  %1033 = vst [vmem:[%s641 + $0x618] sm:$0xff] %v1032
                  %v1034 = vld [vmem:[%s640 + $0x1160] sm:$0xff]
                  %1035 = vst [vmem:[%s641 + $0x620] sm:$0xff] %v1034
                  %v1036 = vld [vmem:[%s640 + $0x1168] sm:$0xff]
                  %1037 = vst [vmem:[%s641 + $0x628] sm:$0xff] %v1036
                  %v1038 = vld [vmem:[%s640 + $0x1170] sm:$0xff]
                  %1039 = vst [vmem:[%s641 + $0x630] sm:$0xff] %v1038
                  %v1040 = vld [vmem:[%s640 + $0x1178] sm:$0xff]
                  %1041 = vst [vmem:[%s641 + $0x638] sm:$0xff] %v1040
                  %v1042 = vld [vmem:[%s640 + $0x1180] sm:$0xff]
                  %1043 = vst [vmem:[%s641 + $0x640] sm:$0xff] %v1042
                  %v1044 = vld [vmem:[%s640 + $0x1188] sm:$0xff]
                  %1045 = vst [vmem:[%s641 + $0x648] sm:$0xff] %v1044
                  %v1046 = vld [vmem:[%s640 + $0x1190] sm:$0xff]
                  %1047 = vst [vmem:[%s641 + $0x650] sm:$0xff] %v1046
                  %v1048 = vld [vmem:[%s640 + $0x1198] sm:$0xff]
                  %1049 = vst [vmem:[%s641 + $0x658] sm:$0xff] %v1048
                  %v1050 = vld [vmem:[%s640 + $0x11a0] sm:$0xff]
                  %1051 = vst [vmem:[%s641 + $0x660] sm:$0xff] %v1050
                  %v1052 = vld [vmem:[%s640 + $0x11a8] sm:$0xff]
                  %1053 = vst [vmem:[%s641 + $0x668] sm:$0xff] %v1052
                  %v1054 = vld [vmem:[%s640 + $0x11b0] sm:$0xff]
                  %1055 = vst [vmem:[%s641 + $0x670] sm:$0xff] %v1054
                  %v1056 = vld [vmem:[%s640 + $0x11b8] sm:$0xff]
                  %1057 = vst [vmem:[%s641 + $0x678] sm:$0xff] %v1056
                  %v1058 = vld [vmem:[%s640 + $0x11c0] sm:$0xff]
                  %1059 = vst [vmem:[%s641 + $0x680] sm:$0xff] %v1058
                  %v1060 = vld [vmem:[%s640 + $0x11c8] sm:$0xff]
                  %1061 = vst [vmem:[%s641 + $0x688] sm:$0xff] %v1060
                  %v1062 = vld [vmem:[%s640 + $0x11d0] sm:$0xff]
                  %1063 = vst [vmem:[%s641 + $0x690] sm:$0xff] %v1062
                  %v1064 = vld [vmem:[%s640 + $0x11d8] sm:$0xff]
                  %1065 = vst [vmem:[%s641 + $0x698] sm:$0xff] %v1064
                  %v1066 = vld [vmem:[%s640 + $0x11e0] sm:$0xff]
                  %1067 = vst [vmem:[%s641 + $0x6a0] sm:$0xff] %v1066
                  %v1068 = vld [vmem:[%s640 + $0x11e8] sm:$0xff]
                  %1069 = vst [vmem:[%s641 + $0x6a8] sm:$0xff] %v1068
                  %v1070 = vld [vmem:[%s640 + $0x11f0] sm:$0xff]
                  %1071 = vst [vmem:[%s641 + $0x6b0] sm:$0xff] %v1070
                  %v1072 = vld [vmem:[%s640 + $0x11f8] sm:$0xff]
                  %1073 = vst [vmem:[%s641 + $0x6b8] sm:$0xff] %v1072
                  %v1074 = vld [vmem:[%s640 + $0x1200] sm:$0xff]
                  %1075 = vst [vmem:[%s641 + $0x6c0] sm:$0xff] %v1074
                  %v1076 = vld [vmem:[%s640 + $0x1208] sm:$0xff]
                  %1077 = vst [vmem:[%s641 + $0x6c8] sm:$0xff] %v1076
                  %v1078 = vld [vmem:[%s640 + $0x1210] sm:$0xff]
                  %1079 = vst [vmem:[%s641 + $0x6d0] sm:$0xff] %v1078
                  %v1080 = vld [vmem:[%s640 + $0x1218] sm:$0xff]
                  %1081 = vst [vmem:[%s641 + $0x6d8] sm:$0xff] %v1080
                  %v1082 = vld [vmem:[%s640 + $0x1220] sm:$0xff]
                  %1083 = vst [vmem:[%s641 + $0x6e0] sm:$0xff] %v1082
                  %v1084 = vld [vmem:[%s640 + $0x1228] sm:$0xff]
                  %1085 = vst [vmem:[%s641 + $0x6e8] sm:$0xff] %v1084
                  %v1086 = vld [vmem:[%s640 + $0x1230] sm:$0xff]
                  %1087 = vst [vmem:[%s641 + $0x6f0] sm:$0xff] %v1086
                  %v1088 = vld [vmem:[%s640 + $0x1238] sm:$0xff]
                  %1089 = vst [vmem:[%s641 + $0x6f8] sm:$0xff] %v1088
                  %v1090 = vld [vmem:[%s640 + $0x1240] sm:$0xff]
                  %1091 = vst [vmem:[%s641 + $0x700] sm:$0xff] %v1090
                  %v1092 = vld [vmem:[%s640 + $0x1248] sm:$0xff]
                  %1093 = vst [vmem:[%s641 + $0x708] sm:$0xff] %v1092
                  %v1094 = vld [vmem:[%s640 + $0x1250] sm:$0xff]
                  %1095 = vst [vmem:[%s641 + $0x710] sm:$0xff] %v1094
                  %v1096 = vld [vmem:[%s640 + $0x1258] sm:$0xff]
                  %1097 = vst [vmem:[%s641 + $0x718] sm:$0xff] %v1096
                  %v1098 = vld [vmem:[%s640 + $0x1260] sm:$0xff]
                  %1099 = vst [vmem:[%s641 + $0x720] sm:$0xff] %v1098
                  %v1100 = vld [vmem:[%s640 + $0x1268] sm:$0xff]
                  %1101 = vst [vmem:[%s641 + $0x728] sm:$0xff] %v1100
                  %v1102 = vld [vmem:[%s640 + $0x1270] sm:$0xff]
                  %1103 = vst [vmem:[%s641 + $0x730] sm:$0xff] %v1102
                  %v1104 = vld [vmem:[%s640 + $0x1278] sm:$0xff]
                  %1105 = vst [vmem:[%s641 + $0x738] sm:$0xff] %v1104
                  %v1106 = vld [vmem:[%s640 + $0x1280] sm:$0xff]
                  %1107 = vst [vmem:[%s641 + $0x740] sm:$0xff] %v1106
                  %v1108 = vld [vmem:[%s640 + $0x1288] sm:$0xff]
                  %1109 = vst [vmem:[%s641 + $0x748] sm:$0xff] %v1108
                  %v1110 = vld [vmem:[%s640 + $0x1290] sm:$0xff]
                  %1111 = vst [vmem:[%s641 + $0x750] sm:$0xff] %v1110
                  %v1112 = vld [vmem:[%s640 + $0x1298] sm:$0xff]
                  %1113 = vst [vmem:[%s641 + $0x758] sm:$0xff] %v1112
                  %v1114 = vld [vmem:[%s640 + $0x12a0] sm:$0xff]
                  %1115 = vst [vmem:[%s641 + $0x760] sm:$0xff] %v1114
                  %v1116 = vld [vmem:[%s640 + $0x12a8] sm:$0xff]
                  %1117 = vst [vmem:[%s641 + $0x768] sm:$0xff] %v1116
                  %v1118 = vld [vmem:[%s640 + $0x12b0] sm:$0xff]
                  %1119 = vst [vmem:[%s641 + $0x770] sm:$0xff] %v1118
                  %v1120 = vld [vmem:[%s640 + $0x12b8] sm:$0xff]
                  %1121 = vst [vmem:[%s641 + $0x778] sm:$0xff] %v1120
                $region48: #{backend_forward.1} parent=42 // loop_footer
                  %s639 = sadd.s32 1, %s635
                $region49: #{backend_forward.1} parent=42 // loop_footer_branch
                  %634 = sbr.rel target = $region45
                $region50: #{backend_forward.1} parent=42 // loop_exit
                  _
              $region43: #{backend_forward.1} parent=27 // pred_fallthru
                _
              // Predicated region
              $region51: #{backend_forward.1} parent=27 // pred_check
                _
              $region52: #{backend_forward.1} parent=27 // pred_check_branch
                %1123 = sbr.rel target = $region54
              $region53: #{backend_forward.1} parent=27 // pred_region
                _
              $region54: #{backend_forward.1} parent=27 // pred_fallthru
                _
            $region28: #{backend_forward.1} parent=23 // pred_fallthru
              _
            // Predicated region
            $region29: #{backend_forward.1} parent=23 // pred_check
              _
            $region30: #{backend_forward.1} parent=23 // pred_check_branch
              %142 = sbr.rel target = $region32
            $region31: #{backend_forward.1} parent=23 // pred_region
              loop: start=0, step=1, limit=1
              $region33: #{backend_forward.1} parent=31 // loop_pre_header
                _
              $region34: #{backend_forward.1} parent=31 // loop_header
                %s145 = sphi 0, %s149
                %p146 = scmp.ge.s32.totalorder %s145, 1
                %s150 = sphi %s136, %s136
                %s151 = sphi %s131, %s131
              $region35: #{backend_forward.1} parent=31 // loop_header_branch
                %148 = sbr.rel (%p146) target = $region39
              $region36: #{backend_forward.1} parent=31 // loop_body
                %v152 = vld [vmem:[%s150] sm:$0xff]
                %153 = vst [vmem:[%s151] sm:$0xff] %v152
                %v154 = vld [vmem:[%s150 + $0x8] sm:$0xff]
                %155 = vst [vmem:[%s151 + $0x8] sm:$0xff] %v154
                %v156 = vld [vmem:[%s150 + $0x10] sm:$0xff]
                %157 = vst [vmem:[%s151 + $0x10] sm:$0xff] %v156
                %v158 = vld [vmem:[%s150 + $0x18] sm:$0xff]
                %159 = vst [vmem:[%s151 + $0x18] sm:$0xff] %v158
                %v160 = vld [vmem:[%s150 + $0x20] sm:$0xff]
                %161 = vst [vmem:[%s151 + $0x20] sm:$0xff] %v160
                %v162 = vld [vmem:[%s150 + $0x28] sm:$0xff]
                %163 = vst [vmem:[%s151 + $0x28] sm:$0xff] %v162
                %v164 = vld [vmem:[%s150 + $0x30] sm:$0xff]
                %165 = vst [vmem:[%s151 + $0x30] sm:$0xff] %v164
                %v166 = vld [vmem:[%s150 + $0x38] sm:$0xff]
                %167 = vst [vmem:[%s151 + $0x38] sm:$0xff] %v166
                %v168 = vld [vmem:[%s150 + $0x40] sm:$0xff]
                %169 = vst [vmem:[%s151 + $0x40] sm:$0xff] %v168
                %v170 = vld [vmem:[%s150 + $0x48] sm:$0xff]
                %171 = vst [vmem:[%s151 + $0x48] sm:$0xff] %v170
                %v172 = vld [vmem:[%s150 + $0x50] sm:$0xff]
                %173 = vst [vmem:[%s151 + $0x50] sm:$0xff] %v172
                %v174 = vld [vmem:[%s150 + $0x58] sm:$0xff]
                %175 = vst [vmem:[%s151 + $0x58] sm:$0xff] %v174
                %v176 = vld [vmem:[%s150 + $0x60] sm:$0xff]
                %177 = vst [vmem:[%s151 + $0x60] sm:$0xff] %v176
                %v178 = vld [vmem:[%s150 + $0x68] sm:$0xff]
                %179 = vst [vmem:[%s151 + $0x68] sm:$0xff] %v178
                %v180 = vld [vmem:[%s150 + $0x70] sm:$0xff]
                %181 = vst [vmem:[%s151 + $0x70] sm:$0xff] %v180
                %v182 = vld [vmem:[%s150 + $0x78] sm:$0xff]
                %183 = vst [vmem:[%s151 + $0x78] sm:$0xff] %v182
                %v184 = vld [vmem:[%s150 + $0x80] sm:$0xff]
                %185 = vst [vmem:[%s151 + $0x80] sm:$0xff] %v184
                %v186 = vld [vmem:[%s150 + $0x88] sm:$0xff]
                %187 = vst [vmem:[%s151 + $0x88] sm:$0xff] %v186
                %v188 = vld [vmem:[%s150 + $0x90] sm:$0xff]
                %189 = vst [vmem:[%s151 + $0x90] sm:$0xff] %v188
                %v190 = vld [vmem:[%s150 + $0x98] sm:$0xff]
                %191 = vst [vmem:[%s151 + $0x98] sm:$0xff] %v190
                %v192 = vld [vmem:[%s150 + $0xa0] sm:$0xff]
                %193 = vst [vmem:[%s151 + $0xa0] sm:$0xff] %v192
                %v194 = vld [vmem:[%s150 + $0xa8] sm:$0xff]
                %195 = vst [vmem:[%s151 + $0xa8] sm:$0xff] %v194
                %v196 = vld [vmem:[%s150 + $0xb0] sm:$0xff]
                %197 = vst [vmem:[%s151 + $0xb0] sm:$0xff] %v196
                %v198 = vld [vmem:[%s150 + $0xb8] sm:$0xff]
                %199 = vst [vmem:[%s151 + $0xb8] sm:$0xff] %v198
                %v200 = vld [vmem:[%s150 + $0xc0] sm:$0xff]
                %201 = vst [vmem:[%s151 + $0xc0] sm:$0xff] %v200
                %v202 = vld [vmem:[%s150 + $0xc8] sm:$0xff]
                %203 = vst [vmem:[%s151 + $0xc8] sm:$0xff] %v202
                %v204 = vld [vmem:[%s150 + $0xd0] sm:$0xff]
                %205 = vst [vmem:[%s151 + $0xd0] sm:$0xff] %v204
                %v206 = vld [vmem:[%s150 + $0xd8] sm:$0xff]
                %207 = vst [vmem:[%s151 + $0xd8] sm:$0xff] %v206
                %v208 = vld [vmem:[%s150 + $0xe0] sm:$0xff]
                %209 = vst [vmem:[%s151 + $0xe0] sm:$0xff] %v208
                %v210 = vld [vmem:[%s150 + $0xe8] sm:$0xff]
                %211 = vst [vmem:[%s151 + $0xe8] sm:$0xff] %v210
                %v212 = vld [vmem:[%s150 + $0xf0] sm:$0xff]
                %213 = vst [vmem:[%s151 + $0xf0] sm:$0xff] %v212
                %v214 = vld [vmem:[%s150 + $0xf8] sm:$0xff]
                %215 = vst [vmem:[%s151 + $0xf8] sm:$0xff] %v214
                %v216 = vld [vmem:[%s150 + $0x100] sm:$0xff]
                %217 = vst [vmem:[%s151 + $0x100] sm:$0xff] %v216
                %v218 = vld [vmem:[%s150 + $0x108] sm:$0xff]
                %219 = vst [vmem:[%s151 + $0x108] sm:$0xff] %v218
                %v220 = vld [vmem:[%s150 + $0x110] sm:$0xff]
                %221 = vst [vmem:[%s151 + $0x110] sm:$0xff] %v220
                %v222 = vld [vmem:[%s150 + $0x118] sm:$0xff]
                %223 = vst [vmem:[%s151 + $0x118] sm:$0xff] %v222
                %v224 = vld [vmem:[%s150 + $0x120] sm:$0xff]
                %225 = vst [vmem:[%s151 + $0x120] sm:$0xff] %v224
                %v226 = vld [vmem:[%s150 + $0x128] sm:$0xff]
                %227 = vst [vmem:[%s151 + $0x128] sm:$0xff] %v226
                %v228 = vld [vmem:[%s150 + $0x130] sm:$0xff]
                %229 = vst [vmem:[%s151 + $0x130] sm:$0xff] %v228
                %v230 = vld [vmem:[%s150 + $0x138] sm:$0xff]
                %231 = vst [vmem:[%s151 + $0x138] sm:$0xff] %v230
                %v232 = vld [vmem:[%s150 + $0x140] sm:$0xff]
                %233 = vst [vmem:[%s151 + $0x140] sm:$0xff] %v232
                %v234 = vld [vmem:[%s150 + $0x148] sm:$0xff]
                %235 = vst [vmem:[%s151 + $0x148] sm:$0xff] %v234
                %v236 = vld [vmem:[%s150 + $0x150] sm:$0xff]
                %237 = vst [vmem:[%s151 + $0x150] sm:$0xff] %v236
                %v238 = vld [vmem:[%s150 + $0x158] sm:$0xff]
                %239 = vst [vmem:[%s151 + $0x158] sm:$0xff] %v238
                %v240 = vld [vmem:[%s150 + $0x160] sm:$0xff]
                %241 = vst [vmem:[%s151 + $0x160] sm:$0xff] %v240
                %v242 = vld [vmem:[%s150 + $0x168] sm:$0xff]
                %243 = vst [vmem:[%s151 + $0x168] sm:$0xff] %v242
                %v244 = vld [vmem:[%s150 + $0x170] sm:$0xff]
                %245 = vst [vmem:[%s151 + $0x170] sm:$0xff] %v244
                %v246 = vld [vmem:[%s150 + $0x178] sm:$0xff]
                %247 = vst [vmem:[%s151 + $0x178] sm:$0xff] %v246
                %v248 = vld [vmem:[%s150 + $0x180] sm:$0xff]
                %249 = vst [vmem:[%s151 + $0x180] sm:$0xff] %v248
                %v250 = vld [vmem:[%s150 + $0x188] sm:$0xff]
                %251 = vst [vmem:[%s151 + $0x188] sm:$0xff] %v250
                %v252 = vld [vmem:[%s150 + $0x190] sm:$0xff]
                %253 = vst [vmem:[%s151 + $0x190] sm:$0xff] %v252
                %v254 = vld [vmem:[%s150 + $0x198] sm:$0xff]
                %255 = vst [vmem:[%s151 + $0x198] sm:$0xff] %v254
                %v256 = vld [vmem:[%s150 + $0x1a0] sm:$0xff]
                %257 = vst [vmem:[%s151 + $0x1a0] sm:$0xff] %v256
                %v258 = vld [vmem:[%s150 + $0x1a8] sm:$0xff]
                %259 = vst [vmem:[%s151 + $0x1a8] sm:$0xff] %v258
                %v260 = vld [vmem:[%s150 + $0x1b0] sm:$0xff]
                %261 = vst [vmem:[%s151 + $0x1b0] sm:$0xff] %v260
                %v262 = vld [vmem:[%s150 + $0x1b8] sm:$0xff]
                %263 = vst [vmem:[%s151 + $0x1b8] sm:$0xff] %v262
                %v264 = vld [vmem:[%s150 + $0x1c0] sm:$0xff]
                %265 = vst [vmem:[%s151 + $0x1c0] sm:$0xff] %v264
                %v266 = vld [vmem:[%s150 + $0x1c8] sm:$0xff]
                %267 = vst [vmem:[%s151 + $0x1c8] sm:$0xff] %v266
                %v268 = vld [vmem:[%s150 + $0x1d0] sm:$0xff]
                %269 = vst [vmem:[%s151 + $0x1d0] sm:$0xff] %v268
                %v270 = vld [vmem:[%s150 + $0x1d8] sm:$0xff]
                %271 = vst [vmem:[%s151 + $0x1d8] sm:$0xff] %v270
                %v272 = vld [vmem:[%s150 + $0x1e0] sm:$0xff]
                %273 = vst [vmem:[%s151 + $0x1e0] sm:$0xff] %v272
                %v274 = vld [vmem:[%s150 + $0x1e8] sm:$0xff]
                %275 = vst [vmem:[%s151 + $0x1e8] sm:$0xff] %v274
                %v276 = vld [vmem:[%s150 + $0x1f0] sm:$0xff]
                %277 = vst [vmem:[%s151 + $0x1f0] sm:$0xff] %v276
                %v278 = vld [vmem:[%s150 + $0x1f8] sm:$0xff]
                %279 = vst [vmem:[%s151 + $0x1f8] sm:$0xff] %v278
                %v280 = vld [vmem:[%s150 + $0x200] sm:$0xff]
                %281 = vst [vmem:[%s151 + $0x200] sm:$0xff] %v280
                %v282 = vld [vmem:[%s150 + $0x208] sm:$0xff]
                %283 = vst [vmem:[%s151 + $0x208] sm:$0xff] %v282
                %v284 = vld [vmem:[%s150 + $0x210] sm:$0xff]
                %285 = vst [vmem:[%s151 + $0x210] sm:$0xff] %v284
                %v286 = vld [vmem:[%s150 + $0x218] sm:$0xff]
                %287 = vst [vmem:[%s151 + $0x218] sm:$0xff] %v286
                %v288 = vld [vmem:[%s150 + $0x220] sm:$0xff]
                %289 = vst [vmem:[%s151 + $0x220] sm:$0xff] %v288
                %v290 = vld [vmem:[%s150 + $0x228] sm:$0xff]
                %291 = vst [vmem:[%s151 + $0x228] sm:$0xff] %v290
                %v292 = vld [vmem:[%s150 + $0x230] sm:$0xff]
                %293 = vst [vmem:[%s151 + $0x230] sm:$0xff] %v292
                %v294 = vld [vmem:[%s150 + $0x238] sm:$0xff]
                %295 = vst [vmem:[%s151 + $0x238] sm:$0xff] %v294
                %v296 = vld [vmem:[%s150 + $0x240] sm:$0xff]
                %297 = vst [vmem:[%s151 + $0x240] sm:$0xff] %v296
                %v298 = vld [vmem:[%s150 + $0x248] sm:$0xff]
                %299 = vst [vmem:[%s151 + $0x248] sm:$0xff] %v298
                %v300 = vld [vmem:[%s150 + $0x250] sm:$0xff]
                %301 = vst [vmem:[%s151 + $0x250] sm:$0xff] %v300
                %v302 = vld [vmem:[%s150 + $0x258] sm:$0xff]
                %303 = vst [vmem:[%s151 + $0x258] sm:$0xff] %v302
                %v304 = vld [vmem:[%s150 + $0x260] sm:$0xff]
                %305 = vst [vmem:[%s151 + $0x260] sm:$0xff] %v304
                %v306 = vld [vmem:[%s150 + $0x268] sm:$0xff]
                %307 = vst [vmem:[%s151 + $0x268] sm:$0xff] %v306
                %v308 = vld [vmem:[%s150 + $0x270] sm:$0xff]
                %309 = vst [vmem:[%s151 + $0x270] sm:$0xff] %v308
                %v310 = vld [vmem:[%s150 + $0x278] sm:$0xff]
                %311 = vst [vmem:[%s151 + $0x278] sm:$0xff] %v310
                %v312 = vld [vmem:[%s150 + $0x280] sm:$0xff]
                %313 = vst [vmem:[%s151 + $0x280] sm:$0xff] %v312
                %v314 = vld [vmem:[%s150 + $0x288] sm:$0xff]
                %315 = vst [vmem:[%s151 + $0x288] sm:$0xff] %v314
                %v316 = vld [vmem:[%s150 + $0x290] sm:$0xff]
                %317 = vst [vmem:[%s151 + $0x290] sm:$0xff] %v316
                %v318 = vld [vmem:[%s150 + $0x298] sm:$0xff]
                %319 = vst [vmem:[%s151 + $0x298] sm:$0xff] %v318
                %v320 = vld [vmem:[%s150 + $0x2a0] sm:$0xff]
                %321 = vst [vmem:[%s151 + $0x2a0] sm:$0xff] %v320
                %v322 = vld [vmem:[%s150 + $0x2a8] sm:$0xff]
                %323 = vst [vmem:[%s151 + $0x2a8] sm:$0xff] %v322
                %v324 = vld [vmem:[%s150 + $0x2b0] sm:$0xff]
                %325 = vst [vmem:[%s151 + $0x2b0] sm:$0xff] %v324
                %v326 = vld [vmem:[%s150 + $0x2b8] sm:$0xff]
                %327 = vst [vmem:[%s151 + $0x2b8] sm:$0xff] %v326
                %v328 = vld [vmem:[%s150 + $0x2c0] sm:$0xff]
                %329 = vst [vmem:[%s151 + $0x2c0] sm:$0xff] %v328
                %v330 = vld [vmem:[%s150 + $0x2c8] sm:$0xff]
                %331 = vst [vmem:[%s151 + $0x2c8] sm:$0xff] %v330
                %v332 = vld [vmem:[%s150 + $0x2d0] sm:$0xff]
                %333 = vst [vmem:[%s151 + $0x2d0] sm:$0xff] %v332
                %v334 = vld [vmem:[%s150 + $0x2d8] sm:$0xff]
                %335 = vst [vmem:[%s151 + $0x2d8] sm:$0xff] %v334
                %v336 = vld [vmem:[%s150 + $0x2e0] sm:$0xff]
                %337 = vst [vmem:[%s151 + $0x2e0] sm:$0xff] %v336
                %v338 = vld [vmem:[%s150 + $0x2e8] sm:$0xff]
                %339 = vst [vmem:[%s151 + $0x2e8] sm:$0xff] %v338
                %v340 = vld [vmem:[%s150 + $0x2f0] sm:$0xff]
                %341 = vst [vmem:[%s151 + $0x2f0] sm:$0xff] %v340
                %v342 = vld [vmem:[%s150 + $0x2f8] sm:$0xff]
                %343 = vst [vmem:[%s151 + $0x2f8] sm:$0xff] %v342
                %v344 = vld [vmem:[%s150 + $0x300] sm:$0xff]
                %345 = vst [vmem:[%s151 + $0x300] sm:$0xff] %v344
                %v346 = vld [vmem:[%s150 + $0x308] sm:$0xff]
                %347 = vst [vmem:[%s151 + $0x308] sm:$0xff] %v346
                %v348 = vld [vmem:[%s150 + $0x310] sm:$0xff]
                %349 = vst [vmem:[%s151 + $0x310] sm:$0xff] %v348
                %v350 = vld [vmem:[%s150 + $0x318] sm:$0xff]
                %351 = vst [vmem:[%s151 + $0x318] sm:$0xff] %v350
                %v352 = vld [vmem:[%s150 + $0x320] sm:$0xff]
                %353 = vst [vmem:[%s151 + $0x320] sm:$0xff] %v352
                %v354 = vld [vmem:[%s150 + $0x328] sm:$0xff]
                %355 = vst [vmem:[%s151 + $0x328] sm:$0xff] %v354
                %v356 = vld [vmem:[%s150 + $0x330] sm:$0xff]
                %357 = vst [vmem:[%s151 + $0x330] sm:$0xff] %v356
                %v358 = vld [vmem:[%s150 + $0x338] sm:$0xff]
                %359 = vst [vmem:[%s151 + $0x338] sm:$0xff] %v358
                %v360 = vld [vmem:[%s150 + $0x340] sm:$0xff]
                %361 = vst [vmem:[%s151 + $0x340] sm:$0xff] %v360
                %v362 = vld [vmem:[%s150 + $0x348] sm:$0xff]
                %363 = vst [vmem:[%s151 + $0x348] sm:$0xff] %v362
                %v364 = vld [vmem:[%s150 + $0x350] sm:$0xff]
                %365 = vst [vmem:[%s151 + $0x350] sm:$0xff] %v364
                %v366 = vld [vmem:[%s150 + $0x358] sm:$0xff]
                %367 = vst [vmem:[%s151 + $0x358] sm:$0xff] %v366
                %v368 = vld [vmem:[%s150 + $0x360] sm:$0xff]
                %369 = vst [vmem:[%s151 + $0x360] sm:$0xff] %v368
                %v370 = vld [vmem:[%s150 + $0x368] sm:$0xff]
                %371 = vst [vmem:[%s151 + $0x368] sm:$0xff] %v370
                %v372 = vld [vmem:[%s150 + $0x370] sm:$0xff]
                %373 = vst [vmem:[%s151 + $0x370] sm:$0xff] %v372
                %v374 = vld [vmem:[%s150 + $0x378] sm:$0xff]
                %375 = vst [vmem:[%s151 + $0x378] sm:$0xff] %v374
                %v376 = vld [vmem:[%s150 + $0x380] sm:$0xff]
                %377 = vst [vmem:[%s151 + $0x380] sm:$0xff] %v376
                %v378 = vld [vmem:[%s150 + $0x388] sm:$0xff]
                %379 = vst [vmem:[%s151 + $0x388] sm:$0xff] %v378
                %v380 = vld [vmem:[%s150 + $0x390] sm:$0xff]
                %381 = vst [vmem:[%s151 + $0x390] sm:$0xff] %v380
                %v382 = vld [vmem:[%s150 + $0x398] sm:$0xff]
                %383 = vst [vmem:[%s151 + $0x398] sm:$0xff] %v382
                %v384 = vld [vmem:[%s150 + $0x3a0] sm:$0xff]
                %385 = vst [vmem:[%s151 + $0x3a0] sm:$0xff] %v384
                %v386 = vld [vmem:[%s150 + $0x3a8] sm:$0xff]
                %387 = vst [vmem:[%s151 + $0x3a8] sm:$0xff] %v386
                %v388 = vld [vmem:[%s150 + $0x3b0] sm:$0xff]
                %389 = vst [vmem:[%s151 + $0x3b0] sm:$0xff] %v388
                %v390 = vld [vmem:[%s150 + $0x3b8] sm:$0xff]
                %391 = vst [vmem:[%s151 + $0x3b8] sm:$0xff] %v390
                %v392 = vld [vmem:[%s150 + $0xf00] sm:$0xff]
                %393 = vst [vmem:[%s151 + $0x3c0] sm:$0xff] %v392
                %v394 = vld [vmem:[%s150 + $0xf08] sm:$0xff]
                %395 = vst [vmem:[%s151 + $0x3c8] sm:$0xff] %v394
                %v396 = vld [vmem:[%s150 + $0xf10] sm:$0xff]
                %397 = vst [vmem:[%s151 + $0x3d0] sm:$0xff] %v396
                %v398 = vld [vmem:[%s150 + $0xf18] sm:$0xff]
                %399 = vst [vmem:[%s151 + $0x3d8] sm:$0xff] %v398
                %v400 = vld [vmem:[%s150 + $0xf20] sm:$0xff]
                %401 = vst [vmem:[%s151 + $0x3e0] sm:$0xff] %v400
                %v402 = vld [vmem:[%s150 + $0xf28] sm:$0xff]
                %403 = vst [vmem:[%s151 + $0x3e8] sm:$0xff] %v402
                %v404 = vld [vmem:[%s150 + $0xf30] sm:$0xff]
                %405 = vst [vmem:[%s151 + $0x3f0] sm:$0xff] %v404
                %v406 = vld [vmem:[%s150 + $0xf38] sm:$0xff]
                %407 = vst [vmem:[%s151 + $0x3f8] sm:$0xff] %v406
                %v408 = vld [vmem:[%s150 + $0xf40] sm:$0xff]
                %409 = vst [vmem:[%s151 + $0x400] sm:$0xff] %v408
                %v410 = vld [vmem:[%s150 + $0xf48] sm:$0xff]
                %411 = vst [vmem:[%s151 + $0x408] sm:$0xff] %v410
                %v412 = vld [vmem:[%s150 + $0xf50] sm:$0xff]
                %413 = vst [vmem:[%s151 + $0x410] sm:$0xff] %v412
                %v414 = vld [vmem:[%s150 + $0xf58] sm:$0xff]
                %415 = vst [vmem:[%s151 + $0x418] sm:$0xff] %v414
                %v416 = vld [vmem:[%s150 + $0xf60] sm:$0xff]
                %417 = vst [vmem:[%s151 + $0x420] sm:$0xff] %v416
                %v418 = vld [vmem:[%s150 + $0xf68] sm:$0xff]
                %419 = vst [vmem:[%s151 + $0x428] sm:$0xff] %v418
                %v420 = vld [vmem:[%s150 + $0xf70] sm:$0xff]
                %421 = vst [vmem:[%s151 + $0x430] sm:$0xff] %v420
                %v422 = vld [vmem:[%s150 + $0xf78] sm:$0xff]
                %423 = vst [vmem:[%s151 + $0x438] sm:$0xff] %v422
                %v424 = vld [vmem:[%s150 + $0xf80] sm:$0xff]
                %425 = vst [vmem:[%s151 + $0x440] sm:$0xff] %v424
                %v426 = vld [vmem:[%s150 + $0xf88] sm:$0xff]
                %427 = vst [vmem:[%s151 + $0x448] sm:$0xff] %v426
                %v428 = vld [vmem:[%s150 + $0xf90] sm:$0xff]
                %429 = vst [vmem:[%s151 + $0x450] sm:$0xff] %v428
                %v430 = vld [vmem:[%s150 + $0xf98] sm:$0xff]
                %431 = vst [vmem:[%s151 + $0x458] sm:$0xff] %v430
                %v432 = vld [vmem:[%s150 + $0xfa0] sm:$0xff]
                %433 = vst [vmem:[%s151 + $0x460] sm:$0xff] %v432
                %v434 = vld [vmem:[%s150 + $0xfa8] sm:$0xff]
                %435 = vst [vmem:[%s151 + $0x468] sm:$0xff] %v434
                %v436 = vld [vmem:[%s150 + $0xfb0] sm:$0xff]
                %437 = vst [vmem:[%s151 + $0x470] sm:$0xff] %v436
                %v438 = vld [vmem:[%s150 + $0xfb8] sm:$0xff]
                %439 = vst [vmem:[%s151 + $0x478] sm:$0xff] %v438
                %v440 = vld [vmem:[%s150 + $0xfc0] sm:$0xff]
                %441 = vst [vmem:[%s151 + $0x480] sm:$0xff] %v440
                %v442 = vld [vmem:[%s150 + $0xfc8] sm:$0xff]
                %443 = vst [vmem:[%s151 + $0x488] sm:$0xff] %v442
                %v444 = vld [vmem:[%s150 + $0xfd0] sm:$0xff]
                %445 = vst [vmem:[%s151 + $0x490] sm:$0xff] %v444
                %v446 = vld [vmem:[%s150 + $0xfd8] sm:$0xff]
                %447 = vst [vmem:[%s151 + $0x498] sm:$0xff] %v446
                %v448 = vld [vmem:[%s150 + $0xfe0] sm:$0xff]
                %449 = vst [vmem:[%s151 + $0x4a0] sm:$0xff] %v448
                %v450 = vld [vmem:[%s150 + $0xfe8] sm:$0xff]
                %451 = vst [vmem:[%s151 + $0x4a8] sm:$0xff] %v450
                %v452 = vld [vmem:[%s150 + $0xff0] sm:$0xff]
                %453 = vst [vmem:[%s151 + $0x4b0] sm:$0xff] %v452
                %v454 = vld [vmem:[%s150 + $0xff8] sm:$0xff]
                %455 = vst [vmem:[%s151 + $0x4b8] sm:$0xff] %v454
                %v456 = vld [vmem:[%s150 + $0x1000] sm:$0xff]
                %457 = vst [vmem:[%s151 + $0x4c0] sm:$0xff] %v456
                %v458 = vld [vmem:[%s150 + $0x1008] sm:$0xff]
                %459 = vst [vmem:[%s151 + $0x4c8] sm:$0xff] %v458
                %v460 = vld [vmem:[%s150 + $0x1010] sm:$0xff]
                %461 = vst [vmem:[%s151 + $0x4d0] sm:$0xff] %v460
                %v462 = vld [vmem:[%s150 + $0x1018] sm:$0xff]
                %463 = vst [vmem:[%s151 + $0x4d8] sm:$0xff] %v462
                %v464 = vld [vmem:[%s150 + $0x1020] sm:$0xff]
                %465 = vst [vmem:[%s151 + $0x4e0] sm:$0xff] %v464
                %v466 = vld [vmem:[%s150 + $0x1028] sm:$0xff]
                %467 = vst [vmem:[%s151 + $0x4e8] sm:$0xff] %v466
                %v468 = vld [vmem:[%s150 + $0x1030] sm:$0xff]
                %469 = vst [vmem:[%s151 + $0x4f0] sm:$0xff] %v468
                %v470 = vld [vmem:[%s150 + $0x1038] sm:$0xff]
                %471 = vst [vmem:[%s151 + $0x4f8] sm:$0xff] %v470
                %v472 = vld [vmem:[%s150 + $0x1040] sm:$0xff]
                %473 = vst [vmem:[%s151 + $0x500] sm:$0xff] %v472
                %v474 = vld [vmem:[%s150 + $0x1048] sm:$0xff]
                %475 = vst [vmem:[%s151 + $0x508] sm:$0xff] %v474
                %v476 = vld [vmem:[%s150 + $0x1050] sm:$0xff]
                %477 = vst [vmem:[%s151 + $0x510] sm:$0xff] %v476
                %v478 = vld [vmem:[%s150 + $0x1058] sm:$0xff]
                %479 = vst [vmem:[%s151 + $0x518] sm:$0xff] %v478
                %v480 = vld [vmem:[%s150 + $0x1060] sm:$0xff]
                %481 = vst [vmem:[%s151 + $0x520] sm:$0xff] %v480
                %v482 = vld [vmem:[%s150 + $0x1068] sm:$0xff]
                %483 = vst [vmem:[%s151 + $0x528] sm:$0xff] %v482
                %v484 = vld [vmem:[%s150 + $0x1070] sm:$0xff]
                %485 = vst [vmem:[%s151 + $0x530] sm:$0xff] %v484
                %v486 = vld [vmem:[%s150 + $0x1078] sm:$0xff]
                %487 = vst [vmem:[%s151 + $0x538] sm:$0xff] %v486
                %v488 = vld [vmem:[%s150 + $0x1080] sm:$0xff]
                %489 = vst [vmem:[%s151 + $0x540] sm:$0xff] %v488
                %v490 = vld [vmem:[%s150 + $0x1088] sm:$0xff]
                %491 = vst [vmem:[%s151 + $0x548] sm:$0xff] %v490
                %v492 = vld [vmem:[%s150 + $0x1090] sm:$0xff]
                %493 = vst [vmem:[%s151 + $0x550] sm:$0xff] %v492
                %v494 = vld [vmem:[%s150 + $0x1098] sm:$0xff]
                %495 = vst [vmem:[%s151 + $0x558] sm:$0xff] %v494
                %v496 = vld [vmem:[%s150 + $0x10a0] sm:$0xff]
                %497 = vst [vmem:[%s151 + $0x560] sm:$0xff] %v496
                %v498 = vld [vmem:[%s150 + $0x10a8] sm:$0xff]
                %499 = vst [vmem:[%s151 + $0x568] sm:$0xff] %v498
                %v500 = vld [vmem:[%s150 + $0x10b0] sm:$0xff]
                %501 = vst [vmem:[%s151 + $0x570] sm:$0xff] %v500
                %v502 = vld [vmem:[%s150 + $0x10b8] sm:$0xff]
                %503 = vst [vmem:[%s151 + $0x578] sm:$0xff] %v502
                %v504 = vld [vmem:[%s150 + $0x10c0] sm:$0xff]
                %505 = vst [vmem:[%s151 + $0x580] sm:$0xff] %v504
                %v506 = vld [vmem:[%s150 + $0x10c8] sm:$0xff]
                %507 = vst [vmem:[%s151 + $0x588] sm:$0xff] %v506
                %v508 = vld [vmem:[%s150 + $0x10d0] sm:$0xff]
                %509 = vst [vmem:[%s151 + $0x590] sm:$0xff] %v508
                %v510 = vld [vmem:[%s150 + $0x10d8] sm:$0xff]
                %511 = vst [vmem:[%s151 + $0x598] sm:$0xff] %v510
                %v512 = vld [vmem:[%s150 + $0x10e0] sm:$0xff]
                %513 = vst [vmem:[%s151 + $0x5a0] sm:$0xff] %v512
                %v514 = vld [vmem:[%s150 + $0x10e8] sm:$0xff]
                %515 = vst [vmem:[%s151 + $0x5a8] sm:$0xff] %v514
                %v516 = vld [vmem:[%s150 + $0x10f0] sm:$0xff]
                %517 = vst [vmem:[%s151 + $0x5b0] sm:$0xff] %v516
                %v518 = vld [vmem:[%s150 + $0x10f8] sm:$0xff]
                %519 = vst [vmem:[%s151 + $0x5b8] sm:$0xff] %v518
                %v520 = vld [vmem:[%s150 + $0x1100] sm:$0xff]
                %521 = vst [vmem:[%s151 + $0x5c0] sm:$0xff] %v520
                %v522 = vld [vmem:[%s150 + $0x1108] sm:$0xff]
                %523 = vst [vmem:[%s151 + $0x5c8] sm:$0xff] %v522
                %v524 = vld [vmem:[%s150 + $0x1110] sm:$0xff]
                %525 = vst [vmem:[%s151 + $0x5d0] sm:$0xff] %v524
                %v526 = vld [vmem:[%s150 + $0x1118] sm:$0xff]
                %527 = vst [vmem:[%s151 + $0x5d8] sm:$0xff] %v526
                %v528 = vld [vmem:[%s150 + $0x1120] sm:$0xff]
                %529 = vst [vmem:[%s151 + $0x5e0] sm:$0xff] %v528
                %v530 = vld [vmem:[%s150 + $0x1128] sm:$0xff]
                %531 = vst [vmem:[%s151 + $0x5e8] sm:$0xff] %v530
                %v532 = vld [vmem:[%s150 + $0x1130] sm:$0xff]
                %533 = vst [vmem:[%s151 + $0x5f0] sm:$0xff] %v532
                %v534 = vld [vmem:[%s150 + $0x1138] sm:$0xff]
                %535 = vst [vmem:[%s151 + $0x5f8] sm:$0xff] %v534
                %v536 = vld [vmem:[%s150 + $0x1140] sm:$0xff]
                %537 = vst [vmem:[%s151 + $0x600] sm:$0xff] %v536
                %v538 = vld [vmem:[%s150 + $0x1148] sm:$0xff]
                %539 = vst [vmem:[%s151 + $0x608] sm:$0xff] %v538
                %v540 = vld [vmem:[%s150 + $0x1150] sm:$0xff]
                %541 = vst [vmem:[%s151 + $0x610] sm:$0xff] %v540
                %v542 = vld [vmem:[%s150 + $0x1158] sm:$0xff]
                %543 = vst [vmem:[%s151 + $0x618] sm:$0xff] %v542
                %v544 = vld [vmem:[%s150 + $0x1160] sm:$0xff]
                %545 = vst [vmem:[%s151 + $0x620] sm:$0xff] %v544
                %v546 = vld [vmem:[%s150 + $0x1168] sm:$0xff]
                %547 = vst [vmem:[%s151 + $0x628] sm:$0xff] %v546
                %v548 = vld [vmem:[%s150 + $0x1170] sm:$0xff]
                %549 = vst [vmem:[%s151 + $0x630] sm:$0xff] %v548
                %v550 = vld [vmem:[%s150 + $0x1178] sm:$0xff]
                %551 = vst [vmem:[%s151 + $0x638] sm:$0xff] %v550
                %v552 = vld [vmem:[%s150 + $0x1180] sm:$0xff]
                %553 = vst [vmem:[%s151 + $0x640] sm:$0xff] %v552
                %v554 = vld [vmem:[%s150 + $0x1188] sm:$0xff]
                %555 = vst [vmem:[%s151 + $0x648] sm:$0xff] %v554
                %v556 = vld [vmem:[%s150 + $0x1190] sm:$0xff]
                %557 = vst [vmem:[%s151 + $0x650] sm:$0xff] %v556
                %v558 = vld [vmem:[%s150 + $0x1198] sm:$0xff]
                %559 = vst [vmem:[%s151 + $0x658] sm:$0xff] %v558
                %v560 = vld [vmem:[%s150 + $0x11a0] sm:$0xff]
                %561 = vst [vmem:[%s151 + $0x660] sm:$0xff] %v560
                %v562 = vld [vmem:[%s150 + $0x11a8] sm:$0xff]
                %563 = vst [vmem:[%s151 + $0x668] sm:$0xff] %v562
                %v564 = vld [vmem:[%s150 + $0x11b0] sm:$0xff]
                %565 = vst [vmem:[%s151 + $0x670] sm:$0xff] %v564
                %v566 = vld [vmem:[%s150 + $0x11b8] sm:$0xff]
                %567 = vst [vmem:[%s151 + $0x678] sm:$0xff] %v566
                %v568 = vld [vmem:[%s150 + $0x11c0] sm:$0xff]
                %569 = vst [vmem:[%s151 + $0x680] sm:$0xff] %v568
                %v570 = vld [vmem:[%s150 + $0x11c8] sm:$0xff]
                %571 = vst [vmem:[%s151 + $0x688] sm:$0xff] %v570
                %v572 = vld [vmem:[%s150 + $0x11d0] sm:$0xff]
                %573 = vst [vmem:[%s151 + $0x690] sm:$0xff] %v572
                %v574 = vld [vmem:[%s150 + $0x11d8] sm:$0xff]
                %575 = vst [vmem:[%s151 + $0x698] sm:$0xff] %v574
                %v576 = vld [vmem:[%s150 + $0x11e0] sm:$0xff]
                %577 = vst [vmem:[%s151 + $0x6a0] sm:$0xff] %v576
                %v578 = vld [vmem:[%s150 + $0x11e8] sm:$0xff]
                %579 = vst [vmem:[%s151 + $0x6a8] sm:$0xff] %v578
                %v580 = vld [vmem:[%s150 + $0x11f0] sm:$0xff]
                %581 = vst [vmem:[%s151 + $0x6b0] sm:$0xff] %v580
                %v582 = vld [vmem:[%s150 + $0x11f8] sm:$0xff]
                %583 = vst [vmem:[%s151 + $0x6b8] sm:$0xff] %v582
                %v584 = vld [vmem:[%s150 + $0x1200] sm:$0xff]
                %585 = vst [vmem:[%s151 + $0x6c0] sm:$0xff] %v584
                %v586 = vld [vmem:[%s150 + $0x1208] sm:$0xff]
                %587 = vst [vmem:[%s151 + $0x6c8] sm:$0xff] %v586
                %v588 = vld [vmem:[%s150 + $0x1210] sm:$0xff]
                %589 = vst [vmem:[%s151 + $0x6d0] sm:$0xff] %v588
                %v590 = vld [vmem:[%s150 + $0x1218] sm:$0xff]
                %591 = vst [vmem:[%s151 + $0x6d8] sm:$0xff] %v590
                %v592 = vld [vmem:[%s150 + $0x1220] sm:$0xff]
                %593 = vst [vmem:[%s151 + $0x6e0] sm:$0xff] %v592
                %v594 = vld [vmem:[%s150 + $0x1228] sm:$0xff]
                %595 = vst [vmem:[%s151 + $0x6e8] sm:$0xff] %v594
                %v596 = vld [vmem:[%s150 + $0x1230] sm:$0xff]
                %597 = vst [vmem:[%s151 + $0x6f0] sm:$0xff] %v596
                %v598 = vld [vmem:[%s150 + $0x1238] sm:$0xff]
                %599 = vst [vmem:[%s151 + $0x6f8] sm:$0xff] %v598
                %v600 = vld [vmem:[%s150 + $0x1240] sm:$0xff]
                %601 = vst [vmem:[%s151 + $0x700] sm:$0xff] %v600
                %v602 = vld [vmem:[%s150 + $0x1248] sm:$0xff]
                %603 = vst [vmem:[%s151 + $0x708] sm:$0xff] %v602
                %v604 = vld [vmem:[%s150 + $0x1250] sm:$0xff]
                %605 = vst [vmem:[%s151 + $0x710] sm:$0xff] %v604
                %v606 = vld [vmem:[%s150 + $0x1258] sm:$0xff]
                %607 = vst [vmem:[%s151 + $0x718] sm:$0xff] %v606
                %v608 = vld [vmem:[%s150 + $0x1260] sm:$0xff]
                %609 = vst [vmem:[%s151 + $0x720] sm:$0xff] %v608
                %v610 = vld [vmem:[%s150 + $0x1268] sm:$0xff]
                %611 = vst [vmem:[%s151 + $0x728] sm:$0xff] %v610
                %v612 = vld [vmem:[%s150 + $0x1270] sm:$0xff]
                %613 = vst [vmem:[%s151 + $0x730] sm:$0xff] %v612
                %v614 = vld [vmem:[%s150 + $0x1278] sm:$0xff]
                %615 = vst [vmem:[%s151 + $0x738] sm:$0xff] %v614
                %v616 = vld [vmem:[%s150 + $0x1280] sm:$0xff]
                %617 = vst [vmem:[%s151 + $0x740] sm:$0xff] %v616
                %v618 = vld [vmem:[%s150 + $0x1288] sm:$0xff]
                %619 = vst [vmem:[%s151 + $0x748] sm:$0xff] %v618
                %v620 = vld [vmem:[%s150 + $0x1290] sm:$0xff]
                %621 = vst [vmem:[%s151 + $0x750] sm:$0xff] %v620
                %v622 = vld [vmem:[%s150 + $0x1298] sm:$0xff]
                %623 = vst [vmem:[%s151 + $0x758] sm:$0xff] %v622
                %v624 = vld [vmem:[%s150 + $0x12a0] sm:$0xff]
                %625 = vst [vmem:[%s151 + $0x760] sm:$0xff] %v624
                %v626 = vld [vmem:[%s150 + $0x12a8] sm:$0xff]
                %627 = vst [vmem:[%s151 + $0x768] sm:$0xff] %v626
                %v628 = vld [vmem:[%s150 + $0x12b0] sm:$0xff]
                %629 = vst [vmem:[%s151 + $0x770] sm:$0xff] %v628
                %v630 = vld [vmem:[%s150 + $0x12b8] sm:$0xff]
                %631 = vst [vmem:[%s151 + $0x778] sm:$0xff] %v630
              $region37: #{backend_forward.1} parent=31 // loop_footer
                %s149 = sadd.s32 1, %s145
              $region38: #{backend_forward.1} parent=31 // loop_footer_branch
                %144 = sbr.rel target = $region34
              $region39: #{backend_forward.1} parent=31 // loop_exit
                _
            $region32: #{backend_forward.1} parent=23 // pred_fallthru
              _
          $region24: #{backend_forward.1} parent=19 // pred_fallthru
            _
          %1124 = vnop
        $region20: #{backend_forward.1} parent=15 // pred_fallthru
          _
        // Predicated region
        $region55: #{backend_forward.1} parent=15 // pred_check
          %p1125 = pneg %p74
        $region56: #{backend_forward.1} parent=15 // pred_check_branch
          %1127 = sbr.rel (%p1125) target = $region58
        $region57: #{backend_forward.1} parent=15 // pred_region
          %s1128 = sand.u32 %s64, 1
          %s1129 = sand.u32 %s64, 1
          %s1130 = smul.addr %s1129, 1920
          %s1131 = scalar_lea.vmem [#allocation4], %s1130
          %s1132 = smul.u32 %s15, 2
          %s1133 = sadd.s32 %s1132, %s16
          %s1134 = smul.u32 120, %s1133
          %s1135 = smul.addr %s1134, 8
          %s1136 = scalar_lea.vmem %s1, %s1135
          // Predicated region
          $region59: #{backend_forward.1} parent=57 // pred_check
            _
          $region60: #{backend_forward.1} parent=57 // pred_check_branch
            %1138 = sbr.rel (0) target = $region62
          $region61: #{backend_forward.1} parent=57 // pred_region
            // Predicated region
            $region63: #{backend_forward.1} parent=61 // pred_check
              _
            $region64: #{backend_forward.1} parent=61 // pred_check_branch
              %1140 = sbr.rel (0) target = $region66
            $region65: #{backend_forward.1} parent=61 // pred_region
              // Predicated region
              $region78: #{backend_forward.1} parent=65 // pred_check
                _
              $region79: #{backend_forward.1} parent=65 // pred_check_branch
                %1633 = sbr.rel (0) target = $region81
              $region80: #{backend_forward.1} parent=65 // pred_region
                loop: start=0, step=1, limit=1
                $region82: #{backend_forward.1} parent=80 // loop_pre_header
                  _
                $region83: #{backend_forward.1} parent=80 // loop_header
                  %s1635 = sphi 0, %s1639
                  %p1636 = scmp.ge.s32.totalorder %s1635, 1
                  %s1640 = sphi %s1136, %s1136
                  %s1641 = sphi %s1131, %s1131
                $region84: #{backend_forward.1} parent=80 // loop_header_branch
                  %1638 = sbr.rel (%p1636) target = $region88
                $region85: #{backend_forward.1} parent=80 // loop_body
                  %v1642 = vld [vmem:[%s1640] sm:$0xff]
                  %1643 = vst [vmem:[%s1641] sm:$0xff] %v1642
                  %v1644 = vld [vmem:[%s1640 + $0x8] sm:$0xff]
                  %1645 = vst [vmem:[%s1641 + $0x8] sm:$0xff] %v1644
                  %v1646 = vld [vmem:[%s1640 + $0x10] sm:$0xff]
                  %1647 = vst [vmem:[%s1641 + $0x10] sm:$0xff] %v1646
                  %v1648 = vld [vmem:[%s1640 + $0x18] sm:$0xff]
                  %1649 = vst [vmem:[%s1641 + $0x18] sm:$0xff] %v1648
                  %v1650 = vld [vmem:[%s1640 + $0x20] sm:$0xff]
                  %1651 = vst [vmem:[%s1641 + $0x20] sm:$0xff] %v1650
                  %v1652 = vld [vmem:[%s1640 + $0x28] sm:$0xff]
                  %1653 = vst [vmem:[%s1641 + $0x28] sm:$0xff] %v1652
                  %v1654 = vld [vmem:[%s1640 + $0x30] sm:$0xff]
                  %1655 = vst [vmem:[%s1641 + $0x30] sm:$0xff] %v1654
                  %v1656 = vld [vmem:[%s1640 + $0x38] sm:$0xff]
                  %1657 = vst [vmem:[%s1641 + $0x38] sm:$0xff] %v1656
                  %v1658 = vld [vmem:[%s1640 + $0x40] sm:$0xff]
                  %1659 = vst [vmem:[%s1641 + $0x40] sm:$0xff] %v1658
                  %v1660 = vld [vmem:[%s1640 + $0x48] sm:$0xff]
                  %1661 = vst [vmem:[%s1641 + $0x48] sm:$0xff] %v1660
                  %v1662 = vld [vmem:[%s1640 + $0x50] sm:$0xff]
                  %1663 = vst [vmem:[%s1641 + $0x50] sm:$0xff] %v1662
                  %v1664 = vld [vmem:[%s1640 + $0x58] sm:$0xff]
                  %1665 = vst [vmem:[%s1641 + $0x58] sm:$0xff] %v1664
                  %v1666 = vld [vmem:[%s1640 + $0x60] sm:$0xff]
                  %1667 = vst [vmem:[%s1641 + $0x60] sm:$0xff] %v1666
                  %v1668 = vld [vmem:[%s1640 + $0x68] sm:$0xff]
                  %1669 = vst [vmem:[%s1641 + $0x68] sm:$0xff] %v1668
                  %v1670 = vld [vmem:[%s1640 + $0x70] sm:$0xff]
                  %1671 = vst [vmem:[%s1641 + $0x70] sm:$0xff] %v1670
                  %v1672 = vld [vmem:[%s1640 + $0x78] sm:$0xff]
                  %1673 = vst [vmem:[%s1641 + $0x78] sm:$0xff] %v1672
                  %v1674 = vld [vmem:[%s1640 + $0x80] sm:$0xff]
                  %1675 = vst [vmem:[%s1641 + $0x80] sm:$0xff] %v1674
                  %v1676 = vld [vmem:[%s1640 + $0x88] sm:$0xff]
                  %1677 = vst [vmem:[%s1641 + $0x88] sm:$0xff] %v1676
                  %v1678 = vld [vmem:[%s1640 + $0x90] sm:$0xff]
                  %1679 = vst [vmem:[%s1641 + $0x90] sm:$0xff] %v1678
                  %v1680 = vld [vmem:[%s1640 + $0x98] sm:$0xff]
                  %1681 = vst [vmem:[%s1641 + $0x98] sm:$0xff] %v1680
                  %v1682 = vld [vmem:[%s1640 + $0xa0] sm:$0xff]
                  %1683 = vst [vmem:[%s1641 + $0xa0] sm:$0xff] %v1682
                  %v1684 = vld [vmem:[%s1640 + $0xa8] sm:$0xff]
                  %1685 = vst [vmem:[%s1641 + $0xa8] sm:$0xff] %v1684
                  %v1686 = vld [vmem:[%s1640 + $0xb0] sm:$0xff]
                  %1687 = vst [vmem:[%s1641 + $0xb0] sm:$0xff] %v1686
                  %v1688 = vld [vmem:[%s1640 + $0xb8] sm:$0xff]
                  %1689 = vst [vmem:[%s1641 + $0xb8] sm:$0xff] %v1688
                  %v1690 = vld [vmem:[%s1640 + $0xc0] sm:$0xff]
                  %1691 = vst [vmem:[%s1641 + $0xc0] sm:$0xff] %v1690
                  %v1692 = vld [vmem:[%s1640 + $0xc8] sm:$0xff]
                  %1693 = vst [vmem:[%s1641 + $0xc8] sm:$0xff] %v1692
                  %v1694 = vld [vmem:[%s1640 + $0xd0] sm:$0xff]
                  %1695 = vst [vmem:[%s1641 + $0xd0] sm:$0xff] %v1694
                  %v1696 = vld [vmem:[%s1640 + $0xd8] sm:$0xff]
                  %1697 = vst [vmem:[%s1641 + $0xd8] sm:$0xff] %v1696
                  %v1698 = vld [vmem:[%s1640 + $0xe0] sm:$0xff]
                  %1699 = vst [vmem:[%s1641 + $0xe0] sm:$0xff] %v1698
                  %v1700 = vld [vmem:[%s1640 + $0xe8] sm:$0xff]
                  %1701 = vst [vmem:[%s1641 + $0xe8] sm:$0xff] %v1700
                  %v1702 = vld [vmem:[%s1640 + $0xf0] sm:$0xff]
                  %1703 = vst [vmem:[%s1641 + $0xf0] sm:$0xff] %v1702
                  %v1704 = vld [vmem:[%s1640 + $0xf8] sm:$0xff]
                  %1705 = vst [vmem:[%s1641 + $0xf8] sm:$0xff] %v1704
                  %v1706 = vld [vmem:[%s1640 + $0x100] sm:$0xff]
                  %1707 = vst [vmem:[%s1641 + $0x100] sm:$0xff] %v1706
                  %v1708 = vld [vmem:[%s1640 + $0x108] sm:$0xff]
                  %1709 = vst [vmem:[%s1641 + $0x108] sm:$0xff] %v1708
                  %v1710 = vld [vmem:[%s1640 + $0x110] sm:$0xff]
                  %1711 = vst [vmem:[%s1641 + $0x110] sm:$0xff] %v1710
                  %v1712 = vld [vmem:[%s1640 + $0x118] sm:$0xff]
                  %1713 = vst [vmem:[%s1641 + $0x118] sm:$0xff] %v1712
                  %v1714 = vld [vmem:[%s1640 + $0x120] sm:$0xff]
                  %1715 = vst [vmem:[%s1641 + $0x120] sm:$0xff] %v1714
                  %v1716 = vld [vmem:[%s1640 + $0x128] sm:$0xff]
                  %1717 = vst [vmem:[%s1641 + $0x128] sm:$0xff] %v1716
                  %v1718 = vld [vmem:[%s1640 + $0x130] sm:$0xff]
                  %1719 = vst [vmem:[%s1641 + $0x130] sm:$0xff] %v1718
                  %v1720 = vld [vmem:[%s1640 + $0x138] sm:$0xff]
                  %1721 = vst [vmem:[%s1641 + $0x138] sm:$0xff] %v1720
                  %v1722 = vld [vmem:[%s1640 + $0x140] sm:$0xff]
                  %1723 = vst [vmem:[%s1641 + $0x140] sm:$0xff] %v1722
                  %v1724 = vld [vmem:[%s1640 + $0x148] sm:$0xff]
                  %1725 = vst [vmem:[%s1641 + $0x148] sm:$0xff] %v1724
                  %v1726 = vld [vmem:[%s1640 + $0x150] sm:$0xff]
                  %1727 = vst [vmem:[%s1641 + $0x150] sm:$0xff] %v1726
                  %v1728 = vld [vmem:[%s1640 + $0x158] sm:$0xff]
                  %1729 = vst [vmem:[%s1641 + $0x158] sm:$0xff] %v1728
                  %v1730 = vld [vmem:[%s1640 + $0x160] sm:$0xff]
                  %1731 = vst [vmem:[%s1641 + $0x160] sm:$0xff] %v1730
                  %v1732 = vld [vmem:[%s1640 + $0x168] sm:$0xff]
                  %1733 = vst [vmem:[%s1641 + $0x168] sm:$0xff] %v1732
                  %v1734 = vld [vmem:[%s1640 + $0x170] sm:$0xff]
                  %1735 = vst [vmem:[%s1641 + $0x170] sm:$0xff] %v1734
                  %v1736 = vld [vmem:[%s1640 + $0x178] sm:$0xff]
                  %1737 = vst [vmem:[%s1641 + $0x178] sm:$0xff] %v1736
                  %v1738 = vld [vmem:[%s1640 + $0x180] sm:$0xff]
                  %1739 = vst [vmem:[%s1641 + $0x180] sm:$0xff] %v1738
                  %v1740 = vld [vmem:[%s1640 + $0x188] sm:$0xff]
                  %1741 = vst [vmem:[%s1641 + $0x188] sm:$0xff] %v1740
                  %v1742 = vld [vmem:[%s1640 + $0x190] sm:$0xff]
                  %1743 = vst [vmem:[%s1641 + $0x190] sm:$0xff] %v1742
                  %v1744 = vld [vmem:[%s1640 + $0x198] sm:$0xff]
                  %1745 = vst [vmem:[%s1641 + $0x198] sm:$0xff] %v1744
                  %v1746 = vld [vmem:[%s1640 + $0x1a0] sm:$0xff]
                  %1747 = vst [vmem:[%s1641 + $0x1a0] sm:$0xff] %v1746
                  %v1748 = vld [vmem:[%s1640 + $0x1a8] sm:$0xff]
                  %1749 = vst [vmem:[%s1641 + $0x1a8] sm:$0xff] %v1748
                  %v1750 = vld [vmem:[%s1640 + $0x1b0] sm:$0xff]
                  %1751 = vst [vmem:[%s1641 + $0x1b0] sm:$0xff] %v1750
                  %v1752 = vld [vmem:[%s1640 + $0x1b8] sm:$0xff]
                  %1753 = vst [vmem:[%s1641 + $0x1b8] sm:$0xff] %v1752
                  %v1754 = vld [vmem:[%s1640 + $0x1c0] sm:$0xff]
                  %1755 = vst [vmem:[%s1641 + $0x1c0] sm:$0xff] %v1754
                  %v1756 = vld [vmem:[%s1640 + $0x1c8] sm:$0xff]
                  %1757 = vst [vmem:[%s1641 + $0x1c8] sm:$0xff] %v1756
                  %v1758 = vld [vmem:[%s1640 + $0x1d0] sm:$0xff]
                  %1759 = vst [vmem:[%s1641 + $0x1d0] sm:$0xff] %v1758
                  %v1760 = vld [vmem:[%s1640 + $0x1d8] sm:$0xff]
                  %1761 = vst [vmem:[%s1641 + $0x1d8] sm:$0xff] %v1760
                  %v1762 = vld [vmem:[%s1640 + $0x1e0] sm:$0xff]
                  %1763 = vst [vmem:[%s1641 + $0x1e0] sm:$0xff] %v1762
                  %v1764 = vld [vmem:[%s1640 + $0x1e8] sm:$0xff]
                  %1765 = vst [vmem:[%s1641 + $0x1e8] sm:$0xff] %v1764
                  %v1766 = vld [vmem:[%s1640 + $0x1f0] sm:$0xff]
                  %1767 = vst [vmem:[%s1641 + $0x1f0] sm:$0xff] %v1766
                  %v1768 = vld [vmem:[%s1640 + $0x1f8] sm:$0xff]
                  %1769 = vst [vmem:[%s1641 + $0x1f8] sm:$0xff] %v1768
                  %v1770 = vld [vmem:[%s1640 + $0x200] sm:$0xff]
                  %1771 = vst [vmem:[%s1641 + $0x200] sm:$0xff] %v1770
                  %v1772 = vld [vmem:[%s1640 + $0x208] sm:$0xff]
                  %1773 = vst [vmem:[%s1641 + $0x208] sm:$0xff] %v1772
                  %v1774 = vld [vmem:[%s1640 + $0x210] sm:$0xff]
                  %1775 = vst [vmem:[%s1641 + $0x210] sm:$0xff] %v1774
                  %v1776 = vld [vmem:[%s1640 + $0x218] sm:$0xff]
                  %1777 = vst [vmem:[%s1641 + $0x218] sm:$0xff] %v1776
                  %v1778 = vld [vmem:[%s1640 + $0x220] sm:$0xff]
                  %1779 = vst [vmem:[%s1641 + $0x220] sm:$0xff] %v1778
                  %v1780 = vld [vmem:[%s1640 + $0x228] sm:$0xff]
                  %1781 = vst [vmem:[%s1641 + $0x228] sm:$0xff] %v1780
                  %v1782 = vld [vmem:[%s1640 + $0x230] sm:$0xff]
                  %1783 = vst [vmem:[%s1641 + $0x230] sm:$0xff] %v1782
                  %v1784 = vld [vmem:[%s1640 + $0x238] sm:$0xff]
                  %1785 = vst [vmem:[%s1641 + $0x238] sm:$0xff] %v1784
                  %v1786 = vld [vmem:[%s1640 + $0x240] sm:$0xff]
                  %1787 = vst [vmem:[%s1641 + $0x240] sm:$0xff] %v1786
                  %v1788 = vld [vmem:[%s1640 + $0x248] sm:$0xff]
                  %1789 = vst [vmem:[%s1641 + $0x248] sm:$0xff] %v1788
                  %v1790 = vld [vmem:[%s1640 + $0x250] sm:$0xff]
                  %1791 = vst [vmem:[%s1641 + $0x250] sm:$0xff] %v1790
                  %v1792 = vld [vmem:[%s1640 + $0x258] sm:$0xff]
                  %1793 = vst [vmem:[%s1641 + $0x258] sm:$0xff] %v1792
                  %v1794 = vld [vmem:[%s1640 + $0x260] sm:$0xff]
                  %1795 = vst [vmem:[%s1641 + $0x260] sm:$0xff] %v1794
                  %v1796 = vld [vmem:[%s1640 + $0x268] sm:$0xff]
                  %1797 = vst [vmem:[%s1641 + $0x268] sm:$0xff] %v1796
                  %v1798 = vld [vmem:[%s1640 + $0x270] sm:$0xff]
                  %1799 = vst [vmem:[%s1641 + $0x270] sm:$0xff] %v1798
                  %v1800 = vld [vmem:[%s1640 + $0x278] sm:$0xff]
                  %1801 = vst [vmem:[%s1641 + $0x278] sm:$0xff] %v1800
                  %v1802 = vld [vmem:[%s1640 + $0x280] sm:$0xff]
                  %1803 = vst [vmem:[%s1641 + $0x280] sm:$0xff] %v1802
                  %v1804 = vld [vmem:[%s1640 + $0x288] sm:$0xff]
                  %1805 = vst [vmem:[%s1641 + $0x288] sm:$0xff] %v1804
                  %v1806 = vld [vmem:[%s1640 + $0x290] sm:$0xff]
                  %1807 = vst [vmem:[%s1641 + $0x290] sm:$0xff] %v1806
                  %v1808 = vld [vmem:[%s1640 + $0x298] sm:$0xff]
                  %1809 = vst [vmem:[%s1641 + $0x298] sm:$0xff] %v1808
                  %v1810 = vld [vmem:[%s1640 + $0x2a0] sm:$0xff]
                  %1811 = vst [vmem:[%s1641 + $0x2a0] sm:$0xff] %v1810
                  %v1812 = vld [vmem:[%s1640 + $0x2a8] sm:$0xff]
                  %1813 = vst [vmem:[%s1641 + $0x2a8] sm:$0xff] %v1812
                  %v1814 = vld [vmem:[%s1640 + $0x2b0] sm:$0xff]
                  %1815 = vst [vmem:[%s1641 + $0x2b0] sm:$0xff] %v1814
                  %v1816 = vld [vmem:[%s1640 + $0x2b8] sm:$0xff]
                  %1817 = vst [vmem:[%s1641 + $0x2b8] sm:$0xff] %v1816
                  %v1818 = vld [vmem:[%s1640 + $0x2c0] sm:$0xff]
                  %1819 = vst [vmem:[%s1641 + $0x2c0] sm:$0xff] %v1818
                  %v1820 = vld [vmem:[%s1640 + $0x2c8] sm:$0xff]
                  %1821 = vst [vmem:[%s1641 + $0x2c8] sm:$0xff] %v1820
                  %v1822 = vld [vmem:[%s1640 + $0x2d0] sm:$0xff]
                  %1823 = vst [vmem:[%s1641 + $0x2d0] sm:$0xff] %v1822
                  %v1824 = vld [vmem:[%s1640 + $0x2d8] sm:$0xff]
                  %1825 = vst [vmem:[%s1641 + $0x2d8] sm:$0xff] %v1824
                  %v1826 = vld [vmem:[%s1640 + $0x2e0] sm:$0xff]
                  %1827 = vst [vmem:[%s1641 + $0x2e0] sm:$0xff] %v1826
                  %v1828 = vld [vmem:[%s1640 + $0x2e8] sm:$0xff]
                  %1829 = vst [vmem:[%s1641 + $0x2e8] sm:$0xff] %v1828
                  %v1830 = vld [vmem:[%s1640 + $0x2f0] sm:$0xff]
                  %1831 = vst [vmem:[%s1641 + $0x2f0] sm:$0xff] %v1830
                  %v1832 = vld [vmem:[%s1640 + $0x2f8] sm:$0xff]
                  %1833 = vst [vmem:[%s1641 + $0x2f8] sm:$0xff] %v1832
                  %v1834 = vld [vmem:[%s1640 + $0x300] sm:$0xff]
                  %1835 = vst [vmem:[%s1641 + $0x300] sm:$0xff] %v1834
                  %v1836 = vld [vmem:[%s1640 + $0x308] sm:$0xff]
                  %1837 = vst [vmem:[%s1641 + $0x308] sm:$0xff] %v1836
                  %v1838 = vld [vmem:[%s1640 + $0x310] sm:$0xff]
                  %1839 = vst [vmem:[%s1641 + $0x310] sm:$0xff] %v1838
                  %v1840 = vld [vmem:[%s1640 + $0x318] sm:$0xff]
                  %1841 = vst [vmem:[%s1641 + $0x318] sm:$0xff] %v1840
                  %v1842 = vld [vmem:[%s1640 + $0x320] sm:$0xff]
                  %1843 = vst [vmem:[%s1641 + $0x320] sm:$0xff] %v1842
                  %v1844 = vld [vmem:[%s1640 + $0x328] sm:$0xff]
                  %1845 = vst [vmem:[%s1641 + $0x328] sm:$0xff] %v1844
                  %v1846 = vld [vmem:[%s1640 + $0x330] sm:$0xff]
                  %1847 = vst [vmem:[%s1641 + $0x330] sm:$0xff] %v1846
                  %v1848 = vld [vmem:[%s1640 + $0x338] sm:$0xff]
                  %1849 = vst [vmem:[%s1641 + $0x338] sm:$0xff] %v1848
                  %v1850 = vld [vmem:[%s1640 + $0x340] sm:$0xff]
                  %1851 = vst [vmem:[%s1641 + $0x340] sm:$0xff] %v1850
                  %v1852 = vld [vmem:[%s1640 + $0x348] sm:$0xff]
                  %1853 = vst [vmem:[%s1641 + $0x348] sm:$0xff] %v1852
                  %v1854 = vld [vmem:[%s1640 + $0x350] sm:$0xff]
                  %1855 = vst [vmem:[%s1641 + $0x350] sm:$0xff] %v1854
                  %v1856 = vld [vmem:[%s1640 + $0x358] sm:$0xff]
                  %1857 = vst [vmem:[%s1641 + $0x358] sm:$0xff] %v1856
                  %v1858 = vld [vmem:[%s1640 + $0x360] sm:$0xff]
                  %1859 = vst [vmem:[%s1641 + $0x360] sm:$0xff] %v1858
                  %v1860 = vld [vmem:[%s1640 + $0x368] sm:$0xff]
                  %1861 = vst [vmem:[%s1641 + $0x368] sm:$0xff] %v1860
                  %v1862 = vld [vmem:[%s1640 + $0x370] sm:$0xff]
                  %1863 = vst [vmem:[%s1641 + $0x370] sm:$0xff] %v1862
                  %v1864 = vld [vmem:[%s1640 + $0x378] sm:$0xff]
                  %1865 = vst [vmem:[%s1641 + $0x378] sm:$0xff] %v1864
                  %v1866 = vld [vmem:[%s1640 + $0x380] sm:$0xff]
                  %1867 = vst [vmem:[%s1641 + $0x380] sm:$0xff] %v1866
                  %v1868 = vld [vmem:[%s1640 + $0x388] sm:$0xff]
                  %1869 = vst [vmem:[%s1641 + $0x388] sm:$0xff] %v1868
                  %v1870 = vld [vmem:[%s1640 + $0x390] sm:$0xff]
                  %1871 = vst [vmem:[%s1641 + $0x390] sm:$0xff] %v1870
                  %v1872 = vld [vmem:[%s1640 + $0x398] sm:$0xff]
                  %1873 = vst [vmem:[%s1641 + $0x398] sm:$0xff] %v1872
                  %v1874 = vld [vmem:[%s1640 + $0x3a0] sm:$0xff]
                  %1875 = vst [vmem:[%s1641 + $0x3a0] sm:$0xff] %v1874
                  %v1876 = vld [vmem:[%s1640 + $0x3a8] sm:$0xff]
                  %1877 = vst [vmem:[%s1641 + $0x3a8] sm:$0xff] %v1876
                  %v1878 = vld [vmem:[%s1640 + $0x3b0] sm:$0xff]
                  %1879 = vst [vmem:[%s1641 + $0x3b0] sm:$0xff] %v1878
                  %v1880 = vld [vmem:[%s1640 + $0x3b8] sm:$0xff]
                  %1881 = vst [vmem:[%s1641 + $0x3b8] sm:$0xff] %v1880
                  %v1882 = vld [vmem:[%s1640 + $0xf00] sm:$0xff]
                  %1883 = vst [vmem:[%s1641 + $0x3c0] sm:$0xff] %v1882
                  %v1884 = vld [vmem:[%s1640 + $0xf08] sm:$0xff]
                  %1885 = vst [vmem:[%s1641 + $0x3c8] sm:$0xff] %v1884
                  %v1886 = vld [vmem:[%s1640 + $0xf10] sm:$0xff]
                  %1887 = vst [vmem:[%s1641 + $0x3d0] sm:$0xff] %v1886
                  %v1888 = vld [vmem:[%s1640 + $0xf18] sm:$0xff]
                  %1889 = vst [vmem:[%s1641 + $0x3d8] sm:$0xff] %v1888
                  %v1890 = vld [vmem:[%s1640 + $0xf20] sm:$0xff]
                  %1891 = vst [vmem:[%s1641 + $0x3e0] sm:$0xff] %v1890
                  %v1892 = vld [vmem:[%s1640 + $0xf28] sm:$0xff]
                  %1893 = vst [vmem:[%s1641 + $0x3e8] sm:$0xff] %v1892
                  %v1894 = vld [vmem:[%s1640 + $0xf30] sm:$0xff]
                  %1895 = vst [vmem:[%s1641 + $0x3f0] sm:$0xff] %v1894
                  %v1896 = vld [vmem:[%s1640 + $0xf38] sm:$0xff]
                  %1897 = vst [vmem:[%s1641 + $0x3f8] sm:$0xff] %v1896
                  %v1898 = vld [vmem:[%s1640 + $0xf40] sm:$0xff]
                  %1899 = vst [vmem:[%s1641 + $0x400] sm:$0xff] %v1898
                  %v1900 = vld [vmem:[%s1640 + $0xf48] sm:$0xff]
                  %1901 = vst [vmem:[%s1641 + $0x408] sm:$0xff] %v1900
                  %v1902 = vld [vmem:[%s1640 + $0xf50] sm:$0xff]
                  %1903 = vst [vmem:[%s1641 + $0x410] sm:$0xff] %v1902
                  %v1904 = vld [vmem:[%s1640 + $0xf58] sm:$0xff]
                  %1905 = vst [vmem:[%s1641 + $0x418] sm:$0xff] %v1904
                  %v1906 = vld [vmem:[%s1640 + $0xf60] sm:$0xff]
                  %1907 = vst [vmem:[%s1641 + $0x420] sm:$0xff] %v1906
                  %v1908 = vld [vmem:[%s1640 + $0xf68] sm:$0xff]
                  %1909 = vst [vmem:[%s1641 + $0x428] sm:$0xff] %v1908
                  %v1910 = vld [vmem:[%s1640 + $0xf70] sm:$0xff]
                  %1911 = vst [vmem:[%s1641 + $0x430] sm:$0xff] %v1910
                  %v1912 = vld [vmem:[%s1640 + $0xf78] sm:$0xff]
                  %1913 = vst [vmem:[%s1641 + $0x438] sm:$0xff] %v1912
                  %v1914 = vld [vmem:[%s1640 + $0xf80] sm:$0xff]
                  %1915 = vst [vmem:[%s1641 + $0x440] sm:$0xff] %v1914
                  %v1916 = vld [vmem:[%s1640 + $0xf88] sm:$0xff]
                  %1917 = vst [vmem:[%s1641 + $0x448] sm:$0xff] %v1916
                  %v1918 = vld [vmem:[%s1640 + $0xf90] sm:$0xff]
                  %1919 = vst [vmem:[%s1641 + $0x450] sm:$0xff] %v1918
                  %v1920 = vld [vmem:[%s1640 + $0xf98] sm:$0xff]
                  %1921 = vst [vmem:[%s1641 + $0x458] sm:$0xff] %v1920
                  %v1922 = vld [vmem:[%s1640 + $0xfa0] sm:$0xff]
                  %1923 = vst [vmem:[%s1641 + $0x460] sm:$0xff] %v1922
                  %v1924 = vld [vmem:[%s1640 + $0xfa8] sm:$0xff]
                  %1925 = vst [vmem:[%s1641 + $0x468] sm:$0xff] %v1924
                  %v1926 = vld [vmem:[%s1640 + $0xfb0] sm:$0xff]
                  %1927 = vst [vmem:[%s1641 + $0x470] sm:$0xff] %v1926
                  %v1928 = vld [vmem:[%s1640 + $0xfb8] sm:$0xff]
                  %1929 = vst [vmem:[%s1641 + $0x478] sm:$0xff] %v1928
                  %v1930 = vld [vmem:[%s1640 + $0xfc0] sm:$0xff]
                  %1931 = vst [vmem:[%s1641 + $0x480] sm:$0xff] %v1930
                  %v1932 = vld [vmem:[%s1640 + $0xfc8] sm:$0xff]
                  %1933 = vst [vmem:[%s1641 + $0x488] sm:$0xff] %v1932
                  %v1934 = vld [vmem:[%s1640 + $0xfd0] sm:$0xff]
                  %1935 = vst [vmem:[%s1641 + $0x490] sm:$0xff] %v1934
                  %v1936 = vld [vmem:[%s1640 + $0xfd8] sm:$0xff]
                  %1937 = vst [vmem:[%s1641 + $0x498] sm:$0xff] %v1936
                  %v1938 = vld [vmem:[%s1640 + $0xfe0] sm:$0xff]
                  %1939 = vst [vmem:[%s1641 + $0x4a0] sm:$0xff] %v1938
                  %v1940 = vld [vmem:[%s1640 + $0xfe8] sm:$0xff]
                  %1941 = vst [vmem:[%s1641 + $0x4a8] sm:$0xff] %v1940
                  %v1942 = vld [vmem:[%s1640 + $0xff0] sm:$0xff]
                  %1943 = vst [vmem:[%s1641 + $0x4b0] sm:$0xff] %v1942
                  %v1944 = vld [vmem:[%s1640 + $0xff8] sm:$0xff]
                  %1945 = vst [vmem:[%s1641 + $0x4b8] sm:$0xff] %v1944
                  %v1946 = vld [vmem:[%s1640 + $0x1000] sm:$0xff]
                  %1947 = vst [vmem:[%s1641 + $0x4c0] sm:$0xff] %v1946
                  %v1948 = vld [vmem:[%s1640 + $0x1008] sm:$0xff]
                  %1949 = vst [vmem:[%s1641 + $0x4c8] sm:$0xff] %v1948
                  %v1950 = vld [vmem:[%s1640 + $0x1010] sm:$0xff]
                  %1951 = vst [vmem:[%s1641 + $0x4d0] sm:$0xff] %v1950
                  %v1952 = vld [vmem:[%s1640 + $0x1018] sm:$0xff]
                  %1953 = vst [vmem:[%s1641 + $0x4d8] sm:$0xff] %v1952
                  %v1954 = vld [vmem:[%s1640 + $0x1020] sm:$0xff]
                  %1955 = vst [vmem:[%s1641 + $0x4e0] sm:$0xff] %v1954
                  %v1956 = vld [vmem:[%s1640 + $0x1028] sm:$0xff]
                  %1957 = vst [vmem:[%s1641 + $0x4e8] sm:$0xff] %v1956
                  %v1958 = vld [vmem:[%s1640 + $0x1030] sm:$0xff]
                  %1959 = vst [vmem:[%s1641 + $0x4f0] sm:$0xff] %v1958
                  %v1960 = vld [vmem:[%s1640 + $0x1038] sm:$0xff]
                  %1961 = vst [vmem:[%s1641 + $0x4f8] sm:$0xff] %v1960
                  %v1962 = vld [vmem:[%s1640 + $0x1040] sm:$0xff]
                  %1963 = vst [vmem:[%s1641 + $0x500] sm:$0xff] %v1962
                  %v1964 = vld [vmem:[%s1640 + $0x1048] sm:$0xff]
                  %1965 = vst [vmem:[%s1641 + $0x508] sm:$0xff] %v1964
                  %v1966 = vld [vmem:[%s1640 + $0x1050] sm:$0xff]
                  %1967 = vst [vmem:[%s1641 + $0x510] sm:$0xff] %v1966
                  %v1968 = vld [vmem:[%s1640 + $0x1058] sm:$0xff]
                  %1969 = vst [vmem:[%s1641 + $0x518] sm:$0xff] %v1968
                  %v1970 = vld [vmem:[%s1640 + $0x1060] sm:$0xff]
                  %1971 = vst [vmem:[%s1641 + $0x520] sm:$0xff] %v1970
                  %v1972 = vld [vmem:[%s1640 + $0x1068] sm:$0xff]
                  %1973 = vst [vmem:[%s1641 + $0x528] sm:$0xff] %v1972
                  %v1974 = vld [vmem:[%s1640 + $0x1070] sm:$0xff]
                  %1975 = vst [vmem:[%s1641 + $0x530] sm:$0xff] %v1974
                  %v1976 = vld [vmem:[%s1640 + $0x1078] sm:$0xff]
                  %1977 = vst [vmem:[%s1641 + $0x538] sm:$0xff] %v1976
                  %v1978 = vld [vmem:[%s1640 + $0x1080] sm:$0xff]
                  %1979 = vst [vmem:[%s1641 + $0x540] sm:$0xff] %v1978
                  %v1980 = vld [vmem:[%s1640 + $0x1088] sm:$0xff]
                  %1981 = vst [vmem:[%s1641 + $0x548] sm:$0xff] %v1980
                  %v1982 = vld [vmem:[%s1640 + $0x1090] sm:$0xff]
                  %1983 = vst [vmem:[%s1641 + $0x550] sm:$0xff] %v1982
                  %v1984 = vld [vmem:[%s1640 + $0x1098] sm:$0xff]
                  %1985 = vst [vmem:[%s1641 + $0x558] sm:$0xff] %v1984
                  %v1986 = vld [vmem:[%s1640 + $0x10a0] sm:$0xff]
                  %1987 = vst [vmem:[%s1641 + $0x560] sm:$0xff] %v1986
                  %v1988 = vld [vmem:[%s1640 + $0x10a8] sm:$0xff]
                  %1989 = vst [vmem:[%s1641 + $0x568] sm:$0xff] %v1988
                  %v1990 = vld [vmem:[%s1640 + $0x10b0] sm:$0xff]
                  %1991 = vst [vmem:[%s1641 + $0x570] sm:$0xff] %v1990
                  %v1992 = vld [vmem:[%s1640 + $0x10b8] sm:$0xff]
                  %1993 = vst [vmem:[%s1641 + $0x578] sm:$0xff] %v1992
                  %v1994 = vld [vmem:[%s1640 + $0x10c0] sm:$0xff]
                  %1995 = vst [vmem:[%s1641 + $0x580] sm:$0xff] %v1994
                  %v1996 = vld [vmem:[%s1640 + $0x10c8] sm:$0xff]
                  %1997 = vst [vmem:[%s1641 + $0x588] sm:$0xff] %v1996
                  %v1998 = vld [vmem:[%s1640 + $0x10d0] sm:$0xff]
                  %1999 = vst [vmem:[%s1641 + $0x590] sm:$0xff] %v1998
                  %v2000 = vld [vmem:[%s1640 + $0x10d8] sm:$0xff]
                  %2001 = vst [vmem:[%s1641 + $0x598] sm:$0xff] %v2000
                  %v2002 = vld [vmem:[%s1640 + $0x10e0] sm:$0xff]
                  %2003 = vst [vmem:[%s1641 + $0x5a0] sm:$0xff] %v2002
                  %v2004 = vld [vmem:[%s1640 + $0x10e8] sm:$0xff]
                  %2005 = vst [vmem:[%s1641 + $0x5a8] sm:$0xff] %v2004
                  %v2006 = vld [vmem:[%s1640 + $0x10f0] sm:$0xff]
                  %2007 = vst [vmem:[%s1641 + $0x5b0] sm:$0xff] %v2006
                  %v2008 = vld [vmem:[%s1640 + $0x10f8] sm:$0xff]
                  %2009 = vst [vmem:[%s1641 + $0x5b8] sm:$0xff] %v2008
                  %v2010 = vld [vmem:[%s1640 + $0x1100] sm:$0xff]
                  %2011 = vst [vmem:[%s1641 + $0x5c0] sm:$0xff] %v2010
                  %v2012 = vld [vmem:[%s1640 + $0x1108] sm:$0xff]
                  %2013 = vst [vmem:[%s1641 + $0x5c8] sm:$0xff] %v2012
                  %v2014 = vld [vmem:[%s1640 + $0x1110] sm:$0xff]
                  %2015 = vst [vmem:[%s1641 + $0x5d0] sm:$0xff] %v2014
                  %v2016 = vld [vmem:[%s1640 + $0x1118] sm:$0xff]
                  %2017 = vst [vmem:[%s1641 + $0x5d8] sm:$0xff] %v2016
                  %v2018 = vld [vmem:[%s1640 + $0x1120] sm:$0xff]
                  %2019 = vst [vmem:[%s1641 + $0x5e0] sm:$0xff] %v2018
                  %v2020 = vld [vmem:[%s1640 + $0x1128] sm:$0xff]
                  %2021 = vst [vmem:[%s1641 + $0x5e8] sm:$0xff] %v2020
                  %v2022 = vld [vmem:[%s1640 + $0x1130] sm:$0xff]
                  %2023 = vst [vmem:[%s1641 + $0x5f0] sm:$0xff] %v2022
                  %v2024 = vld [vmem:[%s1640 + $0x1138] sm:$0xff]
                  %2025 = vst [vmem:[%s1641 + $0x5f8] sm:$0xff] %v2024
                  %v2026 = vld [vmem:[%s1640 + $0x1140] sm:$0xff]
                  %2027 = vst [vmem:[%s1641 + $0x600] sm:$0xff] %v2026
                  %v2028 = vld [vmem:[%s1640 + $0x1148] sm:$0xff]
                  %2029 = vst [vmem:[%s1641 + $0x608] sm:$0xff] %v2028
                  %v2030 = vld [vmem:[%s1640 + $0x1150] sm:$0xff]
                  %2031 = vst [vmem:[%s1641 + $0x610] sm:$0xff] %v2030
                  %v2032 = vld [vmem:[%s1640 + $0x1158] sm:$0xff]
                  %2033 = vst [vmem:[%s1641 + $0x618] sm:$0xff] %v2032
                  %v2034 = vld [vmem:[%s1640 + $0x1160] sm:$0xff]
                  %2035 = vst [vmem:[%s1641 + $0x620] sm:$0xff] %v2034
                  %v2036 = vld [vmem:[%s1640 + $0x1168] sm:$0xff]
                  %2037 = vst [vmem:[%s1641 + $0x628] sm:$0xff] %v2036
                  %v2038 = vld [vmem:[%s1640 + $0x1170] sm:$0xff]
                  %2039 = vst [vmem:[%s1641 + $0x630] sm:$0xff] %v2038
                  %v2040 = vld [vmem:[%s1640 + $0x1178] sm:$0xff]
                  %2041 = vst [vmem:[%s1641 + $0x638] sm:$0xff] %v2040
                  %v2042 = vld [vmem:[%s1640 + $0x1180] sm:$0xff]
                  %2043 = vst [vmem:[%s1641 + $0x640] sm:$0xff] %v2042
                  %v2044 = vld [vmem:[%s1640 + $0x1188] sm:$0xff]
                  %2045 = vst [vmem:[%s1641 + $0x648] sm:$0xff] %v2044
                  %v2046 = vld [vmem:[%s1640 + $0x1190] sm:$0xff]
                  %2047 = vst [vmem:[%s1641 + $0x650] sm:$0xff] %v2046
                  %v2048 = vld [vmem:[%s1640 + $0x1198] sm:$0xff]
                  %2049 = vst [vmem:[%s1641 + $0x658] sm:$0xff] %v2048
                  %v2050 = vld [vmem:[%s1640 + $0x11a0] sm:$0xff]
                  %2051 = vst [vmem:[%s1641 + $0x660] sm:$0xff] %v2050
                  %v2052 = vld [vmem:[%s1640 + $0x11a8] sm:$0xff]
                  %2053 = vst [vmem:[%s1641 + $0x668] sm:$0xff] %v2052
                  %v2054 = vld [vmem:[%s1640 + $0x11b0] sm:$0xff]
                  %2055 = vst [vmem:[%s1641 + $0x670] sm:$0xff] %v2054
                  %v2056 = vld [vmem:[%s1640 + $0x11b8] sm:$0xff]
                  %2057 = vst [vmem:[%s1641 + $0x678] sm:$0xff] %v2056
                  %v2058 = vld [vmem:[%s1640 + $0x11c0] sm:$0xff]
                  %2059 = vst [vmem:[%s1641 + $0x680] sm:$0xff] %v2058
                  %v2060 = vld [vmem:[%s1640 + $0x11c8] sm:$0xff]
                  %2061 = vst [vmem:[%s1641 + $0x688] sm:$0xff] %v2060
                  %v2062 = vld [vmem:[%s1640 + $0x11d0] sm:$0xff]
                  %2063 = vst [vmem:[%s1641 + $0x690] sm:$0xff] %v2062
                  %v2064 = vld [vmem:[%s1640 + $0x11d8] sm:$0xff]
                  %2065 = vst [vmem:[%s1641 + $0x698] sm:$0xff] %v2064
                  %v2066 = vld [vmem:[%s1640 + $0x11e0] sm:$0xff]
                  %2067 = vst [vmem:[%s1641 + $0x6a0] sm:$0xff] %v2066
                  %v2068 = vld [vmem:[%s1640 + $0x11e8] sm:$0xff]
                  %2069 = vst [vmem:[%s1641 + $0x6a8] sm:$0xff] %v2068
                  %v2070 = vld [vmem:[%s1640 + $0x11f0] sm:$0xff]
                  %2071 = vst [vmem:[%s1641 + $0x6b0] sm:$0xff] %v2070
                  %v2072 = vld [vmem:[%s1640 + $0x11f8] sm:$0xff]
                  %2073 = vst [vmem:[%s1641 + $0x6b8] sm:$0xff] %v2072
                  %v2074 = vld [vmem:[%s1640 + $0x1200] sm:$0xff]
                  %2075 = vst [vmem:[%s1641 + $0x6c0] sm:$0xff] %v2074
                  %v2076 = vld [vmem:[%s1640 + $0x1208] sm:$0xff]
                  %2077 = vst [vmem:[%s1641 + $0x6c8] sm:$0xff] %v2076
                  %v2078 = vld [vmem:[%s1640 + $0x1210] sm:$0xff]
                  %2079 = vst [vmem:[%s1641 + $0x6d0] sm:$0xff] %v2078
                  %v2080 = vld [vmem:[%s1640 + $0x1218] sm:$0xff]
                  %2081 = vst [vmem:[%s1641 + $0x6d8] sm:$0xff] %v2080
                  %v2082 = vld [vmem:[%s1640 + $0x1220] sm:$0xff]
                  %2083 = vst [vmem:[%s1641 + $0x6e0] sm:$0xff] %v2082
                  %v2084 = vld [vmem:[%s1640 + $0x1228] sm:$0xff]
                  %2085 = vst [vmem:[%s1641 + $0x6e8] sm:$0xff] %v2084
                  %v2086 = vld [vmem:[%s1640 + $0x1230] sm:$0xff]
                  %2087 = vst [vmem:[%s1641 + $0x6f0] sm:$0xff] %v2086
                  %v2088 = vld [vmem:[%s1640 + $0x1238] sm:$0xff]
                  %2089 = vst [vmem:[%s1641 + $0x6f8] sm:$0xff] %v2088
                  %v2090 = vld [vmem:[%s1640 + $0x1240] sm:$0xff]
                  %2091 = vst [vmem:[%s1641 + $0x700] sm:$0xff] %v2090
                  %v2092 = vld [vmem:[%s1640 + $0x1248] sm:$0xff]
                  %2093 = vst [vmem:[%s1641 + $0x708] sm:$0xff] %v2092
                  %v2094 = vld [vmem:[%s1640 + $0x1250] sm:$0xff]
                  %2095 = vst [vmem:[%s1641 + $0x710] sm:$0xff] %v2094
                  %v2096 = vld [vmem:[%s1640 + $0x1258] sm:$0xff]
                  %2097 = vst [vmem:[%s1641 + $0x718] sm:$0xff] %v2096
                  %v2098 = vld [vmem:[%s1640 + $0x1260] sm:$0xff]
                  %2099 = vst [vmem:[%s1641 + $0x720] sm:$0xff] %v2098
                  %v2100 = vld [vmem:[%s1640 + $0x1268] sm:$0xff]
                  %2101 = vst [vmem:[%s1641 + $0x728] sm:$0xff] %v2100
                  %v2102 = vld [vmem:[%s1640 + $0x1270] sm:$0xff]
                  %2103 = vst [vmem:[%s1641 + $0x730] sm:$0xff] %v2102
                  %v2104 = vld [vmem:[%s1640 + $0x1278] sm:$0xff]
                  %2105 = vst [vmem:[%s1641 + $0x738] sm:$0xff] %v2104
                  %v2106 = vld [vmem:[%s1640 + $0x1280] sm:$0xff]
                  %2107 = vst [vmem:[%s1641 + $0x740] sm:$0xff] %v2106
                  %v2108 = vld [vmem:[%s1640 + $0x1288] sm:$0xff]
                  %2109 = vst [vmem:[%s1641 + $0x748] sm:$0xff] %v2108
                  %v2110 = vld [vmem:[%s1640 + $0x1290] sm:$0xff]
                  %2111 = vst [vmem:[%s1641 + $0x750] sm:$0xff] %v2110
                  %v2112 = vld [vmem:[%s1640 + $0x1298] sm:$0xff]
                  %2113 = vst [vmem:[%s1641 + $0x758] sm:$0xff] %v2112
                  %v2114 = vld [vmem:[%s1640 + $0x12a0] sm:$0xff]
                  %2115 = vst [vmem:[%s1641 + $0x760] sm:$0xff] %v2114
                  %v2116 = vld [vmem:[%s1640 + $0x12a8] sm:$0xff]
                  %2117 = vst [vmem:[%s1641 + $0x768] sm:$0xff] %v2116
                  %v2118 = vld [vmem:[%s1640 + $0x12b0] sm:$0xff]
                  %2119 = vst [vmem:[%s1641 + $0x770] sm:$0xff] %v2118
                  %v2120 = vld [vmem:[%s1640 + $0x12b8] sm:$0xff]
                  %2121 = vst [vmem:[%s1641 + $0x778] sm:$0xff] %v2120
                $region86: #{backend_forward.1} parent=80 // loop_footer
                  %s1639 = sadd.s32 1, %s1635
                $region87: #{backend_forward.1} parent=80 // loop_footer_branch
                  %1634 = sbr.rel target = $region83
                $region88: #{backend_forward.1} parent=80 // loop_exit
                  _
              $region81: #{backend_forward.1} parent=65 // pred_fallthru
                _
              // Predicated region
              $region89: #{backend_forward.1} parent=65 // pred_check
                _
              $region90: #{backend_forward.1} parent=65 // pred_check_branch
                %2123 = sbr.rel target = $region92
              $region91: #{backend_forward.1} parent=65 // pred_region
                _
              $region92: #{backend_forward.1} parent=65 // pred_fallthru
                _
            $region66: #{backend_forward.1} parent=61 // pred_fallthru
              _
            // Predicated region
            $region67: #{backend_forward.1} parent=61 // pred_check
              _
            $region68: #{backend_forward.1} parent=61 // pred_check_branch
              %1142 = sbr.rel target = $region70
            $region69: #{backend_forward.1} parent=61 // pred_region
              loop: start=0, step=1, limit=1
              $region71: #{backend_forward.1} parent=69 // loop_pre_header
                _
              $region72: #{backend_forward.1} parent=69 // loop_header
                %s1145 = sphi 0, %s1149
                %p1146 = scmp.ge.s32.totalorder %s1145, 1
                %s1150 = sphi %s1136, %s1136
                %s1151 = sphi %s1131, %s1131
              $region73: #{backend_forward.1} parent=69 // loop_header_branch
                %1148 = sbr.rel (%p1146) target = $region77
              $region74: #{backend_forward.1} parent=69 // loop_body
                %v1152 = vld [vmem:[%s1150] sm:$0xff]
                %1153 = vst [vmem:[%s1151] sm:$0xff] %v1152
                %v1154 = vld [vmem:[%s1150 + $0x8] sm:$0xff]
                %1155 = vst [vmem:[%s1151 + $0x8] sm:$0xff] %v1154
                %v1156 = vld [vmem:[%s1150 + $0x10] sm:$0xff]
                %1157 = vst [vmem:[%s1151 + $0x10] sm:$0xff] %v1156
                %v1158 = vld [vmem:[%s1150 + $0x18] sm:$0xff]
                %1159 = vst [vmem:[%s1151 + $0x18] sm:$0xff] %v1158
                %v1160 = vld [vmem:[%s1150 + $0x20] sm:$0xff]
                %1161 = vst [vmem:[%s1151 + $0x20] sm:$0xff] %v1160
                %v1162 = vld [vmem:[%s1150 + $0x28] sm:$0xff]
                %1163 = vst [vmem:[%s1151 + $0x28] sm:$0xff] %v1162
                %v1164 = vld [vmem:[%s1150 + $0x30] sm:$0xff]
                %1165 = vst [vmem:[%s1151 + $0x30] sm:$0xff] %v1164
                %v1166 = vld [vmem:[%s1150 + $0x38] sm:$0xff]
                %1167 = vst [vmem:[%s1151 + $0x38] sm:$0xff] %v1166
                %v1168 = vld [vmem:[%s1150 + $0x40] sm:$0xff]
                %1169 = vst [vmem:[%s1151 + $0x40] sm:$0xff] %v1168
                %v1170 = vld [vmem:[%s1150 + $0x48] sm:$0xff]
                %1171 = vst [vmem:[%s1151 + $0x48] sm:$0xff] %v1170
                %v1172 = vld [vmem:[%s1150 + $0x50] sm:$0xff]
                %1173 = vst [vmem:[%s1151 + $0x50] sm:$0xff] %v1172
                %v1174 = vld [vmem:[%s1150 + $0x58] sm:$0xff]
                %1175 = vst [vmem:[%s1151 + $0x58] sm:$0xff] %v1174
                %v1176 = vld [vmem:[%s1150 + $0x60] sm:$0xff]
                %1177 = vst [vmem:[%s1151 + $0x60] sm:$0xff] %v1176
                %v1178 = vld [vmem:[%s1150 + $0x68] sm:$0xff]
                %1179 = vst [vmem:[%s1151 + $0x68] sm:$0xff] %v1178
                %v1180 = vld [vmem:[%s1150 + $0x70] sm:$0xff]
                %1181 = vst [vmem:[%s1151 + $0x70] sm:$0xff] %v1180
                %v1182 = vld [vmem:[%s1150 + $0x78] sm:$0xff]
                %1183 = vst [vmem:[%s1151 + $0x78] sm:$0xff] %v1182
                %v1184 = vld [vmem:[%s1150 + $0x80] sm:$0xff]
                %1185 = vst [vmem:[%s1151 + $0x80] sm:$0xff] %v1184
                %v1186 = vld [vmem:[%s1150 + $0x88] sm:$0xff]
                %1187 = vst [vmem:[%s1151 + $0x88] sm:$0xff] %v1186
                %v1188 = vld [vmem:[%s1150 + $0x90] sm:$0xff]
                %1189 = vst [vmem:[%s1151 + $0x90] sm:$0xff] %v1188
                %v1190 = vld [vmem:[%s1150 + $0x98] sm:$0xff]
                %1191 = vst [vmem:[%s1151 + $0x98] sm:$0xff] %v1190
                %v1192 = vld [vmem:[%s1150 + $0xa0] sm:$0xff]
                %1193 = vst [vmem:[%s1151 + $0xa0] sm:$0xff] %v1192
                %v1194 = vld [vmem:[%s1150 + $0xa8] sm:$0xff]
                %1195 = vst [vmem:[%s1151 + $0xa8] sm:$0xff] %v1194
                %v1196 = vld [vmem:[%s1150 + $0xb0] sm:$0xff]
                %1197 = vst [vmem:[%s1151 + $0xb0] sm:$0xff] %v1196
                %v1198 = vld [vmem:[%s1150 + $0xb8] sm:$0xff]
                %1199 = vst [vmem:[%s1151 + $0xb8] sm:$0xff] %v1198
                %v1200 = vld [vmem:[%s1150 + $0xc0] sm:$0xff]
                %1201 = vst [vmem:[%s1151 + $0xc0] sm:$0xff] %v1200
                %v1202 = vld [vmem:[%s1150 + $0xc8] sm:$0xff]
                %1203 = vst [vmem:[%s1151 + $0xc8] sm:$0xff] %v1202
                %v1204 = vld [vmem:[%s1150 + $0xd0] sm:$0xff]
                %1205 = vst [vmem:[%s1151 + $0xd0] sm:$0xff] %v1204
                %v1206 = vld [vmem:[%s1150 + $0xd8] sm:$0xff]
                %1207 = vst [vmem:[%s1151 + $0xd8] sm:$0xff] %v1206
                %v1208 = vld [vmem:[%s1150 + $0xe0] sm:$0xff]
                %1209 = vst [vmem:[%s1151 + $0xe0] sm:$0xff] %v1208
                %v1210 = vld [vmem:[%s1150 + $0xe8] sm:$0xff]
                %1211 = vst [vmem:[%s1151 + $0xe8] sm:$0xff] %v1210
                %v1212 = vld [vmem:[%s1150 + $0xf0] sm:$0xff]
                %1213 = vst [vmem:[%s1151 + $0xf0] sm:$0xff] %v1212
                %v1214 = vld [vmem:[%s1150 + $0xf8] sm:$0xff]
                %1215 = vst [vmem:[%s1151 + $0xf8] sm:$0xff] %v1214
                %v1216 = vld [vmem:[%s1150 + $0x100] sm:$0xff]
                %1217 = vst [vmem:[%s1151 + $0x100] sm:$0xff] %v1216
                %v1218 = vld [vmem:[%s1150 + $0x108] sm:$0xff]
                %1219 = vst [vmem:[%s1151 + $0x108] sm:$0xff] %v1218
                %v1220 = vld [vmem:[%s1150 + $0x110] sm:$0xff]
                %1221 = vst [vmem:[%s1151 + $0x110] sm:$0xff] %v1220
                %v1222 = vld [vmem:[%s1150 + $0x118] sm:$0xff]
                %1223 = vst [vmem:[%s1151 + $0x118] sm:$0xff] %v1222
                %v1224 = vld [vmem:[%s1150 + $0x120] sm:$0xff]
                %1225 = vst [vmem:[%s1151 + $0x120] sm:$0xff] %v1224
                %v1226 = vld [vmem:[%s1150 + $0x128] sm:$0xff]
                %1227 = vst [vmem:[%s1151 + $0x128] sm:$0xff] %v1226
                %v1228 = vld [vmem:[%s1150 + $0x130] sm:$0xff]
                %1229 = vst [vmem:[%s1151 + $0x130] sm:$0xff] %v1228
                %v1230 = vld [vmem:[%s1150 + $0x138] sm:$0xff]
                %1231 = vst [vmem:[%s1151 + $0x138] sm:$0xff] %v1230
                %v1232 = vld [vmem:[%s1150 + $0x140] sm:$0xff]
                %1233 = vst [vmem:[%s1151 + $0x140] sm:$0xff] %v1232
                %v1234 = vld [vmem:[%s1150 + $0x148] sm:$0xff]
                %1235 = vst [vmem:[%s1151 + $0x148] sm:$0xff] %v1234
                %v1236 = vld [vmem:[%s1150 + $0x150] sm:$0xff]
                %1237 = vst [vmem:[%s1151 + $0x150] sm:$0xff] %v1236
                %v1238 = vld [vmem:[%s1150 + $0x158] sm:$0xff]
                %1239 = vst [vmem:[%s1151 + $0x158] sm:$0xff] %v1238
                %v1240 = vld [vmem:[%s1150 + $0x160] sm:$0xff]
                %1241 = vst [vmem:[%s1151 + $0x160] sm:$0xff] %v1240
                %v1242 = vld [vmem:[%s1150 + $0x168] sm:$0xff]
                %1243 = vst [vmem:[%s1151 + $0x168] sm:$0xff] %v1242
                %v1244 = vld [vmem:[%s1150 + $0x170] sm:$0xff]
                %1245 = vst [vmem:[%s1151 + $0x170] sm:$0xff] %v1244
                %v1246 = vld [vmem:[%s1150 + $0x178] sm:$0xff]
                %1247 = vst [vmem:[%s1151 + $0x178] sm:$0xff] %v1246
                %v1248 = vld [vmem:[%s1150 + $0x180] sm:$0xff]
                %1249 = vst [vmem:[%s1151 + $0x180] sm:$0xff] %v1248
                %v1250 = vld [vmem:[%s1150 + $0x188] sm:$0xff]
                %1251 = vst [vmem:[%s1151 + $0x188] sm:$0xff] %v1250
                %v1252 = vld [vmem:[%s1150 + $0x190] sm:$0xff]
                %1253 = vst [vmem:[%s1151 + $0x190] sm:$0xff] %v1252
                %v1254 = vld [vmem:[%s1150 + $0x198] sm:$0xff]
                %1255 = vst [vmem:[%s1151 + $0x198] sm:$0xff] %v1254
                %v1256 = vld [vmem:[%s1150 + $0x1a0] sm:$0xff]
                %1257 = vst [vmem:[%s1151 + $0x1a0] sm:$0xff] %v1256
                %v1258 = vld [vmem:[%s1150 + $0x1a8] sm:$0xff]
                %1259 = vst [vmem:[%s1151 + $0x1a8] sm:$0xff] %v1258
                %v1260 = vld [vmem:[%s1150 + $0x1b0] sm:$0xff]
                %1261 = vst [vmem:[%s1151 + $0x1b0] sm:$0xff] %v1260
                %v1262 = vld [vmem:[%s1150 + $0x1b8] sm:$0xff]
                %1263 = vst [vmem:[%s1151 + $0x1b8] sm:$0xff] %v1262
                %v1264 = vld [vmem:[%s1150 + $0x1c0] sm:$0xff]
                %1265 = vst [vmem:[%s1151 + $0x1c0] sm:$0xff] %v1264
                %v1266 = vld [vmem:[%s1150 + $0x1c8] sm:$0xff]
                %1267 = vst [vmem:[%s1151 + $0x1c8] sm:$0xff] %v1266
                %v1268 = vld [vmem:[%s1150 + $0x1d0] sm:$0xff]
                %1269 = vst [vmem:[%s1151 + $0x1d0] sm:$0xff] %v1268
                %v1270 = vld [vmem:[%s1150 + $0x1d8] sm:$0xff]
                %1271 = vst [vmem:[%s1151 + $0x1d8] sm:$0xff] %v1270
                %v1272 = vld [vmem:[%s1150 + $0x1e0] sm:$0xff]
                %1273 = vst [vmem:[%s1151 + $0x1e0] sm:$0xff] %v1272
                %v1274 = vld [vmem:[%s1150 + $0x1e8] sm:$0xff]
                %1275 = vst [vmem:[%s1151 + $0x1e8] sm:$0xff] %v1274
                %v1276 = vld [vmem:[%s1150 + $0x1f0] sm:$0xff]
                %1277 = vst [vmem:[%s1151 + $0x1f0] sm:$0xff] %v1276
                %v1278 = vld [vmem:[%s1150 + $0x1f8] sm:$0xff]
                %1279 = vst [vmem:[%s1151 + $0x1f8] sm:$0xff] %v1278
                %v1280 = vld [vmem:[%s1150 + $0x200] sm:$0xff]
                %1281 = vst [vmem:[%s1151 + $0x200] sm:$0xff] %v1280
                %v1282 = vld [vmem:[%s1150 + $0x208] sm:$0xff]
                %1283 = vst [vmem:[%s1151 + $0x208] sm:$0xff] %v1282
                %v1284 = vld [vmem:[%s1150 + $0x210] sm:$0xff]
                %1285 = vst [vmem:[%s1151 + $0x210] sm:$0xff] %v1284
                %v1286 = vld [vmem:[%s1150 + $0x218] sm:$0xff]
                %1287 = vst [vmem:[%s1151 + $0x218] sm:$0xff] %v1286
                %v1288 = vld [vmem:[%s1150 + $0x220] sm:$0xff]
                %1289 = vst [vmem:[%s1151 + $0x220] sm:$0xff] %v1288
                %v1290 = vld [vmem:[%s1150 + $0x228] sm:$0xff]
                %1291 = vst [vmem:[%s1151 + $0x228] sm:$0xff] %v1290
                %v1292 = vld [vmem:[%s1150 + $0x230] sm:$0xff]
                %1293 = vst [vmem:[%s1151 + $0x230] sm:$0xff] %v1292
                %v1294 = vld [vmem:[%s1150 + $0x238] sm:$0xff]
                %1295 = vst [vmem:[%s1151 + $0x238] sm:$0xff] %v1294
                %v1296 = vld [vmem:[%s1150 + $0x240] sm:$0xff]
                %1297 = vst [vmem:[%s1151 + $0x240] sm:$0xff] %v1296
                %v1298 = vld [vmem:[%s1150 + $0x248] sm:$0xff]
                %1299 = vst [vmem:[%s1151 + $0x248] sm:$0xff] %v1298
                %v1300 = vld [vmem:[%s1150 + $0x250] sm:$0xff]
                %1301 = vst [vmem:[%s1151 + $0x250] sm:$0xff] %v1300
                %v1302 = vld [vmem:[%s1150 + $0x258] sm:$0xff]
                %1303 = vst [vmem:[%s1151 + $0x258] sm:$0xff] %v1302
                %v1304 = vld [vmem:[%s1150 + $0x260] sm:$0xff]
                %1305 = vst [vmem:[%s1151 + $0x260] sm:$0xff] %v1304
                %v1306 = vld [vmem:[%s1150 + $0x268] sm:$0xff]
                %1307 = vst [vmem:[%s1151 + $0x268] sm:$0xff] %v1306
                %v1308 = vld [vmem:[%s1150 + $0x270] sm:$0xff]
                %1309 = vst [vmem:[%s1151 + $0x270] sm:$0xff] %v1308
                %v1310 = vld [vmem:[%s1150 + $0x278] sm:$0xff]
                %1311 = vst [vmem:[%s1151 + $0x278] sm:$0xff] %v1310
                %v1312 = vld [vmem:[%s1150 + $0x280] sm:$0xff]
                %1313 = vst [vmem:[%s1151 + $0x280] sm:$0xff] %v1312
                %v1314 = vld [vmem:[%s1150 + $0x288] sm:$0xff]
                %1315 = vst [vmem:[%s1151 + $0x288] sm:$0xff] %v1314
                %v1316 = vld [vmem:[%s1150 + $0x290] sm:$0xff]
                %1317 = vst [vmem:[%s1151 + $0x290] sm:$0xff] %v1316
                %v1318 = vld [vmem:[%s1150 + $0x298] sm:$0xff]
                %1319 = vst [vmem:[%s1151 + $0x298] sm:$0xff] %v1318
                %v1320 = vld [vmem:[%s1150 + $0x2a0] sm:$0xff]
                %1321 = vst [vmem:[%s1151 + $0x2a0] sm:$0xff] %v1320
                %v1322 = vld [vmem:[%s1150 + $0x2a8] sm:$0xff]
                %1323 = vst [vmem:[%s1151 + $0x2a8] sm:$0xff] %v1322
                %v1324 = vld [vmem:[%s1150 + $0x2b0] sm:$0xff]
                %1325 = vst [vmem:[%s1151 + $0x2b0] sm:$0xff] %v1324
                %v1326 = vld [vmem:[%s1150 + $0x2b8] sm:$0xff]
                %1327 = vst [vmem:[%s1151 + $0x2b8] sm:$0xff] %v1326
                %v1328 = vld [vmem:[%s1150 + $0x2c0] sm:$0xff]
                %1329 = vst [vmem:[%s1151 + $0x2c0] sm:$0xff] %v1328
                %v1330 = vld [vmem:[%s1150 + $0x2c8] sm:$0xff]
                %1331 = vst [vmem:[%s1151 + $0x2c8] sm:$0xff] %v1330
                %v1332 = vld [vmem:[%s1150 + $0x2d0] sm:$0xff]
                %1333 = vst [vmem:[%s1151 + $0x2d0] sm:$0xff] %v1332
                %v1334 = vld [vmem:[%s1150 + $0x2d8] sm:$0xff]
                %1335 = vst [vmem:[%s1151 + $0x2d8] sm:$0xff] %v1334
                %v1336 = vld [vmem:[%s1150 + $0x2e0] sm:$0xff]
                %1337 = vst [vmem:[%s1151 + $0x2e0] sm:$0xff] %v1336
                %v1338 = vld [vmem:[%s1150 + $0x2e8] sm:$0xff]
                %1339 = vst [vmem:[%s1151 + $0x2e8] sm:$0xff] %v1338
                %v1340 = vld [vmem:[%s1150 + $0x2f0] sm:$0xff]
                %1341 = vst [vmem:[%s1151 + $0x2f0] sm:$0xff] %v1340
                %v1342 = vld [vmem:[%s1150 + $0x2f8] sm:$0xff]
                %1343 = vst [vmem:[%s1151 + $0x2f8] sm:$0xff] %v1342
                %v1344 = vld [vmem:[%s1150 + $0x300] sm:$0xff]
                %1345 = vst [vmem:[%s1151 + $0x300] sm:$0xff] %v1344
                %v1346 = vld [vmem:[%s1150 + $0x308] sm:$0xff]
                %1347 = vst [vmem:[%s1151 + $0x308] sm:$0xff] %v1346
                %v1348 = vld [vmem:[%s1150 + $0x310] sm:$0xff]
                %1349 = vst [vmem:[%s1151 + $0x310] sm:$0xff] %v1348
                %v1350 = vld [vmem:[%s1150 + $0x318] sm:$0xff]
                %1351 = vst [vmem:[%s1151 + $0x318] sm:$0xff] %v1350
                %v1352 = vld [vmem:[%s1150 + $0x320] sm:$0xff]
                %1353 = vst [vmem:[%s1151 + $0x320] sm:$0xff] %v1352
                %v1354 = vld [vmem:[%s1150 + $0x328] sm:$0xff]
                %1355 = vst [vmem:[%s1151 + $0x328] sm:$0xff] %v1354
                %v1356 = vld [vmem:[%s1150 + $0x330] sm:$0xff]
                %1357 = vst [vmem:[%s1151 + $0x330] sm:$0xff] %v1356
                %v1358 = vld [vmem:[%s1150 + $0x338] sm:$0xff]
                %1359 = vst [vmem:[%s1151 + $0x338] sm:$0xff] %v1358
                %v1360 = vld [vmem:[%s1150 + $0x340] sm:$0xff]
                %1361 = vst [vmem:[%s1151 + $0x340] sm:$0xff] %v1360
                %v1362 = vld [vmem:[%s1150 + $0x348] sm:$0xff]
                %1363 = vst [vmem:[%s1151 + $0x348] sm:$0xff] %v1362
                %v1364 = vld [vmem:[%s1150 + $0x350] sm:$0xff]
                %1365 = vst [vmem:[%s1151 + $0x350] sm:$0xff] %v1364
                %v1366 = vld [vmem:[%s1150 + $0x358] sm:$0xff]
                %1367 = vst [vmem:[%s1151 + $0x358] sm:$0xff] %v1366
                %v1368 = vld [vmem:[%s1150 + $0x360] sm:$0xff]
                %1369 = vst [vmem:[%s1151 + $0x360] sm:$0xff] %v1368
                %v1370 = vld [vmem:[%s1150 + $0x368] sm:$0xff]
                %1371 = vst [vmem:[%s1151 + $0x368] sm:$0xff] %v1370
                %v1372 = vld [vmem:[%s1150 + $0x370] sm:$0xff]
                %1373 = vst [vmem:[%s1151 + $0x370] sm:$0xff] %v1372
                %v1374 = vld [vmem:[%s1150 + $0x378] sm:$0xff]
                %1375 = vst [vmem:[%s1151 + $0x378] sm:$0xff] %v1374
                %v1376 = vld [vmem:[%s1150 + $0x380] sm:$0xff]
                %1377 = vst [vmem:[%s1151 + $0x380] sm:$0xff] %v1376
                %v1378 = vld [vmem:[%s1150 + $0x388] sm:$0xff]
                %1379 = vst [vmem:[%s1151 + $0x388] sm:$0xff] %v1378
                %v1380 = vld [vmem:[%s1150 + $0x390] sm:$0xff]
                %1381 = vst [vmem:[%s1151 + $0x390] sm:$0xff] %v1380
                %v1382 = vld [vmem:[%s1150 + $0x398] sm:$0xff]
                %1383 = vst [vmem:[%s1151 + $0x398] sm:$0xff] %v1382
                %v1384 = vld [vmem:[%s1150 + $0x3a0] sm:$0xff]
                %1385 = vst [vmem:[%s1151 + $0x3a0] sm:$0xff] %v1384
                %v1386 = vld [vmem:[%s1150 + $0x3a8] sm:$0xff]
                %1387 = vst [vmem:[%s1151 + $0x3a8] sm:$0xff] %v1386
                %v1388 = vld [vmem:[%s1150 + $0x3b0] sm:$0xff]
                %1389 = vst [vmem:[%s1151 + $0x3b0] sm:$0xff] %v1388
                %v1390 = vld [vmem:[%s1150 + $0x3b8] sm:$0xff]
                %1391 = vst [vmem:[%s1151 + $0x3b8] sm:$0xff] %v1390
                %v1392 = vld [vmem:[%s1150 + $0xf00] sm:$0xff]
                %1393 = vst [vmem:[%s1151 + $0x3c0] sm:$0xff] %v1392
                %v1394 = vld [vmem:[%s1150 + $0xf08] sm:$0xff]
                %1395 = vst [vmem:[%s1151 + $0x3c8] sm:$0xff] %v1394
                %v1396 = vld [vmem:[%s1150 + $0xf10] sm:$0xff]
                %1397 = vst [vmem:[%s1151 + $0x3d0] sm:$0xff] %v1396
                %v1398 = vld [vmem:[%s1150 + $0xf18] sm:$0xff]
                %1399 = vst [vmem:[%s1151 + $0x3d8] sm:$0xff] %v1398
                %v1400 = vld [vmem:[%s1150 + $0xf20] sm:$0xff]
                %1401 = vst [vmem:[%s1151 + $0x3e0] sm:$0xff] %v1400
                %v1402 = vld [vmem:[%s1150 + $0xf28] sm:$0xff]
                %1403 = vst [vmem:[%s1151 + $0x3e8] sm:$0xff] %v1402
                %v1404 = vld [vmem:[%s1150 + $0xf30] sm:$0xff]
                %1405 = vst [vmem:[%s1151 + $0x3f0] sm:$0xff] %v1404
                %v1406 = vld [vmem:[%s1150 + $0xf38] sm:$0xff]
                %1407 = vst [vmem:[%s1151 + $0x3f8] sm:$0xff] %v1406
                %v1408 = vld [vmem:[%s1150 + $0xf40] sm:$0xff]
                %1409 = vst [vmem:[%s1151 + $0x400] sm:$0xff] %v1408
                %v1410 = vld [vmem:[%s1150 + $0xf48] sm:$0xff]
                %1411 = vst [vmem:[%s1151 + $0x408] sm:$0xff] %v1410
                %v1412 = vld [vmem:[%s1150 + $0xf50] sm:$0xff]
                %1413 = vst [vmem:[%s1151 + $0x410] sm:$0xff] %v1412
                %v1414 = vld [vmem:[%s1150 + $0xf58] sm:$0xff]
                %1415 = vst [vmem:[%s1151 + $0x418] sm:$0xff] %v1414
                %v1416 = vld [vmem:[%s1150 + $0xf60] sm:$0xff]
                %1417 = vst [vmem:[%s1151 + $0x420] sm:$0xff] %v1416
                %v1418 = vld [vmem:[%s1150 + $0xf68] sm:$0xff]
                %1419 = vst [vmem:[%s1151 + $0x428] sm:$0xff] %v1418
                %v1420 = vld [vmem:[%s1150 + $0xf70] sm:$0xff]
                %1421 = vst [vmem:[%s1151 + $0x430] sm:$0xff] %v1420
                %v1422 = vld [vmem:[%s1150 + $0xf78] sm:$0xff]
                %1423 = vst [vmem:[%s1151 + $0x438] sm:$0xff] %v1422
                %v1424 = vld [vmem:[%s1150 + $0xf80] sm:$0xff]
                %1425 = vst [vmem:[%s1151 + $0x440] sm:$0xff] %v1424
                %v1426 = vld [vmem:[%s1150 + $0xf88] sm:$0xff]
                %1427 = vst [vmem:[%s1151 + $0x448] sm:$0xff] %v1426
                %v1428 = vld [vmem:[%s1150 + $0xf90] sm:$0xff]
                %1429 = vst [vmem:[%s1151 + $0x450] sm:$0xff] %v1428
                %v1430 = vld [vmem:[%s1150 + $0xf98] sm:$0xff]
                %1431 = vst [vmem:[%s1151 + $0x458] sm:$0xff] %v1430
                %v1432 = vld [vmem:[%s1150 + $0xfa0] sm:$0xff]
                %1433 = vst [vmem:[%s1151 + $0x460] sm:$0xff] %v1432
                %v1434 = vld [vmem:[%s1150 + $0xfa8] sm:$0xff]
                %1435 = vst [vmem:[%s1151 + $0x468] sm:$0xff] %v1434
                %v1436 = vld [vmem:[%s1150 + $0xfb0] sm:$0xff]
                %1437 = vst [vmem:[%s1151 + $0x470] sm:$0xff] %v1436
                %v1438 = vld [vmem:[%s1150 + $0xfb8] sm:$0xff]
                %1439 = vst [vmem:[%s1151 + $0x478] sm:$0xff] %v1438
                %v1440 = vld [vmem:[%s1150 + $0xfc0] sm:$0xff]
                %1441 = vst [vmem:[%s1151 + $0x480] sm:$0xff] %v1440
                %v1442 = vld [vmem:[%s1150 + $0xfc8] sm:$0xff]
                %1443 = vst [vmem:[%s1151 + $0x488] sm:$0xff] %v1442
                %v1444 = vld [vmem:[%s1150 + $0xfd0] sm:$0xff]
                %1445 = vst [vmem:[%s1151 + $0x490] sm:$0xff] %v1444
                %v1446 = vld [vmem:[%s1150 + $0xfd8] sm:$0xff]
                %1447 = vst [vmem:[%s1151 + $0x498] sm:$0xff] %v1446
                %v1448 = vld [vmem:[%s1150 + $0xfe0] sm:$0xff]
                %1449 = vst [vmem:[%s1151 + $0x4a0] sm:$0xff] %v1448
                %v1450 = vld [vmem:[%s1150 + $0xfe8] sm:$0xff]
                %1451 = vst [vmem:[%s1151 + $0x4a8] sm:$0xff] %v1450
                %v1452 = vld [vmem:[%s1150 + $0xff0] sm:$0xff]
                %1453 = vst [vmem:[%s1151 + $0x4b0] sm:$0xff] %v1452
                %v1454 = vld [vmem:[%s1150 + $0xff8] sm:$0xff]
                %1455 = vst [vmem:[%s1151 + $0x4b8] sm:$0xff] %v1454
                %v1456 = vld [vmem:[%s1150 + $0x1000] sm:$0xff]
                %1457 = vst [vmem:[%s1151 + $0x4c0] sm:$0xff] %v1456
                %v1458 = vld [vmem:[%s1150 + $0x1008] sm:$0xff]
                %1459 = vst [vmem:[%s1151 + $0x4c8] sm:$0xff] %v1458
                %v1460 = vld [vmem:[%s1150 + $0x1010] sm:$0xff]
                %1461 = vst [vmem:[%s1151 + $0x4d0] sm:$0xff] %v1460
                %v1462 = vld [vmem:[%s1150 + $0x1018] sm:$0xff]
                %1463 = vst [vmem:[%s1151 + $0x4d8] sm:$0xff] %v1462
                %v1464 = vld [vmem:[%s1150 + $0x1020] sm:$0xff]
                %1465 = vst [vmem:[%s1151 + $0x4e0] sm:$0xff] %v1464
                %v1466 = vld [vmem:[%s1150 + $0x1028] sm:$0xff]
                %1467 = vst [vmem:[%s1151 + $0x4e8] sm:$0xff] %v1466
                %v1468 = vld [vmem:[%s1150 + $0x1030] sm:$0xff]
                %1469 = vst [vmem:[%s1151 + $0x4f0] sm:$0xff] %v1468
                %v1470 = vld [vmem:[%s1150 + $0x1038] sm:$0xff]
                %1471 = vst [vmem:[%s1151 + $0x4f8] sm:$0xff] %v1470
                %v1472 = vld [vmem:[%s1150 + $0x1040] sm:$0xff]
                %1473 = vst [vmem:[%s1151 + $0x500] sm:$0xff] %v1472
                %v1474 = vld [vmem:[%s1150 + $0x1048] sm:$0xff]
                %1475 = vst [vmem:[%s1151 + $0x508] sm:$0xff] %v1474
                %v1476 = vld [vmem:[%s1150 + $0x1050] sm:$0xff]
                %1477 = vst [vmem:[%s1151 + $0x510] sm:$0xff] %v1476
                %v1478 = vld [vmem:[%s1150 + $0x1058] sm:$0xff]
                %1479 = vst [vmem:[%s1151 + $0x518] sm:$0xff] %v1478
                %v1480 = vld [vmem:[%s1150 + $0x1060] sm:$0xff]
                %1481 = vst [vmem:[%s1151 + $0x520] sm:$0xff] %v1480
                %v1482 = vld [vmem:[%s1150 + $0x1068] sm:$0xff]
                %1483 = vst [vmem:[%s1151 + $0x528] sm:$0xff] %v1482
                %v1484 = vld [vmem:[%s1150 + $0x1070] sm:$0xff]
                %1485 = vst [vmem:[%s1151 + $0x530] sm:$0xff] %v1484
                %v1486 = vld [vmem:[%s1150 + $0x1078] sm:$0xff]
                %1487 = vst [vmem:[%s1151 + $0x538] sm:$0xff] %v1486
                %v1488 = vld [vmem:[%s1150 + $0x1080] sm:$0xff]
                %1489 = vst [vmem:[%s1151 + $0x540] sm:$0xff] %v1488
                %v1490 = vld [vmem:[%s1150 + $0x1088] sm:$0xff]
                %1491 = vst [vmem:[%s1151 + $0x548] sm:$0xff] %v1490
                %v1492 = vld [vmem:[%s1150 + $0x1090] sm:$0xff]
                %1493 = vst [vmem:[%s1151 + $0x550] sm:$0xff] %v1492
                %v1494 = vld [vmem:[%s1150 + $0x1098] sm:$0xff]
                %1495 = vst [vmem:[%s1151 + $0x558] sm:$0xff] %v1494
                %v1496 = vld [vmem:[%s1150 + $0x10a0] sm:$0xff]
                %1497 = vst [vmem:[%s1151 + $0x560] sm:$0xff] %v1496
                %v1498 = vld [vmem:[%s1150 + $0x10a8] sm:$0xff]
                %1499 = vst [vmem:[%s1151 + $0x568] sm:$0xff] %v1498
                %v1500 = vld [vmem:[%s1150 + $0x10b0] sm:$0xff]
                %1501 = vst [vmem:[%s1151 + $0x570] sm:$0xff] %v1500
                %v1502 = vld [vmem:[%s1150 + $0x10b8] sm:$0xff]
                %1503 = vst [vmem:[%s1151 + $0x578] sm:$0xff] %v1502
                %v1504 = vld [vmem:[%s1150 + $0x10c0] sm:$0xff]
                %1505 = vst [vmem:[%s1151 + $0x580] sm:$0xff] %v1504
                %v1506 = vld [vmem:[%s1150 + $0x10c8] sm:$0xff]
                %1507 = vst [vmem:[%s1151 + $0x588] sm:$0xff] %v1506
                %v1508 = vld [vmem:[%s1150 + $0x10d0] sm:$0xff]
                %1509 = vst [vmem:[%s1151 + $0x590] sm:$0xff] %v1508
                %v1510 = vld [vmem:[%s1150 + $0x10d8] sm:$0xff]
                %1511 = vst [vmem:[%s1151 + $0x598] sm:$0xff] %v1510
                %v1512 = vld [vmem:[%s1150 + $0x10e0] sm:$0xff]
                %1513 = vst [vmem:[%s1151 + $0x5a0] sm:$0xff] %v1512
                %v1514 = vld [vmem:[%s1150 + $0x10e8] sm:$0xff]
                %1515 = vst [vmem:[%s1151 + $0x5a8] sm:$0xff] %v1514
                %v1516 = vld [vmem:[%s1150 + $0x10f0] sm:$0xff]
                %1517 = vst [vmem:[%s1151 + $0x5b0] sm:$0xff] %v1516
                %v1518 = vld [vmem:[%s1150 + $0x10f8] sm:$0xff]
                %1519 = vst [vmem:[%s1151 + $0x5b8] sm:$0xff] %v1518
                %v1520 = vld [vmem:[%s1150 + $0x1100] sm:$0xff]
                %1521 = vst [vmem:[%s1151 + $0x5c0] sm:$0xff] %v1520
                %v1522 = vld [vmem:[%s1150 + $0x1108] sm:$0xff]
                %1523 = vst [vmem:[%s1151 + $0x5c8] sm:$0xff] %v1522
                %v1524 = vld [vmem:[%s1150 + $0x1110] sm:$0xff]
                %1525 = vst [vmem:[%s1151 + $0x5d0] sm:$0xff] %v1524
                %v1526 = vld [vmem:[%s1150 + $0x1118] sm:$0xff]
                %1527 = vst [vmem:[%s1151 + $0x5d8] sm:$0xff] %v1526
                %v1528 = vld [vmem:[%s1150 + $0x1120] sm:$0xff]
                %1529 = vst [vmem:[%s1151 + $0x5e0] sm:$0xff] %v1528
                %v1530 = vld [vmem:[%s1150 + $0x1128] sm:$0xff]
                %1531 = vst [vmem:[%s1151 + $0x5e8] sm:$0xff] %v1530
                %v1532 = vld [vmem:[%s1150 + $0x1130] sm:$0xff]
                %1533 = vst [vmem:[%s1151 + $0x5f0] sm:$0xff] %v1532
                %v1534 = vld [vmem:[%s1150 + $0x1138] sm:$0xff]
                %1535 = vst [vmem:[%s1151 + $0x5f8] sm:$0xff] %v1534
                %v1536 = vld [vmem:[%s1150 + $0x1140] sm:$0xff]
                %1537 = vst [vmem:[%s1151 + $0x600] sm:$0xff] %v1536
                %v1538 = vld [vmem:[%s1150 + $0x1148] sm:$0xff]
                %1539 = vst [vmem:[%s1151 + $0x608] sm:$0xff] %v1538
                %v1540 = vld [vmem:[%s1150 + $0x1150] sm:$0xff]
                %1541 = vst [vmem:[%s1151 + $0x610] sm:$0xff] %v1540
                %v1542 = vld [vmem:[%s1150 + $0x1158] sm:$0xff]
                %1543 = vst [vmem:[%s1151 + $0x618] sm:$0xff] %v1542
                %v1544 = vld [vmem:[%s1150 + $0x1160] sm:$0xff]
                %1545 = vst [vmem:[%s1151 + $0x620] sm:$0xff] %v1544
                %v1546 = vld [vmem:[%s1150 + $0x1168] sm:$0xff]
                %1547 = vst [vmem:[%s1151 + $0x628] sm:$0xff] %v1546
                %v1548 = vld [vmem:[%s1150 + $0x1170] sm:$0xff]
                %1549 = vst [vmem:[%s1151 + $0x630] sm:$0xff] %v1548
                %v1550 = vld [vmem:[%s1150 + $0x1178] sm:$0xff]
                %1551 = vst [vmem:[%s1151 + $0x638] sm:$0xff] %v1550
                %v1552 = vld [vmem:[%s1150 + $0x1180] sm:$0xff]
                %1553 = vst [vmem:[%s1151 + $0x640] sm:$0xff] %v1552
                %v1554 = vld [vmem:[%s1150 + $0x1188] sm:$0xff]
                %1555 = vst [vmem:[%s1151 + $0x648] sm:$0xff] %v1554
                %v1556 = vld [vmem:[%s1150 + $0x1190] sm:$0xff]
                %1557 = vst [vmem:[%s1151 + $0x650] sm:$0xff] %v1556
                %v1558 = vld [vmem:[%s1150 + $0x1198] sm:$0xff]
                %1559 = vst [vmem:[%s1151 + $0x658] sm:$0xff] %v1558
                %v1560 = vld [vmem:[%s1150 + $0x11a0] sm:$0xff]
                %1561 = vst [vmem:[%s1151 + $0x660] sm:$0xff] %v1560
                %v1562 = vld [vmem:[%s1150 + $0x11a8] sm:$0xff]
                %1563 = vst [vmem:[%s1151 + $0x668] sm:$0xff] %v1562
                %v1564 = vld [vmem:[%s1150 + $0x11b0] sm:$0xff]
                %1565 = vst [vmem:[%s1151 + $0x670] sm:$0xff] %v1564
                %v1566 = vld [vmem:[%s1150 + $0x11b8] sm:$0xff]
                %1567 = vst [vmem:[%s1151 + $0x678] sm:$0xff] %v1566
                %v1568 = vld [vmem:[%s1150 + $0x11c0] sm:$0xff]
                %1569 = vst [vmem:[%s1151 + $0x680] sm:$0xff] %v1568
                %v1570 = vld [vmem:[%s1150 + $0x11c8] sm:$0xff]
                %1571 = vst [vmem:[%s1151 + $0x688] sm:$0xff] %v1570
                %v1572 = vld [vmem:[%s1150 + $0x11d0] sm:$0xff]
                %1573 = vst [vmem:[%s1151 + $0x690] sm:$0xff] %v1572
                %v1574 = vld [vmem:[%s1150 + $0x11d8] sm:$0xff]
                %1575 = vst [vmem:[%s1151 + $0x698] sm:$0xff] %v1574
                %v1576 = vld [vmem:[%s1150 + $0x11e0] sm:$0xff]
                %1577 = vst [vmem:[%s1151 + $0x6a0] sm:$0xff] %v1576
                %v1578 = vld [vmem:[%s1150 + $0x11e8] sm:$0xff]
                %1579 = vst [vmem:[%s1151 + $0x6a8] sm:$0xff] %v1578
                %v1580 = vld [vmem:[%s1150 + $0x11f0] sm:$0xff]
                %1581 = vst [vmem:[%s1151 + $0x6b0] sm:$0xff] %v1580
                %v1582 = vld [vmem:[%s1150 + $0x11f8] sm:$0xff]
                %1583 = vst [vmem:[%s1151 + $0x6b8] sm:$0xff] %v1582
                %v1584 = vld [vmem:[%s1150 + $0x1200] sm:$0xff]
                %1585 = vst [vmem:[%s1151 + $0x6c0] sm:$0xff] %v1584
                %v1586 = vld [vmem:[%s1150 + $0x1208] sm:$0xff]
                %1587 = vst [vmem:[%s1151 + $0x6c8] sm:$0xff] %v1586
                %v1588 = vld [vmem:[%s1150 + $0x1210] sm:$0xff]
                %1589 = vst [vmem:[%s1151 + $0x6d0] sm:$0xff] %v1588
                %v1590 = vld [vmem:[%s1150 + $0x1218] sm:$0xff]
                %1591 = vst [vmem:[%s1151 + $0x6d8] sm:$0xff] %v1590
                %v1592 = vld [vmem:[%s1150 + $0x1220] sm:$0xff]
                %1593 = vst [vmem:[%s1151 + $0x6e0] sm:$0xff] %v1592
                %v1594 = vld [vmem:[%s1150 + $0x1228] sm:$0xff]
                %1595 = vst [vmem:[%s1151 + $0x6e8] sm:$0xff] %v1594
                %v1596 = vld [vmem:[%s1150 + $0x1230] sm:$0xff]
                %1597 = vst [vmem:[%s1151 + $0x6f0] sm:$0xff] %v1596
                %v1598 = vld [vmem:[%s1150 + $0x1238] sm:$0xff]
                %1599 = vst [vmem:[%s1151 + $0x6f8] sm:$0xff] %v1598
                %v1600 = vld [vmem:[%s1150 + $0x1240] sm:$0xff]
                %1601 = vst [vmem:[%s1151 + $0x700] sm:$0xff] %v1600
                %v1602 = vld [vmem:[%s1150 + $0x1248] sm:$0xff]
                %1603 = vst [vmem:[%s1151 + $0x708] sm:$0xff] %v1602
                %v1604 = vld [vmem:[%s1150 + $0x1250] sm:$0xff]
                %1605 = vst [vmem:[%s1151 + $0x710] sm:$0xff] %v1604
                %v1606 = vld [vmem:[%s1150 + $0x1258] sm:$0xff]
                %1607 = vst [vmem:[%s1151 + $0x718] sm:$0xff] %v1606
                %v1608 = vld [vmem:[%s1150 + $0x1260] sm:$0xff]
                %1609 = vst [vmem:[%s1151 + $0x720] sm:$0xff] %v1608
                %v1610 = vld [vmem:[%s1150 + $0x1268] sm:$0xff]
                %1611 = vst [vmem:[%s1151 + $0x728] sm:$0xff] %v1610
                %v1612 = vld [vmem:[%s1150 + $0x1270] sm:$0xff]
                %1613 = vst [vmem:[%s1151 + $0x730] sm:$0xff] %v1612
                %v1614 = vld [vmem:[%s1150 + $0x1278] sm:$0xff]
                %1615 = vst [vmem:[%s1151 + $0x738] sm:$0xff] %v1614
                %v1616 = vld [vmem:[%s1150 + $0x1280] sm:$0xff]
                %1617 = vst [vmem:[%s1151 + $0x740] sm:$0xff] %v1616
                %v1618 = vld [vmem:[%s1150 + $0x1288] sm:$0xff]
                %1619 = vst [vmem:[%s1151 + $0x748] sm:$0xff] %v1618
                %v1620 = vld [vmem:[%s1150 + $0x1290] sm:$0xff]
                %1621 = vst [vmem:[%s1151 + $0x750] sm:$0xff] %v1620
                %v1622 = vld [vmem:[%s1150 + $0x1298] sm:$0xff]
                %1623 = vst [vmem:[%s1151 + $0x758] sm:$0xff] %v1622
                %v1624 = vld [vmem:[%s1150 + $0x12a0] sm:$0xff]
                %1625 = vst [vmem:[%s1151 + $0x760] sm:$0xff] %v1624
                %v1626 = vld [vmem:[%s1150 + $0x12a8] sm:$0xff]
                %1627 = vst [vmem:[%s1151 + $0x768] sm:$0xff] %v1626
                %v1628 = vld [vmem:[%s1150 + $0x12b0] sm:$0xff]
                %1629 = vst [vmem:[%s1151 + $0x770] sm:$0xff] %v1628
                %v1630 = vld [vmem:[%s1150 + $0x12b8] sm:$0xff]
                %1631 = vst [vmem:[%s1151 + $0x778] sm:$0xff] %v1630
              $region75: #{backend_forward.1} parent=69 // loop_footer
                %s1149 = sadd.s32 1, %s1145
              $region76: #{backend_forward.1} parent=69 // loop_footer_branch
                %1144 = sbr.rel target = $region72
              $region77: #{backend_forward.1} parent=69 // loop_exit
                _
            $region70: #{backend_forward.1} parent=61 // pred_fallthru
              _
          $region62: #{backend_forward.1} parent=57 // pred_fallthru
            _
          %2124 = vnop
        $region58: #{backend_forward.1} parent=15 // pred_fallthru
          _
      $region16: #{backend_forward.1} parent=5 // pred_fallthru
        _
      %p2125 = scmp.le.s32.totalorder 1, %s8
      %p2126 = scmp.lt.s32.totalorder %s8, 5
      %p2127 = pnand %p2125, %p2126
      %p2128 = pneg %p2127
      // Predicated region
      $region93: #{backend_forward.1} parent=5 // pred_check
        _
      $region94: #{backend_forward.1} parent=5 // pred_check_branch
        %2130 = sbr.rel (%p2127) target = $region96
      $region95: #{backend_forward.1} parent=5 // pred_region
        %s2131 = ssub.s32 %s8, 1
        %s2132 = sand.u32 %s37, 1
        %s2133 = sand.u32 %s37, 1
        %s2134 = smul.addr %s2133, 1920
        %s2135 = scalar_lea.vmem [#allocation3], %s2134
        // Predicated region
        $region97: #{backend_forward.1} parent=95 // pred_check
          %p2136 = pneg %p50
        $region98: #{backend_forward.1} parent=95 // pred_check_branch
          %2138 = sbr.rel (%p2136) target = $region100
        $region99: #{backend_forward.1} parent=95 // pred_region
          _
        $region100: #{backend_forward.1} parent=95 // pred_fallthru
          _
        %s2139 = sand.u32 %s67, 1
        %s2140 = sand.u32 %s67, 1
        %s2141 = smul.addr %s2140, 1920
        %s2142 = scalar_lea.vmem [#allocation4], %s2141
        // Predicated region
        $region101: #{backend_forward.1} parent=95 // pred_check
          %p2143 = pneg %p80
        $region102: #{backend_forward.1} parent=95 // pred_check_branch
          %2145 = sbr.rel (%p2143) target = $region104
        $region103: #{backend_forward.1} parent=95 // pred_region
          _
        $region104: #{backend_forward.1} parent=95 // pred_fallthru
          _
        %s2146 = sand.u32 %s37, 1
        %s2147 = sand.u32 %s37, 1
        %s2148 = smul.addr %s2147, 1920
        %s2149 = scalar_lea.vmem [#allocation3], %s2148
        %p2150 = pneg %p50
        %p2151 = pneg %p47
        %s2152 = sand.u32 %s67, 1
        %s2153 = sand.u32 %s67, 1
        %s2154 = smul.addr %s2153, 1920
        %s2155 = scalar_lea.vmem [#allocation4], %s2154
        %p2156 = pneg %p80
        %p2157 = pneg %p77
        %p2158 = pneg %p106
        %p2159 = pneg %p103
        %p2160 = scmp.lt.s32.totalorder %s17, 1
        %s2161 = scalar_select %p2160, %s17, 1
        %s2162 = smul.addr %s2161, 2
        %s2163 = scalar_lea.vmem %s2, %s2162
        %s2164 = smul.u32 %s17, 2
        %s2165 = sadd.s32 %s2164, %s18
        %s2166 = smul.u32 120, %s2165
        %s2167 = smul.u32 %s17, 2
        %s2168 = sadd.s32 %s2167, %s18
        %s2169 = smul.u32 120, %s2168
        %p2170 = scmp.lt.s32.totalorder %s17, 1
        %s2171 = scalar_select %p2170, %s17, 1
        %s2172 = smul.addr %s2171, 2
        %s2173 = scalar_lea.vmem %s2, %s2172
        %p2174 = scmp.eq.s32.totalorder %s18, 0
        // Predicated region
        $region105: #{backend_forward.1} parent=95 // pred_check
          %p2175 = pneg %p2174
        $region106: #{backend_forward.1} parent=95 // pred_check_branch
          %2177 = sbr.rel (%p2175) target = $region108
        $region107: #{backend_forward.1} parent=95 // pred_region
          %2178 = vst [vmem:[#allocation2] sm:$0x3] 0.0
          %2179 = vst [vmem:[#allocation2 + $0x2] sm:$0x3] 0.0
        $region108: #{backend_forward.1} parent=95 // pred_fallthru
          _
        loop: start=0, step=1, limit=15
        $region109: #{backend_forward.1} parent=95 // loop_pre_header
          _
        $region110: #{backend_forward.1} parent=95 // loop_header
          %s2181 = sphi 0, %s2185
          %p2182 = scmp.ge.s32.totalorder %s2181, 15
        $region111: #{backend_forward.1} parent=95 // loop_header_branch
          %2184 = sbr.rel (%p2182) target = $region115
        $region112: #{backend_forward.1} parent=95 // loop_body
          %s2186 = smul.u32 %s2181, 64
          %s2187 = scalar_lea.vmem %s2135, %s2186 [#allocation3]
          %v2188 = vld [vmem:[%s2187] sm:$0xff]
          %v2189 = vld [vmem:[%s2187 + $0x8] sm:$0xff]
          %v2190 = vld [vmem:[%s2187 + $0x10] sm:$0xff]
          %v2191 = vld [vmem:[%s2187 + $0x18] sm:$0xff]
          %v2192 = vld [vmem:[%s2187 + $0x20] sm:$0xff]
          %v2193 = vld [vmem:[%s2187 + $0x28] sm:$0xff]
          %v2194 = vld [vmem:[%s2187 + $0x30] sm:$0xff]
          %v2195 = vld [vmem:[%s2187 + $0x38] sm:$0xff]
          %v2196 = vld [vmem:[%s2187 + $0x3c0] sm:$0xff]
          %v2197 = vld [vmem:[%s2187 + $0x3c8] sm:$0xff]
          %v2198 = vld [vmem:[%s2187 + $0x3d0] sm:$0xff]
          %v2199 = vld [vmem:[%s2187 + $0x3d8] sm:$0xff]
          %v2200 = vld [vmem:[%s2187 + $0x3e0] sm:$0xff]
          %v2201 = vld [vmem:[%s2187 + $0x3e8] sm:$0xff]
          %v2202 = vld [vmem:[%s2187 + $0x3f0] sm:$0xff]
          %v2203 = vld [vmem:[%s2187 + $0x3f8] sm:$0xff]
          %s2204 = scalar_lea.vmem %s2142, %s2186 [#allocation4]
          %v2205 = vld [vmem:[%s2204] sm:$0xff]
          %v2206 = vld [vmem:[%s2204 + $0x8] sm:$0xff]
          %v2207 = vld [vmem:[%s2204 + $0x10] sm:$0xff]
          %v2208 = vld [vmem:[%s2204 + $0x18] sm:$0xff]
          %v2209 = vld [vmem:[%s2204 + $0x20] sm:$0xff]
          %v2210 = vld [vmem:[%s2204 + $0x28] sm:$0xff]
          %v2211 = vld [vmem:[%s2204 + $0x30] sm:$0xff]
          %v2212 = vld [vmem:[%s2204 + $0x38] sm:$0xff]
          %v2213 = vld [vmem:[%s2204 + $0x3c0] sm:$0xff]
          %v2214 = vld [vmem:[%s2204 + $0x3c8] sm:$0xff]
          %v2215 = vld [vmem:[%s2204 + $0x3d0] sm:$0xff]
          %v2216 = vld [vmem:[%s2204 + $0x3d8] sm:$0xff]
          %v2217 = vld [vmem:[%s2204 + $0x3e0] sm:$0xff]
          %v2218 = vld [vmem:[%s2204 + $0x3e8] sm:$0xff]
          %v2219 = vld [vmem:[%s2204 + $0x3f0] sm:$0xff]
          %v2220 = vld [vmem:[%s2204 + $0x3f8] sm:$0xff]
          %v2221 = vld [vmem:[#allocation2] sm:$0x3]
          %v2222 = vmul.f32 %v2188, %v2205
          %v2223 = vmul.f32 %v2189, %v2206
          %v2224 = vmul.f32 %v2190, %v2207
          %v2225 = vmul.f32 %v2191, %v2208
          %v2226 = vmul.f32 %v2192, %v2209
          %v2227 = vmul.f32 %v2193, %v2210
          %v2228 = vmul.f32 %v2194, %v2211
          %v2229 = vmul.f32 %v2195, %v2212
          %v2230 = vmul.f32 %v2196, %v2205
          %v2231 = vmul.f32 %v2197, %v2206
          %v2232 = vmul.f32 %v2198, %v2207
          %v2233 = vmul.f32 %v2199, %v2208
          %v2234 = vmul.f32 %v2200, %v2209
          %v2235 = vmul.f32 %v2201, %v2210
          %v2236 = vmul.f32 %v2202, %v2211
          %v2237 = vmul.f32 %v2203, %v2212
          %v2238 = vadd.f32 %v2222, %v2223
          %v2239 = vadd.f32 %v2238, %v2224
          %v2240 = vadd.f32 %v2239, %v2225
          %v2241 = vadd.f32 %v2240, %v2226
          %v2242 = vadd.f32 %v2241, %v2227
          %v2243 = vadd.f32 %v2242, %v2228
          %v2244 = vadd.f32 %v2243, %v2229
          %v2245 = vrot.slane %v2244, 4
          %v2246 = vadd.f32 %v2244, %v2245
          %v2247 = vrot.slane %v2246, 2
          %v2248 = vadd.f32 %v2246, %v2247
          %v2249 = vrot.slane %v2248, 1
          %v2250 = vadd.f32 %v2248, %v2249
          %v2251 = vadd.f32 %v2230, %v2231
          %v2252 = vadd.f32 %v2251, %v2232
          %v2253 = vadd.f32 %v2252, %v2233
          %v2254 = vadd.f32 %v2253, %v2234
          %v2255 = vadd.f32 %v2254, %v2235
          %v2256 = vadd.f32 %v2255, %v2236
          %v2257 = vadd.f32 %v2256, %v2237
          %v2258 = vrot.slane %v2257, 4
          %v2259 = vadd.f32 %v2257, %v2258
          %v2260 = vrot.slane %v2259, 2
          %v2261 = vadd.f32 %v2259, %v2260
          %v2262 = vrot.slane %v2261, 1
          %v2263 = vadd.f32 %v2261, %v2262
          %vm2266 = vcmask 1041409
          %v2267 = vsel %vm2266, %v2263, %v2250
          %v2269 = vadd.f32 %v2221, %v2267
          %2270 = vst [vmem:[#allocation2] sm:$0x3] %v2269
          %s2271 = scalar_lea.vmem [#allocation2], 2
          %v2272 = vld [vmem:[%s2271] sm:$0x3]
          %v2273 = vmul.f32 %v2188, %v2213
          %v2274 = vmul.f32 %v2189, %v2214
          %v2275 = vmul.f32 %v2190, %v2215
          %v2276 = vmul.f32 %v2191, %v2216
          %v2277 = vmul.f32 %v2192, %v2217
          %v2278 = vmul.f32 %v2193, %v2218
          %v2279 = vmul.f32 %v2194, %v2219
          %v2280 = vmul.f32 %v2195, %v2220
          %v2281 = vmul.f32 %v2196, %v2213
          %v2282 = vmul.f32 %v2197, %v2214
          %v2283 = vmul.f32 %v2198, %v2215
          %v2284 = vmul.f32 %v2199, %v2216
          %v2285 = vmul.f32 %v2200, %v2217
          %v2286 = vmul.f32 %v2201, %v2218
          %v2287 = vmul.f32 %v2202, %v2219
          %v2288 = vmul.f32 %v2203, %v2220
          %v2289 = vadd.f32 %v2273, %v2274
          %v2290 = vadd.f32 %v2289, %v2275
          %v2291 = vadd.f32 %v2290, %v2276
          %v2292 = vadd.f32 %v2291, %v2277
          %v2293 = vadd.f32 %v2292, %v2278
          %v2294 = vadd.f32 %v2293, %v2279
          %v2295 = vadd.f32 %v2294, %v2280
          %v2296 = vrot.slane %v2295, 4
          %v2297 = vadd.f32 %v2295, %v2296
          %v2298 = vrot.slane %v2297, 2
          %v2299 = vadd.f32 %v2297, %v2298
          %v2300 = vrot.slane %v2299, 1
          %v2301 = vadd.f32 %v2299, %v2300
          %v2302 = vadd.f32 %v2281, %v2282
          %v2303 = vadd.f32 %v2302, %v2283
          %v2304 = vadd.f32 %v2303, %v2284
          %v2305 = vadd.f32 %v2304, %v2285
          %v2306 = vadd.f32 %v2305, %v2286
          %v2307 = vadd.f32 %v2306, %v2287
          %v2308 = vadd.f32 %v2307, %v2288
          %v2309 = vrot.slane %v2308, 4
          %v2310 = vadd.f32 %v2308, %v2309
          %v2311 = vrot.slane %v2310, 2
          %v2312 = vadd.f32 %v2310, %v2311
          %v2313 = vrot.slane %v2312, 1
          %v2314 = vadd.f32 %v2312, %v2313
          %v2317 = vsel %vm2266, %v2314, %v2301
          %v2319 = vadd.f32 %v2272, %v2317
          %2320 = vst [vmem:[%s2271] sm:$0x3] %v2319
        $region113: #{backend_forward.1} parent=95 // loop_footer
          %s2185 = sadd.s32 1, %s2181
        $region114: #{backend_forward.1} parent=95 // loop_footer_branch
          %2180 = sbr.rel target = $region110
        $region115: #{backend_forward.1} parent=95 // loop_exit
          _
        %p2321 = scmp.eq.s32.totalorder %s18, 1
        // Predicated region
        $region116: #{backend_forward.1} parent=95 // pred_check
          %p2322 = pneg %p2321
        $region117: #{backend_forward.1} parent=95 // pred_check_branch
          %2324 = sbr.rel (%p2322) target = $region119
        $region118: #{backend_forward.1} parent=95 // pred_region
          %v2325 = vld [vmem:[#allocation2] sm:$0x3]
          %v2326 = vld [vmem:[#allocation2 + $0x2] sm:$0x3]
          %vm2327 = vcmask 1041408
          %v2328 = vsel %vm2327, %v2325, 0.0
          %2329 = vadd.xlane.f32.xlu0 %v2328
          %v2330 = vpop.xlane.xlu0 %2329
          %v2331 = vsel %vm2327, %v2326, 0.0
          %2332 = vadd.xlane.f32.xlu0 %v2331
          %v2333 = vpop.xlane.xlu0 %2332
          %v2336 = vlaneseq
          %v2337 = vand.u32 %v2336, 127
          %v2338 = vlaneseq
          %v2339 = vshrl.u32 %v2338, 7
          %v2340 = vsub.s32 %v2337, %v2339
          %v2341 = vrot.slane %v2330, %v2340
          %v2342 = vlaneseq
          %v2343 = vshrl.u32 %v2342, 7
          %v2344 = vsub.s32 %v2337, %v2343
          %v2345 = vrot.slane %v2333, %v2344
          %vm2346 = vcmask 1041409
          %v2347 = vsel %vm2346, %v2345, %v2341
          %vm2349 = vcmask 9216
          %2350 = vst.msk [vmem:[%s2173] sm:$0x3] %vm2349, %v2347
        $region119: #{backend_forward.1} parent=95 // pred_fallthru
          _
        %p2351 = scmp.lt.s32.totalorder %s17, 1
        %s2352 = scalar_select %p2351, %s17, 1
        %s2353 = smul.addr %s2352, 2
        %s2354 = scalar_lea.vmem %s2, %s2353
        // Predicated region
        $region120: #{backend_forward.1} parent=95 // pred_check
          %p2355 = pneg %p103
        $region121: #{backend_forward.1} parent=95 // pred_check_branch
          %2357 = sbr.rel (%p2355) target = $region123
        $region122: #{backend_forward.1} parent=95 // pred_region
          _
        $region123: #{backend_forward.1} parent=95 // pred_fallthru
          _
      $region96: #{backend_forward.1} parent=5 // pred_fallthru
        _
      %p2358 = scmp.le.s32.totalorder 2, %s8
      // Predicated region
      $region124: #{backend_forward.1} parent=5 // pred_check
        %p2359 = pneg %p2358
      $region125: #{backend_forward.1} parent=5 // pred_check_branch
        %2361 = sbr.rel (%p2359) target = $region127
      $region126: #{backend_forward.1} parent=5 // pred_region
        %s2362 = ssub.s32 %s8, 2
        // Predicated region
        $region128: #{backend_forward.1} parent=126 // pred_check
          %p2363 = pneg %p109
        $region129: #{backend_forward.1} parent=126 // pred_check_branch
          %2365 = sbr.rel (%p2363) target = $region131
        $region130: #{backend_forward.1} parent=126 // pred_region
          %p2366 = scmp.lt.s32.totalorder %s19, 1
          %s2367 = scalar_select %p2366, %s19, 1
          %s2368 = smul.addr %s2367, 2
          %s2369 = scalar_lea.vmem %s2, %s2368
        $region131: #{backend_forward.1} parent=126 // pred_fallthru
          _
      $region127: #{backend_forward.1} parent=5 // pred_fallthru
        _
    $region6: #{backend_forward.1} parent=1 // loop_footer
      %s12 = sadd.s32 1, %s8
    $region7: #{backend_forward.1} parent=1 // loop_footer_branch
      %7 = sbr.rel target = $region3
    $region8: #{backend_forward.1} parent=1 // loop_exit
      _

</llo_original>
